<compile_context>
chip_gen: v6e
topology: v6e:2x2x1
jax: 0.10.0
libtpu: 0.0.40
codegen_flags: <defaults>
</compile_context>

<pallas_src>
import math

import jax
import jax.numpy as jnp
from jax.experimental import pallas as pl
from jax.experimental.pallas import tpu as pltpu

# ----------------------------- LeNet tail sizes ------------------------------
CIN, H, W = 6, 14, 14          # c3 input: stage-2 feature map of a 28x28 LeNet
COUT = 16
KH = KW = 5
HO, WO = H - KH + 1, W - KW + 1        # 10, 10  (valid conv)
HP, WP = HO // 2, WO // 2              # 5, 5    (2x2 max-pool)
F_IN = COUT * HP * WP                  # 400
F4, F5 = 120, 84


# ------------------------------ fused kernel ---------------------------------
def _lenet_tail_kernel(x_ref, wc_ref, bc_ref, w4_ref, b4_ref, w5_ref, b5_ref, o_ref):
    """One batch element: conv5x5 + ReLU -> maxpool2x2 -> flatten -> f4 -> f5 (all in VMEM)."""
    xs = x_ref[0].astype(jnp.bfloat16)                 # (14, 10, 30)  [in_row, out_col, (kw,cin)]

    # ---- c3 convolution: 5 shifted batched matmuls (batch dim = output row h) ----
    acc = jnp.zeros((HO, WO, COUT), jnp.float32)
    for i in range(KH):
        win = xs[i:i + HO]                             # (10, 10, 30)  static major-dim slice
        w_i = jnp.broadcast_to(wc_ref[i], (HO, KW * CIN, COUT))   # (10, 30, 16) bf16
        acc = acc + jnp.einsum('hwk,hko->hwo', win, w_i,
                               preferred_element_type=jnp.float32)
    acc = jnp.maximum(acc + bc_ref[...], 0.0)          # bias + ReLU in f32  -> (10, 10, 16)

    # ---- fused 2x2 max-pool + flatten + f4 ----
    # PyTorch flatten order (c, h', w') is folded into the layout of w4_ref (h', w', c, n),
    # so each pooled (1, 16) vector directly hits its 16 rows of the f4 weight.
    f4_acc = jnp.zeros((1, F4), jnp.float32)
    for hp in range(HP):
        for wp in range(WP):
            h0, w0 = 2 * hp, 2 * wp
            blk = jnp.maximum(
                jnp.maximum(acc[h0:h0 + 1, w0:w0 + 1, :], acc[h0:h0 + 1, w0 + 1:w0 + 2, :]),
                jnp.maximum(acc[h0 + 1:h0 + 2, w0:w0 + 1, :], acc[h0 + 1:h0 + 2, w0 + 1:w0 + 2, :]),
            )                                          # (1, 1, 16) pooled cell
            v = blk[0].astype(jnp.bfloat16)            # (1, 16)
            f4_acc = f4_acc + jnp.dot(v, w4_ref[hp, wp],
                                      preferred_element_type=jnp.float32)
    a4 = jnp.maximum(f4_acc + b4_ref[...], 0.0)        # (1, 120)

    # ---- f5 ----
    a5 = jnp.dot(a4.astype(jnp.bfloat16), w5_ref[...],
                 preferred_element_type=jnp.float32) + b5_ref[...]
    o_ref[0] = jnp.maximum(a5, 0.0)                    # (1, 84)


# ------------------------------ host wrapper ---------------------------------
def lenet_detect_net_forward(x_nchw, params):
    """Mirrors LeNetDetectNet.forward: c3 -> Flatten -> f4 -> f5, one fused Pallas call."""
    B = x_nchw.shape[0]
    x_nhwc = jnp.transpose(x_nchw, (0, 2, 3, 1))                       # (B, 14, 14, 6)
    # Pre-pack the kw-shifted windows into lanes (kw-major, cin-minor): (B, 14, 10, 30).
    x_shift = jnp.concatenate([x_nhwc[:, :, j:j + WO, :] for j in range(KW)], axis=-1)

    # conv weight (O, I, KH, KW) -> (KH, KW*CIN, COUT), bf16 for the MXU
    wc = jnp.transpose(params['c3_w'], (2, 3, 1, 0)).reshape(KH, KW * CIN, COUT)
    wc = wc.astype(jnp.bfloat16)
    bc = params['c3_b'].reshape(1, 1, COUT).astype(jnp.float32)
    # f4 weight (120, 400) with PyTorch NCHW flatten order (c, h', w') -> (HP, WP, COUT, 120)
    w4 = jnp.transpose(params['f4_w'].T.reshape(COUT, HP, WP, F4), (1, 2, 0, 3))
    w4 = w4.astype(jnp.bfloat16)
    b4 = params['f4_b'].reshape(1, F4).astype(jnp.float32)
    w5 = params['f5_w'].T.astype(jnp.bfloat16)                          # (120, 84)
    b5 = params['f5_b'].reshape(1, F5).astype(jnp.float32)

    out = pl.pallas_call(
        _lenet_tail_kernel,
        out_shape=jax.ShapeDtypeStruct((B, 1, F5), jnp.float32),
        grid=(B,),
        in_specs=[
            pl.BlockSpec((1, H, WO, KW * CIN), lambda b: (b, 0, 0, 0)),   # per-image activations
            pl.BlockSpec((KH, KW * CIN, COUT), lambda b: (0, 0, 0)),      # conv weight (resident)
            pl.BlockSpec((1, 1, COUT),         lambda b: (0, 0, 0)),      # conv bias
            pl.BlockSpec((HP, WP, COUT, F4),   lambda b: (0, 0, 0, 0)),   # f4 weight (resident)
            pl.BlockSpec((1, F4),              lambda b: (0, 0)),         # f4 bias
            pl.BlockSpec((F4, F5),             lambda b: (0, 0)),         # f5 weight (resident)
            pl.BlockSpec((1, F5),              lambda b: (0, 0)),         # f5 bias
        ],
        out_specs=pl.BlockSpec((1, 1, F5), lambda b: (b, 0, 0)),
        compiler_params=pltpu.CompilerParams(dimension_semantics=("parallel",)),
    )(x_shift, wc, bc, w4, b4, w5, b5)
    return out[:, 0, :]                                                  # (B, 84)


# ------------------------------ reference (plain JAX) ------------------------
def _reference_forward(x_nchw, params):
    y = jax.lax.conv_general_dilated(x_nchw, params['c3_w'], (1, 1), 'VALID',
                                     dimension_numbers=('NCHW', 'OIHW', 'NCHW'))
    y = jnp.maximum(y + params['c3_b'].reshape(1, COUT, 1, 1), 0.0)
    y = jax.lax.reduce_window(y, -jnp.inf, jax.lax.max, (1, 1, 2, 2), (1, 1, 2, 2), 'VALID')
    y = y.reshape(y.shape[0], -1)                       # NCHW flatten: (c, h', w') order
    y = jnp.maximum(y @ params['f4_w'].T + params['f4_b'], 0.0)
    y = jnp.maximum(y @ params['f5_w'].T + params['f5_b'], 0.0)
    return y


# ------------------------------ parameter init -------------------------------
def init_params(key):
    k = jax.random.split(key, 6)
    return {
        'c3_w': jax.random.normal(k[0], (COUT, CIN, KH, KW), jnp.float32) / math.sqrt(CIN * KH * KW),
        'c3_b': 0.01 * jax.random.normal(k[1], (COUT,), jnp.float32),
        'f4_w': jax.random.normal(k[2], (F4, F_IN), jnp.float32) / math.sqrt(F_IN),
        'f4_b': 0.01 * jax.random.normal(k[3], (F4,), jnp.float32),
        'f5_w': jax.random.normal(k[4], (F5, F4), jnp.float32) / math.sqrt(F4),
        'f5_b': 0.01 * jax.random.normal(k[5], (F5,), jnp.float32),
    }


# ---------------------------------- main --------------------------------------
if __name__ == "__main__":
    key = jax.random.PRNGKey(0)
    k_x, k_p = jax.random.split(key)

    # Input to c3: standard LeNet stage-2 feature map, PyTorch NCHW: (B=2, C=6, 14, 14)
    x = jax.random.normal(k_x, (2, CIN, H, W), jnp.float32)
    params = init_params(k_p)

    fwd = jax.jit(lenet_detect_net_forward)
    out = jax.block_until_ready(fwd(x, params))

    assert out.shape == (2, F5), out.shape
    assert bool(jnp.all(jnp.isfinite(out)))

    ref = _reference_forward(x, params)
    max_err = float(jnp.max(jnp.abs(out - ref)))
    assert max_err < 1e-1, f"max abs err vs reference: {max_err}"

    print("KERNEL_OK")
</pallas_src>

<mosaic_0001>
module attributes {stable_mosaic.version = 11 : i64} {
  func.func @_lenet_tail_kernel(%arg0: i32, %arg1: memref<1x14x10x30xf32, #tpu.memory_space<vmem>>, %arg2: memref<5x30x16xbf16, #tpu.memory_space<vmem>>, %arg3: memref<1x1x16xf32, #tpu.memory_space<vmem>>, %arg4: memref<5x5x16x120xbf16, #tpu.memory_space<vmem>>, %arg5: memref<1x120xf32, #tpu.memory_space<vmem>>, %arg6: memref<120x84xbf16, #tpu.memory_space<vmem>>, %arg7: memref<1x84xf32, #tpu.memory_space<vmem>>, %arg8: memref<1x1x84xf32, #tpu.memory_space<vmem>>) attributes {dimension_semantics = [#tpu.dimension_semantics<parallel>], iteration_bounds = array<i64: 2>, scalar_prefetch = 0 : i64, scratch_operands = 0 : i64, tpu.core_type = #tpu.core_type<tc>, window_params = [{transform_indices = @transform_0, window_bounds = array<i64: 1, 14, 10, 30>}, {pipeline_mode = #tpu.pipeline_mode<synchronous>, transform_indices = @transform_1, window_bounds = array<i64: 5, 30, 16>}, {pipeline_mode = #tpu.pipeline_mode<synchronous>, transform_indices = @transform_2, window_bounds = array<i64: 1, 1, 16>}, {pipeline_mode = #tpu.pipeline_mode<synchronous>, transform_indices = @transform_3, window_bounds = array<i64: 5, 5, 16, 120>}, {pipeline_mode = #tpu.pipeline_mode<synchronous>, transform_indices = @transform_4, window_bounds = array<i64: 1, 120>}, {pipeline_mode = #tpu.pipeline_mode<synchronous>, transform_indices = @transform_5, window_bounds = array<i64: 120, 84>}, {pipeline_mode = #tpu.pipeline_mode<synchronous>, transform_indices = @transform_6, window_bounds = array<i64: 1, 84>}, {transform_indices = @transform_7, window_bounds = array<i64: 1, 1, 84>}]} {
    %c0 = arith.constant 0 : index
    %c0_0 = arith.constant 0 : index
    %c0_1 = arith.constant 0 : index
    %c0_2 = arith.constant 0 : index
    %0 = vector.load %arg1[%c0, %c0_0, %c0_1, %c0_2] : memref<1x14x10x30xf32, #tpu.memory_space<vmem>>, vector<1x14x10x30xf32>
    %1 = vector.shape_cast %0 : vector<1x14x10x30xf32> to vector<14x10x30xf32>
    %2 = arith.truncf %1 : vector<14x10x30xf32> to vector<14x10x30xbf16>
    %cst = arith.constant 0.000000e+00 : f32
    %3 = vector.broadcast %cst : f32 to vector<10x10x16xf32>
    %4 = vector.extract_strided_slice %2 {offsets = [0, 0, 0], sizes = [10, 10, 30], strides = [1, 1, 1]} : vector<14x10x30xbf16> to vector<10x10x30xbf16>
    %c0_3 = arith.constant 0 : index
    %c0_4 = arith.constant 0 : index
    %c0_5 = arith.constant 0 : index
    %5 = vector.load %arg2[%c0_3, %c0_4, %c0_5] : memref<5x30x16xbf16, #tpu.memory_space<vmem>>, vector<1x30x16xbf16>
    %6 = vector.shape_cast %5 : vector<1x30x16xbf16> to vector<30x16xbf16>
    %7 = vector.shape_cast %6 : vector<30x16xbf16> to vector<1x30x16xbf16>
    %8 = vector.broadcast %7 : vector<1x30x16xbf16> to vector<10x30x16xbf16>
    "tpu.trace_start"() <{level = 10 : i32, message = "hwk,hko->hwo"}> : () -> ()
    %cst_6 = arith.constant dense<0.000000e+00> : vector<10x10x16xf32>
    %9 = tpu.matmul %4, %8, %cst_6 {dimension_numbers = #tpu.dot_dimension_numbers<[2], [1], [1], [2], [0, 0, 0, 1, 1, 2], [0], [0]>} : vector<10x10x30xbf16>, vector<10x30x16xbf16>, vector<10x10x16xf32> -> vector<10x10x16xf32>
    "tpu.trace_stop"() : () -> ()
    %10 = arith.addf %3, %9 : vector<10x10x16xf32>
    %11 = vector.extract_strided_slice %2 {offsets = [1, 0, 0], sizes = [10, 10, 30], strides = [1, 1, 1]} : vector<14x10x30xbf16> to vector<10x10x30xbf16>
    %c1 = arith.constant 1 : index
    %c0_7 = arith.constant 0 : index
    %c0_8 = arith.constant 0 : index
    %12 = vector.load %arg2[%c1, %c0_7, %c0_8] : memref<5x30x16xbf16, #tpu.memory_space<vmem>>, vector<1x30x16xbf16>
    %13 = vector.shape_cast %12 : vector<1x30x16xbf16> to vector<30x16xbf16>
    %14 = vector.shape_cast %13 : vector<30x16xbf16> to vector<1x30x16xbf16>
    %15 = vector.broadcast %14 : vector<1x30x16xbf16> to vector<10x30x16xbf16>
    "tpu.trace_start"() <{level = 10 : i32, message = "hwk,hko->hwo"}> : () -> ()
    %cst_9 = arith.constant dense<0.000000e+00> : vector<10x10x16xf32>
    %16 = tpu.matmul %11, %15, %cst_9 {dimension_numbers = #tpu.dot_dimension_numbers<[2], [1], [1], [2], [0, 0, 0, 1, 1, 2], [0], [0]>} : vector<10x10x30xbf16>, vector<10x30x16xbf16>, vector<10x10x16xf32> -> vector<10x10x16xf32>
    "tpu.trace_stop"() : () -> ()
    %17 = arith.addf %10, %16 : vector<10x10x16xf32>
    %18 = vector.extract_strided_slice %2 {offsets = [2, 0, 0], sizes = [10, 10, 30], strides = [1, 1, 1]} : vector<14x10x30xbf16> to vector<10x10x30xbf16>
    %c2 = arith.constant 2 : index
    %c0_10 = arith.constant 0 : index
    %c0_11 = arith.constant 0 : index
    %19 = vector.load %arg2[%c2, %c0_10, %c0_11] : memref<5x30x16xbf16, #tpu.memory_space<vmem>>, vector<1x30x16xbf16>
    %20 = vector.shape_cast %19 : vector<1x30x16xbf16> to vector<30x16xbf16>
    %21 = vector.shape_cast %20 : vector<30x16xbf16> to vector<1x30x16xbf16>
    %22 = vector.broadcast %21 : vector<1x30x16xbf16> to vector<10x30x16xbf16>
    "tpu.trace_start"() <{level = 10 : i32, message = "hwk,hko->hwo"}> : () -> ()
    %cst_12 = arith.constant dense<0.000000e+00> : vector<10x10x16xf32>
    %23 = tpu.matmul %18, %22, %cst_12 {dimension_numbers = #tpu.dot_dimension_numbers<[2], [1], [1], [2], [0, 0, 0, 1, 1, 2], [0], [0]>} : vector<10x10x30xbf16>, vector<10x30x16xbf16>, vector<10x10x16xf32> -> vector<10x10x16xf32>
    "tpu.trace_stop"() : () -> ()
    %24 = arith.addf %17, %23 : vector<10x10x16xf32>
    %25 = vector.extract_strided_slice %2 {offsets = [3, 0, 0], sizes = [10, 10, 30], strides = [1, 1, 1]} : vector<14x10x30xbf16> to vector<10x10x30xbf16>
    %c3 = arith.constant 3 : index
    %c0_13 = arith.constant 0 : index
    %c0_14 = arith.constant 0 : index
    %26 = vector.load %arg2[%c3, %c0_13, %c0_14] : memref<5x30x16xbf16, #tpu.memory_space<vmem>>, vector<1x30x16xbf16>
    %27 = vector.shape_cast %26 : vector<1x30x16xbf16> to vector<30x16xbf16>
    %28 = vector.shape_cast %27 : vector<30x16xbf16> to vector<1x30x16xbf16>
    %29 = vector.broadcast %28 : vector<1x30x16xbf16> to vector<10x30x16xbf16>
    "tpu.trace_start"() <{level = 10 : i32, message = "hwk,hko->hwo"}> : () -> ()
    %cst_15 = arith.constant dense<0.000000e+00> : vector<10x10x16xf32>
    %30 = tpu.matmul %25, %29, %cst_15 {dimension_numbers = #tpu.dot_dimension_numbers<[2], [1], [1], [2], [0, 0, 0, 1, 1, 2], [0], [0]>} : vector<10x10x30xbf16>, vector<10x30x16xbf16>, vector<10x10x16xf32> -> vector<10x10x16xf32>
    "tpu.trace_stop"() : () -> ()
    %31 = arith.addf %24, %30 : vector<10x10x16xf32>
    %32 = vector.extract_strided_slice %2 {offsets = [4, 0, 0], sizes = [10, 10, 30], strides = [1, 1, 1]} : vector<14x10x30xbf16> to vector<10x10x30xbf16>
    %c4 = arith.constant 4 : index
    %c0_16 = arith.constant 0 : index
    %c0_17 = arith.constant 0 : index
    %33 = vector.load %arg2[%c4, %c0_16, %c0_17] : memref<5x30x16xbf16, #tpu.memory_space<vmem>>, vector<1x30x16xbf16>
    %34 = vector.shape_cast %33 : vector<1x30x16xbf16> to vector<30x16xbf16>
    %35 = vector.shape_cast %34 : vector<30x16xbf16> to vector<1x30x16xbf16>
    %36 = vector.broadcast %35 : vector<1x30x16xbf16> to vector<10x30x16xbf16>
    "tpu.trace_start"() <{level = 10 : i32, message = "hwk,hko->hwo"}> : () -> ()
    %cst_18 = arith.constant dense<0.000000e+00> : vector<10x10x16xf32>
    %37 = tpu.matmul %32, %36, %cst_18 {dimension_numbers = #tpu.dot_dimension_numbers<[2], [1], [1], [2], [0, 0, 0, 1, 1, 2], [0], [0]>} : vector<10x10x30xbf16>, vector<10x30x16xbf16>, vector<10x10x16xf32> -> vector<10x10x16xf32>
    "tpu.trace_stop"() : () -> ()
    %38 = arith.addf %31, %37 : vector<10x10x16xf32>
    %c0_19 = arith.constant 0 : index
    %c0_20 = arith.constant 0 : index
    %c0_21 = arith.constant 0 : index
    %39 = vector.load %arg3[%c0_19, %c0_20, %c0_21] : memref<1x1x16xf32, #tpu.memory_space<vmem>>, vector<1x1x16xf32>
    %40 = vector.broadcast %39 : vector<1x1x16xf32> to vector<10x10x16xf32>
    %41 = arith.addf %38, %40 : vector<10x10x16xf32>
    %cst_22 = arith.constant 0.000000e+00 : f32
    %42 = vector.broadcast %cst_22 : f32 to vector<10x10x16xf32>
    %43 = arith.maximumf %41, %42 : vector<10x10x16xf32>
    %cst_23 = arith.constant 0.000000e+00 : f32
    %44 = vector.broadcast %cst_23 : f32 to vector<1x120xf32>
    %45 = vector.extract_strided_slice %43 {offsets = [0, 0, 0], sizes = [1, 1, 16], strides = [1, 1, 1]} : vector<10x10x16xf32> to vector<1x1x16xf32>
    %46 = vector.extract_strided_slice %43 {offsets = [0, 1, 0], sizes = [1, 1, 16], strides = [1, 1, 1]} : vector<10x10x16xf32> to vector<1x1x16xf32>
    %47 = arith.maximumf %45, %46 : vector<1x1x16xf32>
    %48 = vector.extract_strided_slice %43 {offsets = [1, 0, 0], sizes = [1, 1, 16], strides = [1, 1, 1]} : vector<10x10x16xf32> to vector<1x1x16xf32>
    %49 = vector.extract_strided_slice %43 {offsets = [1, 1, 0], sizes = [1, 1, 16], strides = [1, 1, 1]} : vector<10x10x16xf32> to vector<1x1x16xf32>
    %50 = arith.maximumf %48, %49 : vector<1x1x16xf32>
    %51 = arith.maximumf %47, %50 : vector<1x1x16xf32>
    %52 = vector.shape_cast %51 : vector<1x1x16xf32> to vector<1x16xf32>
    %53 = arith.truncf %52 : vector<1x16xf32> to vector<1x16xbf16>
    %c0_24 = arith.constant 0 : index
    %c0_25 = arith.constant 0 : index
    %c0_26 = arith.constant 0 : index
    %c0_27 = arith.constant 0 : index
    %54 = vector.load %arg4[%c0_24, %c0_25, %c0_26, %c0_27] : memref<5x5x16x120xbf16, #tpu.memory_space<vmem>>, vector<1x1x16x120xbf16>
    %55 = vector.shape_cast %54 : vector<1x1x16x120xbf16> to vector<16x120xbf16>
    %cst_28 = arith.constant dense<0.000000e+00> : vector<1x120xf32>
    %56 = tpu.matmul %53, %55, %cst_28 {dimension_numbers = #tpu.dot_dimension_numbers<[1], [0], [0], [1], [0, 0, 1, 1], [], []>} : vector<1x16xbf16>, vector<16x120xbf16>, vector<1x120xf32> -> vector<1x120xf32>
    %57 = arith.addf %44, %56 : vector<1x120xf32>
    %58 = vector.extract_strided_slice %43 {offsets = [0, 2, 0], sizes = [1, 1, 16], strides = [1, 1, 1]} : vector<10x10x16xf32> to vector<1x1x16xf32>
    %59 = vector.extract_strided_slice %43 {offsets = [0, 3, 0], sizes = [1, 1, 16], strides = [1, 1, 1]} : vector<10x10x16xf32> to vector<1x1x16xf32>
    %60 = arith.maximumf %58, %59 : vector<1x1x16xf32>
    %61 = vector.extract_strided_slice %43 {offsets = [1, 2, 0], sizes = [1, 1, 16], strides = [1, 1, 1]} : vector<10x10x16xf32> to vector<1x1x16xf32>
    %62 = vector.extract_strided_slice %43 {offsets = [1, 3, 0], sizes = [1, 1, 16], strides = [1, 1, 1]} : vector<10x10x16xf32> to vector<1x1x16xf32>
    %63 = arith.maximumf %61, %62 : vector<1x1x16xf32>
    %64 = arith.maximumf %60, %63 : vector<1x1x16xf32>
    %65 = vector.shape_cast %64 : vector<1x1x16xf32> to vector<1x16xf32>
    %66 = arith.truncf %65 : vector<1x16xf32> to vector<1x16xbf16>
    %c0_29 = arith.constant 0 : index
    %c1_30 = arith.constant 1 : index
    %c0_31 = arith.constant 0 : index
    %c0_32 = arith.constant 0 : index
    %67 = vector.load %arg4[%c0_29, %c1_30, %c0_31, %c0_32] : memref<5x5x16x120xbf16, #tpu.memory_space<vmem>>, vector<1x1x16x120xbf16>
    %68 = vector.shape_cast %67 : vector<1x1x16x120xbf16> to vector<16x120xbf16>
    %cst_33 = arith.constant dense<0.000000e+00> : vector<1x120xf32>
    %69 = tpu.matmul %66, %68, %cst_33 {dimension_numbers = #tpu.dot_dimension_numbers<[1], [0], [0], [1], [0, 0, 1, 1], [], []>} : vector<1x16xbf16>, vector<16x120xbf16>, vector<1x120xf32> -> vector<1x120xf32>
    %70 = arith.addf %57, %69 : vector<1x120xf32>
    %71 = vector.extract_strided_slice %43 {offsets = [0, 4, 0], sizes = [1, 1, 16], strides = [1, 1, 1]} : vector<10x10x16xf32> to vector<1x1x16xf32>
    %72 = vector.extract_strided_slice %43 {offsets = [0, 5, 0], sizes = [1, 1, 16], strides = [1, 1, 1]} : vector<10x10x16xf32> to vector<1x1x16xf32>
    %73 = arith.maximumf %71, %72 : vector<1x1x16xf32>
    %74 = vector.extract_strided_slice %43 {offsets = [1, 4, 0], sizes = [1, 1, 16], strides = [1, 1, 1]} : vector<10x10x16xf32> to vector<1x1x16xf32>
    %75 = vector.extract_strided_slice %43 {offsets = [1, 5, 0], sizes = [1, 1, 16], strides = [1, 1, 1]} : vector<10x10x16xf32> to vector<1x1x16xf32>
    %76 = arith.maximumf %74, %75 : vector<1x1x16xf32>
    %77 = arith.maximumf %73, %76 : vector<1x1x16xf32>
    %78 = vector.shape_cast %77 : vector<1x1x16xf32> to vector<1x16xf32>
    %79 = arith.truncf %78 : vector<1x16xf32> to vector<1x16xbf16>
    %c0_34 = arith.constant 0 : index
    %c2_35 = arith.constant 2 : index
    %c0_36 = arith.constant 0 : index
    %c0_37 = arith.constant 0 : index
    %80 = vector.load %arg4[%c0_34, %c2_35, %c0_36, %c0_37] : memref<5x5x16x120xbf16, #tpu.memory_space<vmem>>, vector<1x1x16x120xbf16>
    %81 = vector.shape_cast %80 : vector<1x1x16x120xbf16> to vector<16x120xbf16>
    %cst_38 = arith.constant dense<0.000000e+00> : vector<1x120xf32>
    %82 = tpu.matmul %79, %81, %cst_38 {dimension_numbers = #tpu.dot_dimension_numbers<[1], [0], [0], [1], [0, 0, 1, 1], [], []>} : vector<1x16xbf16>, vector<16x120xbf16>, vector<1x120xf32> -> vector<1x120xf32>
    %83 = arith.addf %70, %82 : vector<1x120xf32>
    %84 = vector.extract_strided_slice %43 {offsets = [0, 6, 0], sizes = [1, 1, 16], strides = [1, 1, 1]} : vector<10x10x16xf32> to vector<1x1x16xf32>
    %85 = vector.extract_strided_slice %43 {offsets = [0, 7, 0], sizes = [1, 1, 16], strides = [1, 1, 1]} : vector<10x10x16xf32> to vector<1x1x16xf32>
    %86 = arith.maximumf %84, %85 : vector<1x1x16xf32>
    %87 = vector.extract_strided_slice %43 {offsets = [1, 6, 0], sizes = [1, 1, 16], strides = [1, 1, 1]} : vector<10x10x16xf32> to vector<1x1x16xf32>
    %88 = vector.extract_strided_slice %43 {offsets = [1, 7, 0], sizes = [1, 1, 16], strides = [1, 1, 1]} : vector<10x10x16xf32> to vector<1x1x16xf32>
    %89 = arith.maximumf %87, %88 : vector<1x1x16xf32>
    %90 = arith.maximumf %86, %89 : vector<1x1x16xf32>
    %91 = vector.shape_cast %90 : vector<1x1x16xf32> to vector<1x16xf32>
    %92 = arith.truncf %91 : vector<1x16xf32> to vector<1x16xbf16>
    %c0_39 = arith.constant 0 : index
    %c3_40 = arith.constant 3 : index
    %c0_41 = arith.constant 0 : index
    %c0_42 = arith.constant 0 : index
    %93 = vector.load %arg4[%c0_39, %c3_40, %c0_41, %c0_42] : memref<5x5x16x120xbf16, #tpu.memory_space<vmem>>, vector<1x1x16x120xbf16>
    %94 = vector.shape_cast %93 : vector<1x1x16x120xbf16> to vector<16x120xbf16>
    %cst_43 = arith.constant dense<0.000000e+00> : vector<1x120xf32>
    %95 = tpu.matmul %92, %94, %cst_43 {dimension_numbers = #tpu.dot_dimension_numbers<[1], [0], [0], [1], [0, 0, 1, 1], [], []>} : vector<1x16xbf16>, vector<16x120xbf16>, vector<1x120xf32> -> vector<1x120xf32>
    %96 = arith.addf %83, %95 : vector<1x120xf32>
    %97 = vector.extract_strided_slice %43 {offsets = [0, 8, 0], sizes = [1, 1, 16], strides = [1, 1, 1]} : vector<10x10x16xf32> to vector<1x1x16xf32>
    %98 = vector.extract_strided_slice %43 {offsets = [0, 9, 0], sizes = [1, 1, 16], strides = [1, 1, 1]} : vector<10x10x16xf32> to vector<1x1x16xf32>
    %99 = arith.maximumf %97, %98 : vector<1x1x16xf32>
    %100 = vector.extract_strided_slice %43 {offsets = [1, 8, 0], sizes = [1, 1, 16], strides = [1, 1, 1]} : vector<10x10x16xf32> to vector<1x1x16xf32>
    %101 = vector.extract_strided_slice %43 {offsets = [1, 9, 0], sizes = [1, 1, 16], strides = [1, 1, 1]} : vector<10x10x16xf32> to vector<1x1x16xf32>
    %102 = arith.maximumf %100, %101 : vector<1x1x16xf32>
    %103 = arith.maximumf %99, %102 : vector<1x1x16xf32>
    %104 = vector.shape_cast %103 : vector<1x1x16xf32> to vector<1x16xf32>
    %105 = arith.truncf %104 : vector<1x16xf32> to vector<1x16xbf16>
    %c0_44 = arith.constant 0 : index
    %c4_45 = arith.constant 4 : index
    %c0_46 = arith.constant 0 : index
    %c0_47 = arith.constant 0 : index
    %106 = vector.load %arg4[%c0_44, %c4_45, %c0_46, %c0_47] : memref<5x5x16x120xbf16, #tpu.memory_space<vmem>>, vector<1x1x16x120xbf16>
    %107 = vector.shape_cast %106 : vector<1x1x16x120xbf16> to vector<16x120xbf16>
    %cst_48 = arith.constant dense<0.000000e+00> : vector<1x120xf32>
    %108 = tpu.matmul %105, %107, %cst_48 {dimension_numbers = #tpu.dot_dimension_numbers<[1], [0], [0], [1], [0, 0, 1, 1], [], []>} : vector<1x16xbf16>, vector<16x120xbf16>, vector<1x120xf32> -> vector<1x120xf32>
    %109 = arith.addf %96, %108 : vector<1x120xf32>
    %110 = vector.extract_strided_slice %43 {offsets = [2, 0, 0], sizes = [1, 1, 16], strides = [1, 1, 1]} : vector<10x10x16xf32> to vector<1x1x16xf32>
    %111 = vector.extract_strided_slice %43 {offsets = [2, 1, 0], sizes = [1, 1, 16], strides = [1, 1, 1]} : vector<10x10x16xf32> to vector<1x1x16xf32>
    %112 = arith.maximumf %110, %111 : vector<1x1x16xf32>
    %113 = vector.extract_strided_slice %43 {offsets = [3, 0, 0], sizes = [1, 1, 16], strides = [1, 1, 1]} : vector<10x10x16xf32> to vector<1x1x16xf32>
    %114 = vector.extract_strided_slice %43 {offsets = [3, 1, 0], sizes = [1, 1, 16], strides = [1, 1, 1]} : vector<10x10x16xf32> to vector<1x1x16xf32>
    %115 = arith.maximumf %113, %114 : vector<1x1x16xf32>
    %116 = arith.maximumf %112, %115 : vector<1x1x16xf32>
    %117 = vector.shape_cast %116 : vector<1x1x16xf32> to vector<1x16xf32>
    %118 = arith.truncf %117 : vector<1x16xf32> to vector<1x16xbf16>
    %c1_49 = arith.constant 1 : index
    %c0_50 = arith.constant 0 : index
    %c0_51 = arith.constant 0 : index
    %c0_52 = arith.constant 0 : index
    %119 = vector.load %arg4[%c1_49, %c0_50, %c0_51, %c0_52] : memref<5x5x16x120xbf16, #tpu.memory_space<vmem>>, vector<1x1x16x120xbf16>
    %120 = vector.shape_cast %119 : vector<1x1x16x120xbf16> to vector<16x120xbf16>
    %cst_53 = arith.constant dense<0.000000e+00> : vector<1x120xf32>
    %121 = tpu.matmul %118, %120, %cst_53 {dimension_numbers = #tpu.dot_dimension_numbers<[1], [0], [0], [1], [0, 0, 1, 1], [], []>} : vector<1x16xbf16>, vector<16x120xbf16>, vector<1x120xf32> -> vector<1x120xf32>
    %122 = arith.addf %109, %121 : vector<1x120xf32>
    %123 = vector.extract_strided_slice %43 {offsets = [2, 2, 0], sizes = [1, 1, 16], strides = [1, 1, 1]} : vector<10x10x16xf32> to vector<1x1x16xf32>
    %124 = vector.extract_strided_slice %43 {offsets = [2, 3, 0], sizes = [1, 1, 16], strides = [1, 1, 1]} : vector<10x10x16xf32> to vector<1x1x16xf32>
    %125 = arith.maximumf %123, %124 : vector<1x1x16xf32>
    %126 = vector.extract_strided_slice %43 {offsets = [3, 2, 0], sizes = [1, 1, 16], strides = [1, 1, 1]} : vector<10x10x16xf32> to vector<1x1x16xf32>
    %127 = vector.extract_strided_slice %43 {offsets = [3, 3, 0], sizes = [1, 1, 16], strides = [1, 1, 1]} : vector<10x10x16xf32> to vector<1x1x16xf32>
    %128 = arith.maximumf %126, %127 : vector<1x1x16xf32>
    %129 = arith.maximumf %125, %128 : vector<1x1x16xf32>
    %130 = vector.shape_cast %129 : vector<1x1x16xf32> to vector<1x16xf32>
    %131 = arith.truncf %130 : vector<1x16xf32> to vector<1x16xbf16>
    %c1_54 = arith.constant 1 : index
    %c1_55 = arith.constant 1 : index
    %c0_56 = arith.constant 0 : index
    %c0_57 = arith.constant 0 : index
    %132 = vector.load %arg4[%c1_54, %c1_55, %c0_56, %c0_57] : memref<5x5x16x120xbf16, #tpu.memory_space<vmem>>, vector<1x1x16x120xbf16>
    %133 = vector.shape_cast %132 : vector<1x1x16x120xbf16> to vector<16x120xbf16>
    %cst_58 = arith.constant dense<0.000000e+00> : vector<1x120xf32>
    %134 = tpu.matmul %131, %133, %cst_58 {dimension_numbers = #tpu.dot_dimension_numbers<[1], [0], [0], [1], [0, 0, 1, 1], [], []>} : vector<1x16xbf16>, vector<16x120xbf16>, vector<1x120xf32> -> vector<1x120xf32>
    %135 = arith.addf %122, %134 : vector<1x120xf32>
    %136 = vector.extract_strided_slice %43 {offsets = [2, 4, 0], sizes = [1, 1, 16], strides = [1, 1, 1]} : vector<10x10x16xf32> to vector<1x1x16xf32>
    %137 = vector.extract_strided_slice %43 {offsets = [2, 5, 0], sizes = [1, 1, 16], strides = [1, 1, 1]} : vector<10x10x16xf32> to vector<1x1x16xf32>
    %138 = arith.maximumf %136, %137 : vector<1x1x16xf32>
    %139 = vector.extract_strided_slice %43 {offsets = [3, 4, 0], sizes = [1, 1, 16], strides = [1, 1, 1]} : vector<10x10x16xf32> to vector<1x1x16xf32>
    %140 = vector.extract_strided_slice %43 {offsets = [3, 5, 0], sizes = [1, 1, 16], strides = [1, 1, 1]} : vector<10x10x16xf32> to vector<1x1x16xf32>
    %141 = arith.maximumf %139, %140 : vector<1x1x16xf32>
    %142 = arith.maximumf %138, %141 : vector<1x1x16xf32>
    %143 = vector.shape_cast %142 : vector<1x1x16xf32> to vector<1x16xf32>
    %144 = arith.truncf %143 : vector<1x16xf32> to vector<1x16xbf16>
    %c1_59 = arith.constant 1 : index
    %c2_60 = arith.constant 2 : index
    %c0_61 = arith.constant 0 : index
    %c0_62 = arith.constant 0 : index
    %145 = vector.load %arg4[%c1_59, %c2_60, %c0_61, %c0_62] : memref<5x5x16x120xbf16, #tpu.memory_space<vmem>>, vector<1x1x16x120xbf16>
    %146 = vector.shape_cast %145 : vector<1x1x16x120xbf16> to vector<16x120xbf16>
    %cst_63 = arith.constant dense<0.000000e+00> : vector<1x120xf32>
    %147 = tpu.matmul %144, %146, %cst_63 {dimension_numbers = #tpu.dot_dimension_numbers<[1], [0], [0], [1], [0, 0, 1, 1], [], []>} : vector<1x16xbf16>, vector<16x120xbf16>, vector<1x120xf32> -> vector<1x120xf32>
    %148 = arith.addf %135, %147 : vector<1x120xf32>
    %149 = vector.extract_strided_slice %43 {offsets = [2, 6, 0], sizes = [1, 1, 16], strides = [1, 1, 1]} : vector<10x10x16xf32> to vector<1x1x16xf32>
    %150 = vector.extract_strided_slice %43 {offsets = [2, 7, 0], sizes = [1, 1, 16], strides = [1, 1, 1]} : vector<10x10x16xf32> to vector<1x1x16xf32>
    %151 = arith.maximumf %149, %150 : vector<1x1x16xf32>
    %152 = vector.extract_strided_slice %43 {offsets = [3, 6, 0], sizes = [1, 1, 16], strides = [1, 1, 1]} : vector<10x10x16xf32> to vector<1x1x16xf32>
    %153 = vector.extract_strided_slice %43 {offsets = [3, 7, 0], sizes = [1, 1, 16], strides = [1, 1, 1]} : vector<10x10x16xf32> to vector<1x1x16xf32>
    %154 = arith.maximumf %152, %153 : vector<1x1x16xf32>
    %155 = arith.maximumf %151, %154 : vector<1x1x16xf32>
    %156 = vector.shape_cast %155 : vector<1x1x16xf32> to vector<1x16xf32>
    %157 = arith.truncf %156 : vector<1x16xf32> to vector<1x16xbf16>
    %c1_64 = arith.constant 1 : index
    %c3_65 = arith.constant 3 : index
    %c0_66 = arith.constant 0 : index
    %c0_67 = arith.constant 0 : index
    %158 = vector.load %arg4[%c1_64, %c3_65, %c0_66, %c0_67] : memref<5x5x16x120xbf16, #tpu.memory_space<vmem>>, vector<1x1x16x120xbf16>
    %159 = vector.shape_cast %158 : vector<1x1x16x120xbf16> to vector<16x120xbf16>
    %cst_68 = arith.constant dense<0.000000e+00> : vector<1x120xf32>
    %160 = tpu.matmul %157, %159, %cst_68 {dimension_numbers = #tpu.dot_dimension_numbers<[1], [0], [0], [1], [0, 0, 1, 1], [], []>} : vector<1x16xbf16>, vector<16x120xbf16>, vector<1x120xf32> -> vector<1x120xf32>
    %161 = arith.addf %148, %160 : vector<1x120xf32>
    %162 = vector.extract_strided_slice %43 {offsets = [2, 8, 0], sizes = [1, 1, 16], strides = [1, 1, 1]} : vector<10x10x16xf32> to vector<1x1x16xf32>
    %163 = vector.extract_strided_slice %43 {offsets = [2, 9, 0], sizes = [1, 1, 16], strides = [1, 1, 1]} : vector<10x10x16xf32> to vector<1x1x16xf32>
    %164 = arith.maximumf %162, %163 : vector<1x1x16xf32>
    %165 = vector.extract_strided_slice %43 {offsets = [3, 8, 0], sizes = [1, 1, 16], strides = [1, 1, 1]} : vector<10x10x16xf32> to vector<1x1x16xf32>
    %166 = vector.extract_strided_slice %43 {offsets = [3, 9, 0], sizes = [1, 1, 16], strides = [1, 1, 1]} : vector<10x10x16xf32> to vector<1x1x16xf32>
    %167 = arith.maximumf %165, %166 : vector<1x1x16xf32>
    %168 = arith.maximumf %164, %167 : vector<1x1x16xf32>
    %169 = vector.shape_cast %168 : vector<1x1x16xf32> to vector<1x16xf32>
    %170 = arith.truncf %169 : vector<1x16xf32> to vector<1x16xbf16>
    %c1_69 = arith.constant 1 : index
    %c4_70 = arith.constant 4 : index
    %c0_71 = arith.constant 0 : index
    %c0_72 = arith.constant 0 : index
    %171 = vector.load %arg4[%c1_69, %c4_70, %c0_71, %c0_72] : memref<5x5x16x120xbf16, #tpu.memory_space<vmem>>, vector<1x1x16x120xbf16>
    %172 = vector.shape_cast %171 : vector<1x1x16x120xbf16> to vector<16x120xbf16>
    %cst_73 = arith.constant dense<0.000000e+00> : vector<1x120xf32>
    %173 = tpu.matmul %170, %172, %cst_73 {dimension_numbers = #tpu.dot_dimension_numbers<[1], [0], [0], [1], [0, 0, 1, 1], [], []>} : vector<1x16xbf16>, vector<16x120xbf16>, vector<1x120xf32> -> vector<1x120xf32>
    %174 = arith.addf %161, %173 : vector<1x120xf32>
    %175 = vector.extract_strided_slice %43 {offsets = [4, 0, 0], sizes = [1, 1, 16], strides = [1, 1, 1]} : vector<10x10x16xf32> to vector<1x1x16xf32>
    %176 = vector.extract_strided_slice %43 {offsets = [4, 1, 0], sizes = [1, 1, 16], strides = [1, 1, 1]} : vector<10x10x16xf32> to vector<1x1x16xf32>
    %177 = arith.maximumf %175, %176 : vector<1x1x16xf32>
    %178 = vector.extract_strided_slice %43 {offsets = [5, 0, 0], sizes = [1, 1, 16], strides = [1, 1, 1]} : vector<10x10x16xf32> to vector<1x1x16xf32>
    %179 = vector.extract_strided_slice %43 {offsets = [5, 1, 0], sizes = [1, 1, 16], strides = [1, 1, 1]} : vector<10x10x16xf32> to vector<1x1x16xf32>
    %180 = arith.maximumf %178, %179 : vector<1x1x16xf32>
    %181 = arith.maximumf %177, %180 : vector<1x1x16xf32>
    %182 = vector.shape_cast %181 : vector<1x1x16xf32> to vector<1x16xf32>
    %183 = arith.truncf %182 : vector<1x16xf32> to vector<1x16xbf16>
    %c2_74 = arith.constant 2 : index
    %c0_75 = arith.constant 0 : index
    %c0_76 = arith.constant 0 : index
    %c0_77 = arith.constant 0 : index
    %184 = vector.load %arg4[%c2_74, %c0_75, %c0_76, %c0_77] : memref<5x5x16x120xbf16, #tpu.memory_space<vmem>>, vector<1x1x16x120xbf16>
    %185 = vector.shape_cast %184 : vector<1x1x16x120xbf16> to vector<16x120xbf16>
    %cst_78 = arith.constant dense<0.000000e+00> : vector<1x120xf32>
    %186 = tpu.matmul %183, %185, %cst_78 {dimension_numbers = #tpu.dot_dimension_numbers<[1], [0], [0], [1], [0, 0, 1, 1], [], []>} : vector<1x16xbf16>, vector<16x120xbf16>, vector<1x120xf32> -> vector<1x120xf32>
    %187 = arith.addf %174, %186 : vector<1x120xf32>
    %188 = vector.extract_strided_slice %43 {offsets = [4, 2, 0], sizes = [1, 1, 16], strides = [1, 1, 1]} : vector<10x10x16xf32> to vector<1x1x16xf32>
    %189 = vector.extract_strided_slice %43 {offsets = [4, 3, 0], sizes = [1, 1, 16], strides = [1, 1, 1]} : vector<10x10x16xf32> to vector<1x1x16xf32>
    %190 = arith.maximumf %188, %189 : vector<1x1x16xf32>
    %191 = vector.extract_strided_slice %43 {offsets = [5, 2, 0], sizes = [1, 1, 16], strides = [1, 1, 1]} : vector<10x10x16xf32> to vector<1x1x16xf32>
    %192 = vector.extract_strided_slice %43 {offsets = [5, 3, 0], sizes = [1, 1, 16], strides = [1, 1, 1]} : vector<10x10x16xf32> to vector<1x1x16xf32>
    %193 = arith.maximumf %191, %192 : vector<1x1x16xf32>
    %194 = arith.maximumf %190, %193 : vector<1x1x16xf32>
    %195 = vector.shape_cast %194 : vector<1x1x16xf32> to vector<1x16xf32>
    %196 = arith.truncf %195 : vector<1x16xf32> to vector<1x16xbf16>
    %c2_79 = arith.constant 2 : index
    %c1_80 = arith.constant 1 : index
    %c0_81 = arith.constant 0 : index
    %c0_82 = arith.constant 0 : index
    %197 = vector.load %arg4[%c2_79, %c1_80, %c0_81, %c0_82] : memref<5x5x16x120xbf16, #tpu.memory_space<vmem>>, vector<1x1x16x120xbf16>
    %198 = vector.shape_cast %197 : vector<1x1x16x120xbf16> to vector<16x120xbf16>
    %cst_83 = arith.constant dense<0.000000e+00> : vector<1x120xf32>
    %199 = tpu.matmul %196, %198, %cst_83 {dimension_numbers = #tpu.dot_dimension_numbers<[1], [0], [0], [1], [0, 0, 1, 1], [], []>} : vector<1x16xbf16>, vector<16x120xbf16>, vector<1x120xf32> -> vector<1x120xf32>
    %200 = arith.addf %187, %199 : vector<1x120xf32>
    %201 = vector.extract_strided_slice %43 {offsets = [4, 4, 0], sizes = [1, 1, 16], strides = [1, 1, 1]} : vector<10x10x16xf32> to vector<1x1x16xf32>
    %202 = vector.extract_strided_slice %43 {offsets = [4, 5, 0], sizes = [1, 1, 16], strides = [1, 1, 1]} : vector<10x10x16xf32> to vector<1x1x16xf32>
    %203 = arith.maximumf %201, %202 : vector<1x1x16xf32>
    %204 = vector.extract_strided_slice %43 {offsets = [5, 4, 0], sizes = [1, 1, 16], strides = [1, 1, 1]} : vector<10x10x16xf32> to vector<1x1x16xf32>
    %205 = vector.extract_strided_slice %43 {offsets = [5, 5, 0], sizes = [1, 1, 16], strides = [1, 1, 1]} : vector<10x10x16xf32> to vector<1x1x16xf32>
    %206 = arith.maximumf %204, %205 : vector<1x1x16xf32>
    %207 = arith.maximumf %203, %206 : vector<1x1x16xf32>
    %208 = vector.shape_cast %207 : vector<1x1x16xf32> to vector<1x16xf32>
    %209 = arith.truncf %208 : vector<1x16xf32> to vector<1x16xbf16>
    %c2_84 = arith.constant 2 : index
    %c2_85 = arith.constant 2 : index
    %c0_86 = arith.constant 0 : index
    %c0_87 = arith.constant 0 : index
    %210 = vector.load %arg4[%c2_84, %c2_85, %c0_86, %c0_87] : memref<5x5x16x120xbf16, #tpu.memory_space<vmem>>, vector<1x1x16x120xbf16>
    %211 = vector.shape_cast %210 : vector<1x1x16x120xbf16> to vector<16x120xbf16>
    %cst_88 = arith.constant dense<0.000000e+00> : vector<1x120xf32>
    %212 = tpu.matmul %209, %211, %cst_88 {dimension_numbers = #tpu.dot_dimension_numbers<[1], [0], [0], [1], [0, 0, 1, 1], [], []>} : vector<1x16xbf16>, vector<16x120xbf16>, vector<1x120xf32> -> vector<1x120xf32>
    %213 = arith.addf %200, %212 : vector<1x120xf32>
    %214 = vector.extract_strided_slice %43 {offsets = [4, 6, 0], sizes = [1, 1, 16], strides = [1, 1, 1]} : vector<10x10x16xf32> to vector<1x1x16xf32>
    %215 = vector.extract_strided_slice %43 {offsets = [4, 7, 0], sizes = [1, 1, 16], strides = [1, 1, 1]} : vector<10x10x16xf32> to vector<1x1x16xf32>
    %216 = arith.maximumf %214, %215 : vector<1x1x16xf32>
    %217 = vector.extract_strided_slice %43 {offsets = [5, 6, 0], sizes = [1, 1, 16], strides = [1, 1, 1]} : vector<10x10x16xf32> to vector<1x1x16xf32>
    %218 = vector.extract_strided_slice %43 {offsets = [5, 7, 0], sizes = [1, 1, 16], strides = [1, 1, 1]} : vector<10x10x16xf32> to vector<1x1x16xf32>
    %219 = arith.maximumf %217, %218 : vector<1x1x16xf32>
    %220 = arith.maximumf %216, %219 : vector<1x1x16xf32>
    %221 = vector.shape_cast %220 : vector<1x1x16xf32> to vector<1x16xf32>
    %222 = arith.truncf %221 : vector<1x16xf32> to vector<1x16xbf16>
    %c2_89 = arith.constant 2 : index
    %c3_90 = arith.constant 3 : index
    %c0_91 = arith.constant 0 : index
    %c0_92 = arith.constant 0 : index
    %223 = vector.load %arg4[%c2_89, %c3_90, %c0_91, %c0_92] : memref<5x5x16x120xbf16, #tpu.memory_space<vmem>>, vector<1x1x16x120xbf16>
    %224 = vector.shape_cast %223 : vector<1x1x16x120xbf16> to vector<16x120xbf16>
    %cst_93 = arith.constant dense<0.000000e+00> : vector<1x120xf32>
    %225 = tpu.matmul %222, %224, %cst_93 {dimension_numbers = #tpu.dot_dimension_numbers<[1], [0], [0], [1], [0, 0, 1, 1], [], []>} : vector<1x16xbf16>, vector<16x120xbf16>, vector<1x120xf32> -> vector<1x120xf32>
    %226 = arith.addf %213, %225 : vector<1x120xf32>
    %227 = vector.extract_strided_slice %43 {offsets = [4, 8, 0], sizes = [1, 1, 16], strides = [1, 1, 1]} : vector<10x10x16xf32> to vector<1x1x16xf32>
    %228 = vector.extract_strided_slice %43 {offsets = [4, 9, 0], sizes = [1, 1, 16], strides = [1, 1, 1]} : vector<10x10x16xf32> to vector<1x1x16xf32>
    %229 = arith.maximumf %227, %228 : vector<1x1x16xf32>
    %230 = vector.extract_strided_slice %43 {offsets = [5, 8, 0], sizes = [1, 1, 16], strides = [1, 1, 1]} : vector<10x10x16xf32> to vector<1x1x16xf32>
    %231 = vector.extract_strided_slice %43 {offsets = [5, 9, 0], sizes = [1, 1, 16], strides = [1, 1, 1]} : vector<10x10x16xf32> to vector<1x1x16xf32>
    %232 = arith.maximumf %230, %231 : vector<1x1x16xf32>
    %233 = arith.maximumf %229, %232 : vector<1x1x16xf32>
    %234 = vector.shape_cast %233 : vector<1x1x16xf32> to vector<1x16xf32>
    %235 = arith.truncf %234 : vector<1x16xf32> to vector<1x16xbf16>
    %c2_94 = arith.constant 2 : index
    %c4_95 = arith.constant 4 : index
    %c0_96 = arith.constant 0 : index
    %c0_97 = arith.constant 0 : index
    %236 = vector.load %arg4[%c2_94, %c4_95, %c0_96, %c0_97] : memref<5x5x16x120xbf16, #tpu.memory_space<vmem>>, vector<1x1x16x120xbf16>
    %237 = vector.shape_cast %236 : vector<1x1x16x120xbf16> to vector<16x120xbf16>
    %cst_98 = arith.constant dense<0.000000e+00> : vector<1x120xf32>
    %238 = tpu.matmul %235, %237, %cst_98 {dimension_numbers = #tpu.dot_dimension_numbers<[1], [0], [0], [1], [0, 0, 1, 1], [], []>} : vector<1x16xbf16>, vector<16x120xbf16>, vector<1x120xf32> -> vector<1x120xf32>
    %239 = arith.addf %226, %238 : vector<1x120xf32>
    %240 = vector.extract_strided_slice %43 {offsets = [6, 0, 0], sizes = [1, 1, 16], strides = [1, 1, 1]} : vector<10x10x16xf32> to vector<1x1x16xf32>
    %241 = vector.extract_strided_slice %43 {offsets = [6, 1, 0], sizes = [1, 1, 16], strides = [1, 1, 1]} : vector<10x10x16xf32> to vector<1x1x16xf32>
    %242 = arith.maximumf %240, %241 : vector<1x1x16xf32>
    %243 = vector.extract_strided_slice %43 {offsets = [7, 0, 0], sizes = [1, 1, 16], strides = [1, 1, 1]} : vector<10x10x16xf32> to vector<1x1x16xf32>
    %244 = vector.extract_strided_slice %43 {offsets = [7, 1, 0], sizes = [1, 1, 16], strides = [1, 1, 1]} : vector<10x10x16xf32> to vector<1x1x16xf32>
    %245 = arith.maximumf %243, %244 : vector<1x1x16xf32>
    %246 = arith.maximumf %242, %245 : vector<1x1x16xf32>
    %247 = vector.shape_cast %246 : vector<1x1x16xf32> to vector<1x16xf32>
    %248 = arith.truncf %247 : vector<1x16xf32> to vector<1x16xbf16>
    %c3_99 = arith.constant 3 : index
    %c0_100 = arith.constant 0 : index
    %c0_101 = arith.constant 0 : index
    %c0_102 = arith.constant 0 : index
    %249 = vector.load %arg4[%c3_99, %c0_100, %c0_101, %c0_102] : memref<5x5x16x120xbf16, #tpu.memory_space<vmem>>, vector<1x1x16x120xbf16>
    %250 = vector.shape_cast %249 : vector<1x1x16x120xbf16> to vector<16x120xbf16>
    %cst_103 = arith.constant dense<0.000000e+00> : vector<1x120xf32>
    %251 = tpu.matmul %248, %250, %cst_103 {dimension_numbers = #tpu.dot_dimension_numbers<[1], [0], [0], [1], [0, 0, 1, 1], [], []>} : vector<1x16xbf16>, vector<16x120xbf16>, vector<1x120xf32> -> vector<1x120xf32>
    %252 = arith.addf %239, %251 : vector<1x120xf32>
    %253 = vector.extract_strided_slice %43 {offsets = [6, 2, 0], sizes = [1, 1, 16], strides = [1, 1, 1]} : vector<10x10x16xf32> to vector<1x1x16xf32>
    %254 = vector.extract_strided_slice %43 {offsets = [6, 3, 0], sizes = [1, 1, 16], strides = [1, 1, 1]} : vector<10x10x16xf32> to vector<1x1x16xf32>
    %255 = arith.maximumf %253, %254 : vector<1x1x16xf32>
    %256 = vector.extract_strided_slice %43 {offsets = [7, 2, 0], sizes = [1, 1, 16], strides = [1, 1, 1]} : vector<10x10x16xf32> to vector<1x1x16xf32>
    %257 = vector.extract_strided_slice %43 {offsets = [7, 3, 0], sizes = [1, 1, 16], strides = [1, 1, 1]} : vector<10x10x16xf32> to vector<1x1x16xf32>
    %258 = arith.maximumf %256, %257 : vector<1x1x16xf32>
    %259 = arith.maximumf %255, %258 : vector<1x1x16xf32>
    %260 = vector.shape_cast %259 : vector<1x1x16xf32> to vector<1x16xf32>
    %261 = arith.truncf %260 : vector<1x16xf32> to vector<1x16xbf16>
    %c3_104 = arith.constant 3 : index
    %c1_105 = arith.constant 1 : index
    %c0_106 = arith.constant 0 : index
    %c0_107 = arith.constant 0 : index
    %262 = vector.load %arg4[%c3_104, %c1_105, %c0_106, %c0_107] : memref<5x5x16x120xbf16, #tpu.memory_space<vmem>>, vector<1x1x16x120xbf16>
    %263 = vector.shape_cast %262 : vector<1x1x16x120xbf16> to vector<16x120xbf16>
    %cst_108 = arith.constant dense<0.000000e+00> : vector<1x120xf32>
    %264 = tpu.matmul %261, %263, %cst_108 {dimension_numbers = #tpu.dot_dimension_numbers<[1], [0], [0], [1], [0, 0, 1, 1], [], []>} : vector<1x16xbf16>, vector<16x120xbf16>, vector<1x120xf32> -> vector<1x120xf32>
    %265 = arith.addf %252, %264 : vector<1x120xf32>
    %266 = vector.extract_strided_slice %43 {offsets = [6, 4, 0], sizes = [1, 1, 16], strides = [1, 1, 1]} : vector<10x10x16xf32> to vector<1x1x16xf32>
    %267 = vector.extract_strided_slice %43 {offsets = [6, 5, 0], sizes = [1, 1, 16], strides = [1, 1, 1]} : vector<10x10x16xf32> to vector<1x1x16xf32>
    %268 = arith.maximumf %266, %267 : vector<1x1x16xf32>
    %269 = vector.extract_strided_slice %43 {offsets = [7, 4, 0], sizes = [1, 1, 16], strides = [1, 1, 1]} : vector<10x10x16xf32> to vector<1x1x16xf32>
    %270 = vector.extract_strided_slice %43 {offsets = [7, 5, 0], sizes = [1, 1, 16], strides = [1, 1, 1]} : vector<10x10x16xf32> to vector<1x1x16xf32>
    %271 = arith.maximumf %269, %270 : vector<1x1x16xf32>
    %272 = arith.maximumf %268, %271 : vector<1x1x16xf32>
    %273 = vector.shape_cast %272 : vector<1x1x16xf32> to vector<1x16xf32>
    %274 = arith.truncf %273 : vector<1x16xf32> to vector<1x16xbf16>
    %c3_109 = arith.constant 3 : index
    %c2_110 = arith.constant 2 : index
    %c0_111 = arith.constant 0 : index
    %c0_112 = arith.constant 0 : index
    %275 = vector.load %arg4[%c3_109, %c2_110, %c0_111, %c0_112] : memref<5x5x16x120xbf16, #tpu.memory_space<vmem>>, vector<1x1x16x120xbf16>
    %276 = vector.shape_cast %275 : vector<1x1x16x120xbf16> to vector<16x120xbf16>
    %cst_113 = arith.constant dense<0.000000e+00> : vector<1x120xf32>
    %277 = tpu.matmul %274, %276, %cst_113 {dimension_numbers = #tpu.dot_dimension_numbers<[1], [0], [0], [1], [0, 0, 1, 1], [], []>} : vector<1x16xbf16>, vector<16x120xbf16>, vector<1x120xf32> -> vector<1x120xf32>
    %278 = arith.addf %265, %277 : vector<1x120xf32>
    %279 = vector.extract_strided_slice %43 {offsets = [6, 6, 0], sizes = [1, 1, 16], strides = [1, 1, 1]} : vector<10x10x16xf32> to vector<1x1x16xf32>
    %280 = vector.extract_strided_slice %43 {offsets = [6, 7, 0], sizes = [1, 1, 16], strides = [1, 1, 1]} : vector<10x10x16xf32> to vector<1x1x16xf32>
    %281 = arith.maximumf %279, %280 : vector<1x1x16xf32>
    %282 = vector.extract_strided_slice %43 {offsets = [7, 6, 0], sizes = [1, 1, 16], strides = [1, 1, 1]} : vector<10x10x16xf32> to vector<1x1x16xf32>
    %283 = vector.extract_strided_slice %43 {offsets = [7, 7, 0], sizes = [1, 1, 16], strides = [1, 1, 1]} : vector<10x10x16xf32> to vector<1x1x16xf32>
    %284 = arith.maximumf %282, %283 : vector<1x1x16xf32>
    %285 = arith.maximumf %281, %284 : vector<1x1x16xf32>
    %286 = vector.shape_cast %285 : vector<1x1x16xf32> to vector<1x16xf32>
    %287 = arith.truncf %286 : vector<1x16xf32> to vector<1x16xbf16>
    %c3_114 = arith.constant 3 : index
    %c3_115 = arith.constant 3 : index
    %c0_116 = arith.constant 0 : index
    %c0_117 = arith.constant 0 : index
    %288 = vector.load %arg4[%c3_114, %c3_115, %c0_116, %c0_117] : memref<5x5x16x120xbf16, #tpu.memory_space<vmem>>, vector<1x1x16x120xbf16>
    %289 = vector.shape_cast %288 : vector<1x1x16x120xbf16> to vector<16x120xbf16>
    %cst_118 = arith.constant dense<0.000000e+00> : vector<1x120xf32>
    %290 = tpu.matmul %287, %289, %cst_118 {dimension_numbers = #tpu.dot_dimension_numbers<[1], [0], [0], [1], [0, 0, 1, 1], [], []>} : vector<1x16xbf16>, vector<16x120xbf16>, vector<1x120xf32> -> vector<1x120xf32>
    %291 = arith.addf %278, %290 : vector<1x120xf32>
    %292 = vector.extract_strided_slice %43 {offsets = [6, 8, 0], sizes = [1, 1, 16], strides = [1, 1, 1]} : vector<10x10x16xf32> to vector<1x1x16xf32>
    %293 = vector.extract_strided_slice %43 {offsets = [6, 9, 0], sizes = [1, 1, 16], strides = [1, 1, 1]} : vector<10x10x16xf32> to vector<1x1x16xf32>
    %294 = arith.maximumf %292, %293 : vector<1x1x16xf32>
    %295 = vector.extract_strided_slice %43 {offsets = [7, 8, 0], sizes = [1, 1, 16], strides = [1, 1, 1]} : vector<10x10x16xf32> to vector<1x1x16xf32>
    %296 = vector.extract_strided_slice %43 {offsets = [7, 9, 0], sizes = [1, 1, 16], strides = [1, 1, 1]} : vector<10x10x16xf32> to vector<1x1x16xf32>
    %297 = arith.maximumf %295, %296 : vector<1x1x16xf32>
    %298 = arith.maximumf %294, %297 : vector<1x1x16xf32>
    %299 = vector.shape_cast %298 : vector<1x1x16xf32> to vector<1x16xf32>
    %300 = arith.truncf %299 : vector<1x16xf32> to vector<1x16xbf16>
    %c3_119 = arith.constant 3 : index
    %c4_120 = arith.constant 4 : index
    %c0_121 = arith.constant 0 : index
    %c0_122 = arith.constant 0 : index
    %301 = vector.load %arg4[%c3_119, %c4_120, %c0_121, %c0_122] : memref<5x5x16x120xbf16, #tpu.memory_space<vmem>>, vector<1x1x16x120xbf16>
    %302 = vector.shape_cast %301 : vector<1x1x16x120xbf16> to vector<16x120xbf16>
    %cst_123 = arith.constant dense<0.000000e+00> : vector<1x120xf32>
    %303 = tpu.matmul %300, %302, %cst_123 {dimension_numbers = #tpu.dot_dimension_numbers<[1], [0], [0], [1], [0, 0, 1, 1], [], []>} : vector<1x16xbf16>, vector<16x120xbf16>, vector<1x120xf32> -> vector<1x120xf32>
    %304 = arith.addf %291, %303 : vector<1x120xf32>
    %305 = vector.extract_strided_slice %43 {offsets = [8, 0, 0], sizes = [1, 1, 16], strides = [1, 1, 1]} : vector<10x10x16xf32> to vector<1x1x16xf32>
    %306 = vector.extract_strided_slice %43 {offsets = [8, 1, 0], sizes = [1, 1, 16], strides = [1, 1, 1]} : vector<10x10x16xf32> to vector<1x1x16xf32>
    %307 = arith.maximumf %305, %306 : vector<1x1x16xf32>
    %308 = vector.extract_strided_slice %43 {offsets = [9, 0, 0], sizes = [1, 1, 16], strides = [1, 1, 1]} : vector<10x10x16xf32> to vector<1x1x16xf32>
    %309 = vector.extract_strided_slice %43 {offsets = [9, 1, 0], sizes = [1, 1, 16], strides = [1, 1, 1]} : vector<10x10x16xf32> to vector<1x1x16xf32>
    %310 = arith.maximumf %308, %309 : vector<1x1x16xf32>
    %311 = arith.maximumf %307, %310 : vector<1x1x16xf32>
    %312 = vector.shape_cast %311 : vector<1x1x16xf32> to vector<1x16xf32>
    %313 = arith.truncf %312 : vector<1x16xf32> to vector<1x16xbf16>
    %c4_124 = arith.constant 4 : index
    %c0_125 = arith.constant 0 : index
    %c0_126 = arith.constant 0 : index
    %c0_127 = arith.constant 0 : index
    %314 = vector.load %arg4[%c4_124, %c0_125, %c0_126, %c0_127] : memref<5x5x16x120xbf16, #tpu.memory_space<vmem>>, vector<1x1x16x120xbf16>
    %315 = vector.shape_cast %314 : vector<1x1x16x120xbf16> to vector<16x120xbf16>
    %cst_128 = arith.constant dense<0.000000e+00> : vector<1x120xf32>
    %316 = tpu.matmul %313, %315, %cst_128 {dimension_numbers = #tpu.dot_dimension_numbers<[1], [0], [0], [1], [0, 0, 1, 1], [], []>} : vector<1x16xbf16>, vector<16x120xbf16>, vector<1x120xf32> -> vector<1x120xf32>
    %317 = arith.addf %304, %316 : vector<1x120xf32>
    %318 = vector.extract_strided_slice %43 {offsets = [8, 2, 0], sizes = [1, 1, 16], strides = [1, 1, 1]} : vector<10x10x16xf32> to vector<1x1x16xf32>
    %319 = vector.extract_strided_slice %43 {offsets = [8, 3, 0], sizes = [1, 1, 16], strides = [1, 1, 1]} : vector<10x10x16xf32> to vector<1x1x16xf32>
    %320 = arith.maximumf %318, %319 : vector<1x1x16xf32>
    %321 = vector.extract_strided_slice %43 {offsets = [9, 2, 0], sizes = [1, 1, 16], strides = [1, 1, 1]} : vector<10x10x16xf32> to vector<1x1x16xf32>
    %322 = vector.extract_strided_slice %43 {offsets = [9, 3, 0], sizes = [1, 1, 16], strides = [1, 1, 1]} : vector<10x10x16xf32> to vector<1x1x16xf32>
    %323 = arith.maximumf %321, %322 : vector<1x1x16xf32>
    %324 = arith.maximumf %320, %323 : vector<1x1x16xf32>
    %325 = vector.shape_cast %324 : vector<1x1x16xf32> to vector<1x16xf32>
    %326 = arith.truncf %325 : vector<1x16xf32> to vector<1x16xbf16>
    %c4_129 = arith.constant 4 : index
    %c1_130 = arith.constant 1 : index
    %c0_131 = arith.constant 0 : index
    %c0_132 = arith.constant 0 : index
    %327 = vector.load %arg4[%c4_129, %c1_130, %c0_131, %c0_132] : memref<5x5x16x120xbf16, #tpu.memory_space<vmem>>, vector<1x1x16x120xbf16>
    %328 = vector.shape_cast %327 : vector<1x1x16x120xbf16> to vector<16x120xbf16>
    %cst_133 = arith.constant dense<0.000000e+00> : vector<1x120xf32>
    %329 = tpu.matmul %326, %328, %cst_133 {dimension_numbers = #tpu.dot_dimension_numbers<[1], [0], [0], [1], [0, 0, 1, 1], [], []>} : vector<1x16xbf16>, vector<16x120xbf16>, vector<1x120xf32> -> vector<1x120xf32>
    %330 = arith.addf %317, %329 : vector<1x120xf32>
    %331 = vector.extract_strided_slice %43 {offsets = [8, 4, 0], sizes = [1, 1, 16], strides = [1, 1, 1]} : vector<10x10x16xf32> to vector<1x1x16xf32>
    %332 = vector.extract_strided_slice %43 {offsets = [8, 5, 0], sizes = [1, 1, 16], strides = [1, 1, 1]} : vector<10x10x16xf32> to vector<1x1x16xf32>
    %333 = arith.maximumf %331, %332 : vector<1x1x16xf32>
    %334 = vector.extract_strided_slice %43 {offsets = [9, 4, 0], sizes = [1, 1, 16], strides = [1, 1, 1]} : vector<10x10x16xf32> to vector<1x1x16xf32>
    %335 = vector.extract_strided_slice %43 {offsets = [9, 5, 0], sizes = [1, 1, 16], strides = [1, 1, 1]} : vector<10x10x16xf32> to vector<1x1x16xf32>
    %336 = arith.maximumf %334, %335 : vector<1x1x16xf32>
    %337 = arith.maximumf %333, %336 : vector<1x1x16xf32>
    %338 = vector.shape_cast %337 : vector<1x1x16xf32> to vector<1x16xf32>
    %339 = arith.truncf %338 : vector<1x16xf32> to vector<1x16xbf16>
    %c4_134 = arith.constant 4 : index
    %c2_135 = arith.constant 2 : index
    %c0_136 = arith.constant 0 : index
    %c0_137 = arith.constant 0 : index
    %340 = vector.load %arg4[%c4_134, %c2_135, %c0_136, %c0_137] : memref<5x5x16x120xbf16, #tpu.memory_space<vmem>>, vector<1x1x16x120xbf16>
    %341 = vector.shape_cast %340 : vector<1x1x16x120xbf16> to vector<16x120xbf16>
    %cst_138 = arith.constant dense<0.000000e+00> : vector<1x120xf32>
    %342 = tpu.matmul %339, %341, %cst_138 {dimension_numbers = #tpu.dot_dimension_numbers<[1], [0], [0], [1], [0, 0, 1, 1], [], []>} : vector<1x16xbf16>, vector<16x120xbf16>, vector<1x120xf32> -> vector<1x120xf32>
    %343 = arith.addf %330, %342 : vector<1x120xf32>
    %344 = vector.extract_strided_slice %43 {offsets = [8, 6, 0], sizes = [1, 1, 16], strides = [1, 1, 1]} : vector<10x10x16xf32> to vector<1x1x16xf32>
    %345 = vector.extract_strided_slice %43 {offsets = [8, 7, 0], sizes = [1, 1, 16], strides = [1, 1, 1]} : vector<10x10x16xf32> to vector<1x1x16xf32>
    %346 = arith.maximumf %344, %345 : vector<1x1x16xf32>
    %347 = vector.extract_strided_slice %43 {offsets = [9, 6, 0], sizes = [1, 1, 16], strides = [1, 1, 1]} : vector<10x10x16xf32> to vector<1x1x16xf32>
    %348 = vector.extract_strided_slice %43 {offsets = [9, 7, 0], sizes = [1, 1, 16], strides = [1, 1, 1]} : vector<10x10x16xf32> to vector<1x1x16xf32>
    %349 = arith.maximumf %347, %348 : vector<1x1x16xf32>
    %350 = arith.maximumf %346, %349 : vector<1x1x16xf32>
    %351 = vector.shape_cast %350 : vector<1x1x16xf32> to vector<1x16xf32>
    %352 = arith.truncf %351 : vector<1x16xf32> to vector<1x16xbf16>
    %c4_139 = arith.constant 4 : index
    %c3_140 = arith.constant 3 : index
    %c0_141 = arith.constant 0 : index
    %c0_142 = arith.constant 0 : index
    %353 = vector.load %arg4[%c4_139, %c3_140, %c0_141, %c0_142] : memref<5x5x16x120xbf16, #tpu.memory_space<vmem>>, vector<1x1x16x120xbf16>
    %354 = vector.shape_cast %353 : vector<1x1x16x120xbf16> to vector<16x120xbf16>
    %cst_143 = arith.constant dense<0.000000e+00> : vector<1x120xf32>
    %355 = tpu.matmul %352, %354, %cst_143 {dimension_numbers = #tpu.dot_dimension_numbers<[1], [0], [0], [1], [0, 0, 1, 1], [], []>} : vector<1x16xbf16>, vector<16x120xbf16>, vector<1x120xf32> -> vector<1x120xf32>
    %356 = arith.addf %343, %355 : vector<1x120xf32>
    %357 = vector.extract_strided_slice %43 {offsets = [8, 8, 0], sizes = [1, 1, 16], strides = [1, 1, 1]} : vector<10x10x16xf32> to vector<1x1x16xf32>
    %358 = vector.extract_strided_slice %43 {offsets = [8, 9, 0], sizes = [1, 1, 16], strides = [1, 1, 1]} : vector<10x10x16xf32> to vector<1x1x16xf32>
    %359 = arith.maximumf %357, %358 : vector<1x1x16xf32>
    %360 = vector.extract_strided_slice %43 {offsets = [9, 8, 0], sizes = [1, 1, 16], strides = [1, 1, 1]} : vector<10x10x16xf32> to vector<1x1x16xf32>
    %361 = vector.extract_strided_slice %43 {offsets = [9, 9, 0], sizes = [1, 1, 16], strides = [1, 1, 1]} : vector<10x10x16xf32> to vector<1x1x16xf32>
    %362 = arith.maximumf %360, %361 : vector<1x1x16xf32>
    %363 = arith.maximumf %359, %362 : vector<1x1x16xf32>
    %364 = vector.shape_cast %363 : vector<1x1x16xf32> to vector<1x16xf32>
    %365 = arith.truncf %364 : vector<1x16xf32> to vector<1x16xbf16>
    %c4_144 = arith.constant 4 : index
    %c4_145 = arith.constant 4 : index
    %c0_146 = arith.constant 0 : index
    %c0_147 = arith.constant 0 : index
    %366 = vector.load %arg4[%c4_144, %c4_145, %c0_146, %c0_147] : memref<5x5x16x120xbf16, #tpu.memory_space<vmem>>, vector<1x1x16x120xbf16>
    %367 = vector.shape_cast %366 : vector<1x1x16x120xbf16> to vector<16x120xbf16>
    %cst_148 = arith.constant dense<0.000000e+00> : vector<1x120xf32>
    %368 = tpu.matmul %365, %367, %cst_148 {dimension_numbers = #tpu.dot_dimension_numbers<[1], [0], [0], [1], [0, 0, 1, 1], [], []>} : vector<1x16xbf16>, vector<16x120xbf16>, vector<1x120xf32> -> vector<1x120xf32>
    %369 = arith.addf %356, %368 : vector<1x120xf32>
    %c0_149 = arith.constant 0 : index
    %c0_150 = arith.constant 0 : index
    %370 = vector.load %arg5[%c0_149, %c0_150] : memref<1x120xf32, #tpu.memory_space<vmem>>, vector<1x120xf32>
    %371 = arith.addf %369, %370 : vector<1x120xf32>
    %cst_151 = arith.constant 0.000000e+00 : f32
    %372 = vector.broadcast %cst_151 : f32 to vector<1x120xf32>
    %373 = arith.maximumf %371, %372 : vector<1x120xf32>
    %374 = arith.truncf %373 : vector<1x120xf32> to vector<1x120xbf16>
    %c0_152 = arith.constant 0 : index
    %c0_153 = arith.constant 0 : index
    %375 = vector.load %arg6[%c0_152, %c0_153] : memref<120x84xbf16, #tpu.memory_space<vmem>>, vector<120x84xbf16>
    %cst_154 = arith.constant dense<0.000000e+00> : vector<1x84xf32>
    %376 = tpu.matmul %374, %375, %cst_154 {dimension_numbers = #tpu.dot_dimension_numbers<[1], [0], [0], [1], [0, 0, 1, 1], [], []>} : vector<1x120xbf16>, vector<120x84xbf16>, vector<1x84xf32> -> vector<1x84xf32>
    %c0_155 = arith.constant 0 : index
    %c0_156 = arith.constant 0 : index
    %377 = vector.load %arg7[%c0_155, %c0_156] : memref<1x84xf32, #tpu.memory_space<vmem>>, vector<1x84xf32>
    %378 = arith.addf %376, %377 : vector<1x84xf32>
    %cst_157 = arith.constant 0.000000e+00 : f32
    %379 = vector.broadcast %cst_157 : f32 to vector<1x84xf32>
    %380 = arith.maximumf %378, %379 : vector<1x84xf32>
    %c0_158 = arith.constant 0 : index
    %c0_159 = arith.constant 0 : index
    %c0_160 = arith.constant 0 : index
    %381 = vector.load %arg8[%c0_158, %c0_159, %c0_160] : memref<1x1x84xf32, #tpu.memory_space<vmem>>, vector<1x1x84xf32>
    %382 = vector.shape_cast %381 : vector<1x1x84xf32> to vector<1x84xf32>
    %383 = vector.shape_cast %380 : vector<1x84xf32> to vector<1x1x84xf32>
    tpu.vector_store %arg8[%c0_158, %c0_159, %c0_160], %383 {strides = array<i32>} : memref<1x1x84xf32, #tpu.memory_space<vmem>>, vector<1x1x84xf32>,
    return
  }
  func.func @transform_0(%arg0: i32) -> (i32, i32, i32, i32) {
    %c0_i32 = arith.constant 0 : i32
    %c0_i32_0 = arith.constant 0 : i32
    %c0_i32_1 = arith.constant 0 : i32
    %c0_i32_2 = arith.constant 0 : i32
    return %arg0, %c0_i32, %c0_i32_0, %c0_i32_1 : i32, i32, i32, i32
  }
  func.func @transform_1(%arg0: i32) -> (i32, i32, i32) {
    %c0_i32 = arith.constant 0 : i32
    %c0_i32_0 = arith.constant 0 : i32
    %c0_i32_1 = arith.constant 0 : i32
    %c0_i32_2 = arith.constant 0 : i32
    return %c0_i32, %c0_i32_0, %c0_i32_1 : i32, i32, i32
  }
  func.func @transform_2(%arg0: i32) -> (i32, i32, i32) {
    %c0_i32 = arith.constant 0 : i32
    %c0_i32_0 = arith.constant 0 : i32
    %c0_i32_1 = arith.constant 0 : i32
    %c0_i32_2 = arith.constant 0 : i32
    return %c0_i32, %c0_i32_0, %c0_i32_1 : i32, i32, i32
  }
  func.func @transform_3(%arg0: i32) -> (i32, i32, i32, i32) {
    %c0_i32 = arith.constant 0 : i32
    %c0_i32_0 = arith.constant 0 : i32
    %c0_i32_1 = arith.constant 0 : i32
    %c0_i32_2 = arith.constant 0 : i32
    %c0_i32_3 = arith.constant 0 : i32
    return %c0_i32, %c0_i32_0, %c0_i32_1, %c0_i32_2 : i32, i32, i32, i32
  }
  func.func @transform_4(%arg0: i32) -> (i32, i32) {
    %c0_i32 = arith.constant 0 : i32
    %c0_i32_0 = arith.constant 0 : i32
    %c0_i32_1 = arith.constant 0 : i32
    return %c0_i32, %c0_i32_0 : i32, i32
  }
  func.func @transform_5(%arg0: i32) -> (i32, i32) {
    %c0_i32 = arith.constant 0 : i32
    %c0_i32_0 = arith.constant 0 : i32
    %c0_i32_1 = arith.constant 0 : i32
    return %c0_i32, %c0_i32_0 : i32, i32
  }
  func.func @transform_6(%arg0: i32) -> (i32, i32) {
    %c0_i32 = arith.constant 0 : i32
    %c0_i32_0 = arith.constant 0 : i32
    %c0_i32_1 = arith.constant 0 : i32
    return %c0_i32, %c0_i32_0 : i32, i32
  }
  func.func @transform_7(%arg0: i32) -> (i32, i32, i32) {
    %c0_i32 = arith.constant 0 : i32
    %c0_i32_0 = arith.constant 0 : i32
    %c0_i32_1 = arith.constant 0 : i32
    return %arg0, %c0_i32, %c0_i32_0 : i32, i32, i32
  }
}

</mosaic_0001>

<llo_original>
// kernel: lenet_detect_net_forward.1
$region0: #{lenet_detect_net_forward.1}
  #allocation0 [shape = 'u32[]', space=smem, size = 0x4, offset = 0x4, fixed_abs, tag = 'smem constant byte address 0x4 - core index']
  #allocation1 [shape = 'u32[144,128]{1,0:T(1,128)}', space=vmem, size = 0x12000, scoped, tag = 'internal scratch']
  %s0 = inlined_call_operand.vmem [shape: f32[2,14,10,30], index: 0, kind: input, shape index: {}]
  %s1 = inlined_call_operand.vmem [shape: bf16[5,30,16], index: 1, kind: input, shape index: {}]
  %s2 = inlined_call_operand.vmem [shape: f32[1,1,16], index: 2, kind: input, shape index: {}]
  %s3 = inlined_call_operand.vmem [shape: bf16[5,5,16,120], index: 3, kind: input, shape index: {}]
  %s4 = inlined_call_operand.vmem [shape: f32[1,120], index: 4, kind: input, shape index: {}]
  %s5 = inlined_call_operand.vmem [shape: bf16[120,84], index: 5, kind: input, shape index: {}]
  %s6 = inlined_call_operand.vmem [shape: f32[1,84], index: 6, kind: input, shape index: {}]
  %s7 = inlined_call_operand.hbm [shape: f32[2,1,84], index: 7, kind: output, shape index: {}]
  %s8 = sld [smem:[#allocation0]]
  $region61: #{lenet_detect_net_forward.1} parent=0
    _
  %s10 = ssub.s32 1, %s8
  %s11 = scalar_select 0, %s10, %s8
  $region1: #{lenet_detect_net_forward.1} parent=0
    #allocation2 [shape = 'u8[1024]{0}', space=vmem, size = 0x400, scoped, tag = 'output window, operand 0']
    #allocation3 [shape = 's32[2]{0}', space=sflag, size = 0x8, scoped, tag = 'scoped memory for lenet_detect_net_forward.1']
    %12 = vsyncpa [#allocation3], 0
    %s13 = scalar_lea.sflag [#allocation3], 1
    %14 = vsyncpa %s13, 0
    loop: start=0, step=1, limit=4
    $region2: #{lenet_detect_net_forward.1} parent=1 // loop_pre_header
      _
    $region3: #{lenet_detect_net_forward.1} parent=1 // loop_header
      %s16 = sphi 0, %s20
      %p17 = scmp.ge.s32.totalorder %s16, 4
      %s26 = sphi 0, %s28
      %s29 = sphi 0, %s26
      %s30 = sphi 0, %s29
      %s46 = sphi 0, %s30
      %s50 = sphi 0, %s50
      %s52 = sphi 0, %s50
      %s53 = sphi 0, %s52
      %s67 = sphi 0, %s53
      %s71 = sphi 0, %s71
      %s73 = sphi 0, %s71
      %s74 = sphi 0, %s73
      %s88 = sphi 0, %s74
      %s92 = sphi 0, %s92
      %s94 = sphi 0, %s92
      %s95 = sphi 0, %s94
      %s109 = sphi 0, %s95
      %s113 = sphi 0, %s113
      %s115 = sphi 0, %s113
      %s116 = sphi 0, %s115
      %s130 = sphi 0, %s116
      %s134 = sphi 0, %s134
      %s136 = sphi 0, %s134
      %s137 = sphi 0, %s136
      %s151 = sphi 0, %s137
      %s155 = sphi 0, %s155
      %s157 = sphi 0, %s155
      %s158 = sphi 0, %s157
      %s172 = sphi 0, %s158
      %s178 = sphi 0, %s180
      %s181 = sphi 0, %s178
      %s182 = sphi 0, %s181
      %s198 = sphi 0, %s182
    $region4: #{lenet_detect_net_forward.1} parent=1 // loop_header_branch
      %19 = sbr.rel (%p17) target = $region8
    $region5: #{lenet_detect_net_forward.1} parent=1 // loop_body
      %s21 = ssub.s32 %s16, 1
      %s22 = ssub.s32 %s16, 2
      %s23 = sadd.s32 %s16, 1
      %s24 = ssub.s32 %s16, %s23
      %p25 = scmp.eq.s32.totalorder %s24, 0
      %s27 = sadd.s32 %s26, 1
      %s28 = scalar_select %p25, %s26, %s27
      %p31 = pneg %p25
      %p32 = scmp.eq.s32.totalorder %s16, 1
      %p33 = por %p31, %p32
      %p34 = scmp.ne.s32.totalorder %s26, %s29
      %p35 = scmp.eq.s32.totalorder %s16, 0
      %p36 = por %p34, %p35
      %p37 = scmp.ne.s32.totalorder %s26, %s29
      %p38 = scmp.eq.s32.totalorder %s21, 1
      %p39 = por %p37, %p38
      %p40 = scmp.ne.s32.totalorder %s29, %s30
      %p41 = scmp.eq.s32.totalorder %s21, 0
      %p42 = por %p40, %p41
      %p43 = scmp.ne.s32.totalorder %s29, %s30
      %p44 = scmp.eq.s32.totalorder %s22, 1
      %p45 = por %p43, %p44
      %p47 = scmp.ne.s32.totalorder %s30, %s46
      %p48 = scmp.eq.s32.totalorder %s22, 0
      %p49 = por %p47, %p48
      %s51 = sadd.s32 %s50, 1
      %p54 = scmp.eq.s32.totalorder %s16, 1
      %p55 = scmp.ne.s32.totalorder %s50, %s52
      %p56 = scmp.eq.s32.totalorder %s16, 0
      %p57 = por %p55, %p56
      %p58 = scmp.ne.s32.totalorder %s50, %s52
      %p59 = scmp.eq.s32.totalorder %s21, 1
      %p60 = por %p58, %p59
      %p61 = scmp.ne.s32.totalorder %s52, %s53
      %p62 = scmp.eq.s32.totalorder %s21, 0
      %p63 = por %p61, %p62
      %p64 = scmp.ne.s32.totalorder %s52, %s53
      %p65 = scmp.eq.s32.totalorder %s22, 1
      %p66 = por %p64, %p65
      %p68 = scmp.ne.s32.totalorder %s53, %s67
      %p69 = scmp.eq.s32.totalorder %s22, 0
      %p70 = por %p68, %p69
      %s72 = sadd.s32 %s71, 1
      %p75 = scmp.eq.s32.totalorder %s16, 1
      %p76 = scmp.ne.s32.totalorder %s71, %s73
      %p77 = scmp.eq.s32.totalorder %s16, 0
      %p78 = por %p76, %p77
      %p79 = scmp.ne.s32.totalorder %s71, %s73
      %p80 = scmp.eq.s32.totalorder %s21, 1
      %p81 = por %p79, %p80
      %p82 = scmp.ne.s32.totalorder %s73, %s74
      %p83 = scmp.eq.s32.totalorder %s21, 0
      %p84 = por %p82, %p83
      %p85 = scmp.ne.s32.totalorder %s73, %s74
      %p86 = scmp.eq.s32.totalorder %s22, 1
      %p87 = por %p85, %p86
      %p89 = scmp.ne.s32.totalorder %s74, %s88
      %p90 = scmp.eq.s32.totalorder %s22, 0
      %p91 = por %p89, %p90
      %s93 = sadd.s32 %s92, 1
      %p96 = scmp.eq.s32.totalorder %s16, 1
      %p97 = scmp.ne.s32.totalorder %s92, %s94
      %p98 = scmp.eq.s32.totalorder %s16, 0
      %p99 = por %p97, %p98
      %p100 = scmp.ne.s32.totalorder %s92, %s94
      %p101 = scmp.eq.s32.totalorder %s21, 1
      %p102 = por %p100, %p101
      %p103 = scmp.ne.s32.totalorder %s94, %s95
      %p104 = scmp.eq.s32.totalorder %s21, 0
      %p105 = por %p103, %p104
      %p106 = scmp.ne.s32.totalorder %s94, %s95
      %p107 = scmp.eq.s32.totalorder %s22, 1
      %p108 = por %p106, %p107
      %p110 = scmp.ne.s32.totalorder %s95, %s109
      %p111 = scmp.eq.s32.totalorder %s22, 0
      %p112 = por %p110, %p111
      %s114 = sadd.s32 %s113, 1
      %p117 = scmp.eq.s32.totalorder %s16, 1
      %p118 = scmp.ne.s32.totalorder %s113, %s115
      %p119 = scmp.eq.s32.totalorder %s16, 0
      %p120 = por %p118, %p119
      %p121 = scmp.ne.s32.totalorder %s113, %s115
      %p122 = scmp.eq.s32.totalorder %s21, 1
      %p123 = por %p121, %p122
      %p124 = scmp.ne.s32.totalorder %s115, %s116
      %p125 = scmp.eq.s32.totalorder %s21, 0
      %p126 = por %p124, %p125
      %p127 = scmp.ne.s32.totalorder %s115, %s116
      %p128 = scmp.eq.s32.totalorder %s22, 1
      %p129 = por %p127, %p128
      %p131 = scmp.ne.s32.totalorder %s116, %s130
      %p132 = scmp.eq.s32.totalorder %s22, 0
      %p133 = por %p131, %p132
      %s135 = sadd.s32 %s134, 1
      %p138 = scmp.eq.s32.totalorder %s16, 1
      %p139 = scmp.ne.s32.totalorder %s134, %s136
      %p140 = scmp.eq.s32.totalorder %s16, 0
      %p141 = por %p139, %p140
      %p142 = scmp.ne.s32.totalorder %s134, %s136
      %p143 = scmp.eq.s32.totalorder %s21, 1
      %p144 = por %p142, %p143
      %p145 = scmp.ne.s32.totalorder %s136, %s137
      %p146 = scmp.eq.s32.totalorder %s21, 0
      %p147 = por %p145, %p146
      %p148 = scmp.ne.s32.totalorder %s136, %s137
      %p149 = scmp.eq.s32.totalorder %s22, 1
      %p150 = por %p148, %p149
      %p152 = scmp.ne.s32.totalorder %s137, %s151
      %p153 = scmp.eq.s32.totalorder %s22, 0
      %p154 = por %p152, %p153
      %s156 = sadd.s32 %s155, 1
      %p159 = scmp.eq.s32.totalorder %s16, 1
      %p160 = scmp.ne.s32.totalorder %s155, %s157
      %p161 = scmp.eq.s32.totalorder %s16, 0
      %p162 = por %p160, %p161
      %p163 = scmp.ne.s32.totalorder %s155, %s157
      %p164 = scmp.eq.s32.totalorder %s21, 1
      %p165 = por %p163, %p164
      %p166 = scmp.ne.s32.totalorder %s157, %s158
      %p167 = scmp.eq.s32.totalorder %s21, 0
      %p168 = por %p166, %p167
      %p169 = scmp.ne.s32.totalorder %s157, %s158
      %p170 = scmp.eq.s32.totalorder %s22, 1
      %p171 = por %p169, %p170
      %p173 = scmp.ne.s32.totalorder %s158, %s172
      %p174 = scmp.eq.s32.totalorder %s22, 0
      %p175 = por %p173, %p174
      %s176 = ssub.s32 %s16, %s23
      %p177 = scmp.eq.s32.totalorder %s176, 0
      %s179 = sadd.s32 %s178, 1
      %s180 = scalar_select %p177, %s178, %s179
      %p183 = pneg %p177
      %p184 = scmp.eq.s32.totalorder %s16, 1
      %p185 = por %p183, %p184
      %p186 = scmp.ne.s32.totalorder %s178, %s181
      %p187 = scmp.eq.s32.totalorder %s16, 0
      %p188 = por %p186, %p187
      %p189 = scmp.ne.s32.totalorder %s178, %s181
      %p190 = scmp.eq.s32.totalorder %s21, 1
      %p191 = por %p189, %p190
      %p192 = scmp.ne.s32.totalorder %s181, %s182
      %p193 = scmp.eq.s32.totalorder %s21, 0
      %p194 = por %p192, %p193
      %p195 = scmp.ne.s32.totalorder %s181, %s182
      %p196 = scmp.eq.s32.totalorder %s22, 1
      %p197 = por %p195, %p196
      %p199 = scmp.ne.s32.totalorder %s182, %s198
      %p200 = scmp.eq.s32.totalorder %s22, 0
      %p201 = por %p199, %p200
      %p202 = scmp.le.s32.totalorder 1, %s16
      %p203 = scmp.lt.s32.totalorder %s16, 3
      %p204 = pnand %p202, %p203
      %p205 = pneg %p204
      // Predicated region
      $region9: #{lenet_detect_net_forward.1} parent=5 // pred_check
        _
      $region10: #{lenet_detect_net_forward.1} parent=5 // pred_check_branch
        %207 = sbr.rel (%p204) target = $region12
      $region11: #{lenet_detect_net_forward.1} parent=5 // pred_region
        %s208 = ssub.s32 %s16, 1
        // Predicated region
        $region13: #{lenet_detect_net_forward.1} parent=11 // pred_check
          %p209 = pneg %p63
        $region14: #{lenet_detect_net_forward.1} parent=11 // pred_check_branch
          %211 = sbr.rel (%p209) target = $region16
        $region15: #{lenet_detect_net_forward.1} parent=11 // pred_region
          _
        $region16: #{lenet_detect_net_forward.1} parent=11 // pred_fallthru
          _
        // Predicated region
        $region17: #{lenet_detect_net_forward.1} parent=11 // pred_check
          %p212 = pneg %p84
        $region18: #{lenet_detect_net_forward.1} parent=11 // pred_check_branch
          %214 = sbr.rel (%p212) target = $region20
        $region19: #{lenet_detect_net_forward.1} parent=11 // pred_region
          _
        $region20: #{lenet_detect_net_forward.1} parent=11 // pred_fallthru
          _
        // Predicated region
        $region21: #{lenet_detect_net_forward.1} parent=11 // pred_check
          %p215 = pneg %p105
        $region22: #{lenet_detect_net_forward.1} parent=11 // pred_check_branch
          %217 = sbr.rel (%p215) target = $region24
        $region23: #{lenet_detect_net_forward.1} parent=11 // pred_region
          _
        $region24: #{lenet_detect_net_forward.1} parent=11 // pred_fallthru
          _
        // Predicated region
        $region25: #{lenet_detect_net_forward.1} parent=11 // pred_check
          %p218 = pneg %p126
        $region26: #{lenet_detect_net_forward.1} parent=11 // pred_check_branch
          %220 = sbr.rel (%p218) target = $region28
        $region27: #{lenet_detect_net_forward.1} parent=11 // pred_region
          _
        $region28: #{lenet_detect_net_forward.1} parent=11 // pred_fallthru
          _
        // Predicated region
        $region29: #{lenet_detect_net_forward.1} parent=11 // pred_check
          %p221 = pneg %p147
        $region30: #{lenet_detect_net_forward.1} parent=11 // pred_check_branch
          %223 = sbr.rel (%p221) target = $region32
        $region31: #{lenet_detect_net_forward.1} parent=11 // pred_region
          _
        $region32: #{lenet_detect_net_forward.1} parent=11 // pred_fallthru
          _
        // Predicated region
        $region33: #{lenet_detect_net_forward.1} parent=11 // pred_check
          %p224 = pneg %p168
        $region34: #{lenet_detect_net_forward.1} parent=11 // pred_check_branch
          %226 = sbr.rel (%p224) target = $region36
        $region35: #{lenet_detect_net_forward.1} parent=11 // pred_region
          _
        $region36: #{lenet_detect_net_forward.1} parent=11 // pred_fallthru
          _
      $region12: #{lenet_detect_net_forward.1} parent=5 // pred_fallthru
        _
      %p227 = scmp.lt.s32.totalorder %s16, 2
      // Predicated region
      $region37: #{lenet_detect_net_forward.1} parent=5 // pred_check
        %p228 = pneg %p227
      $region38: #{lenet_detect_net_forward.1} parent=5 // pred_check_branch
        %230 = sbr.rel (%p228) target = $region40
      $region39: #{lenet_detect_net_forward.1} parent=5 // pred_region
        // Predicated region
        $region41: #{lenet_detect_net_forward.1} parent=39 // pred_check
          %p231 = pneg %p36
        $region42: #{lenet_detect_net_forward.1} parent=39 // pred_check_branch
          %233 = sbr.rel (%p231) target = $region44
        $region43: #{lenet_detect_net_forward.1} parent=39 // pred_region
          %p234 = scmp.lt.s32.totalorder %s16, 1
          %s235 = scalar_select %p234, %s16, 1
          %s236 = smul.addr %s235, 28
          %s237 = smul.addr %s236, 8
          %s238 = scalar_lea.vmem %s0, %s237
        $region44: #{lenet_detect_net_forward.1} parent=39 // pred_fallthru
          _
      $region40: #{lenet_detect_net_forward.1} parent=5 // pred_fallthru
        _
      %p239 = scmp.le.s32.totalorder 1, %s16
      %p240 = scmp.lt.s32.totalorder %s16, 3
      %p241 = pnand %p239, %p240
      %p242 = pneg %p241
      // Predicated region
      $region45: #{lenet_detect_net_forward.1} parent=5 // pred_check
        _
      $region46: #{lenet_detect_net_forward.1} parent=5 // pred_check_branch
        %244 = sbr.rel (%p241) target = $region48
      $region47: #{lenet_detect_net_forward.1} parent=5 // pred_region
        %s245 = ssub.s32 %s16, 1
        %p246 = scmp.lt.s32.totalorder %s21, 1
        %s247 = scalar_select %p246, %s21, 1
        %s248 = smul.addr %s247, 28
        %s249 = smul.addr %s248, 8
        %s250 = scalar_lea.vmem %s0, %s249
        %p251 = pneg %p42
        %p252 = pneg %p39
        %p253 = pneg %p63
        %p254 = pneg %p60
        %p255 = pneg %p84
        %p256 = pneg %p81
        %p257 = pneg %p105
        %p258 = pneg %p102
        %p259 = pneg %p126
        %p260 = pneg %p123
        %p261 = pneg %p147
        %p262 = pneg %p144
        %p263 = pneg %p168
        %p264 = pneg %p165
        %p265 = pneg %p194
        %p266 = pneg %p191
        %s267 = sand.u32 %s181, 1
        %s268 = scalar_lea.sflag [#allocation3], %s267
        %s269 = sand.u32 %s181, 1
        %s270 = scalar_lea.vmem [#allocation2], %s269
        %p271 = scmp.lt.s32.totalorder %s21, 1
        %s272 = scalar_select %p271, %s21, 1
        %s273 = smul.addr %s272, 28
        %s274 = smul.addr %s273, 8
        %s275 = scalar_lea.vmem %s0, %s274
        %v277 = vld [vmem:[%s275] sm:$0xff]
        %v278 = vld [vmem:[%s275 + $0x8] sm:$0x3]
        %v279 = vld [vmem:[%s275 + $0x10] sm:$0xff]
        %v280 = vld [vmem:[%s275 + $0x18] sm:$0x3]
        %v281 = vld [vmem:[%s275 + $0x20] sm:$0xff]
        %v282 = vld [vmem:[%s275 + $0x28] sm:$0x3]
        %v283 = vld [vmem:[%s275 + $0x30] sm:$0xff]
        %v284 = vld [vmem:[%s275 + $0x38] sm:$0x3]
        %v285 = vld [vmem:[%s275 + $0x40] sm:$0xff]
        %v286 = vld [vmem:[%s275 + $0x48] sm:$0x3]
        %v287 = vld [vmem:[%s275 + $0x50] sm:$0xff]
        %v288 = vld [vmem:[%s275 + $0x58] sm:$0x3]
        %v289 = vld [vmem:[%s275 + $0x60] sm:$0xff]
        %v290 = vld [vmem:[%s275 + $0x68] sm:$0x3]
        %v291 = vld [vmem:[%s275 + $0x70] sm:$0xff]
        %v292 = vld [vmem:[%s275 + $0x78] sm:$0x3]
        %v293 = vld [vmem:[%s275 + $0x80] sm:$0xff]
        %v294 = vld [vmem:[%s275 + $0x88] sm:$0x3]
        %v295 = vld [vmem:[%s275 + $0x90] sm:$0xff]
        %v296 = vld [vmem:[%s275 + $0x98] sm:$0x3]
        %v297 = vld [vmem:[%s275 + $0xa0] sm:$0xff]
        %v298 = vld [vmem:[%s275 + $0xa8] sm:$0x3]
        %v299 = vld [vmem:[%s275 + $0xb0] sm:$0xff]
        %v300 = vld [vmem:[%s275 + $0xb8] sm:$0x3]
        %v301 = vld [vmem:[%s275 + $0xc0] sm:$0xff]
        %v302 = vld [vmem:[%s275 + $0xc8] sm:$0x3]
        %v303 = vld [vmem:[%s275 + $0xd0] sm:$0xff]
        %v304 = vld [vmem:[%s275 + $0xd8] sm:$0x3]
        %v305 = vpack.c.bf16 %v278, %v277
        %v306 = vpack.c.bf16 %v280, %v279
        %v307 = vpack.c.bf16 %v282, %v281
        %v308 = vpack.c.bf16 %v284, %v283
        %v309 = vpack.c.bf16 %v286, %v285
        %v310 = vpack.c.bf16 %v288, %v287
        %v311 = vpack.c.bf16 %v290, %v289
        %v312 = vpack.c.bf16 %v292, %v291
        %v313 = vpack.c.bf16 %v294, %v293
        %v314 = vpack.c.bf16 %v296, %v295
        %v315 = vpack.c.bf16 %v298, %v297
        %v316 = vpack.c.bf16 %v300, %v299
        %v317 = vpack.c.bf16 %v302, %v301
        %v318 = vpack.c.bf16 %v304, %v303
        %v319 = vld [vmem:[%s1] sm:$0xf]
        %v320 = vld [vmem:[%s1 + $0x4] sm:$0xf]
        %v321 = vld [vmem:[%s1 + $0x8] sm:$0xf]
        %v322 = vld [vmem:[%s1 + $0xc] sm:$0x7]
        %s323 = scalar_lea.vmem %s1, 16
        %v324 = vld [vmem:[%s323] sm:$0xf]
        %v325 = vld [vmem:[%s323 + $0x4] sm:$0xf]
        %v326 = vld [vmem:[%s323 + $0x8] sm:$0xf]
        %v327 = vld [vmem:[%s323 + $0xc] sm:$0x7]
        %v332 = vunpack.c.l.b16 %v324
        %v333 = vunpack.c.l.b16 %v325
        %v334 = vunpack.c.l.b16 %v326
        %v335 = vunpack.c.l.b16 %v327
        %v336 = vpack.c.b16 %v333, %v332
        %v337 = vpack.c.b16 %v335, %v334
        %vm339 = vcmask 244736
        %v341 = vsel %vm339, %v306, 0
        %vm343 = vcmask 1046528
        %v345 = vsel %vm343, %v337, 0
        %347 = vmatprep.subr.bf16.mxu0 0
        %348 = vmatpush1.bf16.msra.mxu0 0
        %349 = vmatprep.subr.bf16.mxu0 0
        %350 = vmatpush1.bf16.msra.mxu0 0
        %351 = vmatprep.subr.bf16.mxu0 0
        %352 = vmatpush1.bf16.msra.mxu0 0
        %353 = vmatprep.subr.bf16.mxu0 0
        %354 = vmatpush1.bf16.msra.mxu0 0
        %355 = vmatprep.subr.bf16.mxu0 0
        %356 = vmatpush1.bf16.msra.mxu0 0
        %357 = vmatprep.subr.bf16.mxu0 0
        %358 = vmatpush1.bf16.msra.mxu0 0
        %359 = vmatprep.subr.bf16.mxu0 0
        %360 = vmatpush1.bf16.msra.mxu0 %v345
        %361 = vmatprep.subr.bf16.mxu0 0
        %362 = vmatpush1.bf16.msra.mxu0 %v336
        %363 = vmatprep.subr.bf16.mxu0 0
        %364 = vmatpush2.bf16.msra.mxu0 0
        %365 = vmatprep.subr.bf16.mxu0 0
        %366 = vmatpush2.bf16.msra.mxu0 0
        %367 = vmatprep.subr.bf16.mxu0 0
        %368 = vmatpush2.bf16.msra.mxu0 0
        %369 = vmatprep.subr.bf16.mxu0 0
        %370 = vmatpush2.bf16.msra.mxu0 0
        %371 = vmatprep.subr.bf16.mxu0 0
        %372 = vmatpush2.bf16.msra.mxu0 0
        %373 = vmatprep.subr.bf16.mxu0 0
        %374 = vmatpush2.bf16.msra.mxu0 0
        %375 = vmatprep.subr.bf16.mxu0 0
        %376 = vmatpush2.bf16.msra.mxu0 0
        %377 = vmatprep.subr.bf16.mxu0 0
        %378 = vmatpush2.bf16.msra.mxu0 0
        %379 = vmatprep.mubr.bf16.mxu0 0
        %380 = vmatmul.mubr.bf16.gmra.mxu0 %v341
        %v381 = vpop.f32.mrf.mxu0
        %v382 = vadd.f32 0.0, %v381
        %v383 = vpop.f32.mrf.mxu0
        %v384 = vpop.f32.mrf.mxu0
        %v385 = vadd.f32 0.0, %v384
        %v386 = vpop.f32.mrf.mxu0
        %387 = vdwg.mxu0
        %v389 = vsel %vm339, %v307, 0
        %391 = vmatprep.subr.bf16.mxu0 0
        %392 = vmatpush1.bf16.msra.mxu0 0
        %393 = vmatprep.subr.bf16.mxu0 0
        %394 = vmatpush1.bf16.msra.mxu0 0
        %395 = vmatprep.subr.bf16.mxu0 0
        %396 = vmatpush1.bf16.msra.mxu0 0
        %397 = vmatprep.subr.bf16.mxu0 0
        %398 = vmatpush1.bf16.msra.mxu0 0
        %399 = vmatprep.subr.bf16.mxu0 0
        %400 = vmatpush1.bf16.msra.mxu0 0
        %401 = vmatprep.subr.bf16.mxu0 0
        %402 = vmatpush1.bf16.msra.mxu0 0
        %403 = vmatprep.subr.bf16.mxu0 0
        %404 = vmatpush1.bf16.msra.mxu0 %v345
        %405 = vmatprep.subr.bf16.mxu0 0
        %406 = vmatpush1.bf16.msra.mxu0 %v336
        %407 = vmatprep.subr.bf16.mxu0 0
        %408 = vmatpush2.bf16.msra.mxu0 0
        %409 = vmatprep.subr.bf16.mxu0 0
        %410 = vmatpush2.bf16.msra.mxu0 0
        %411 = vmatprep.subr.bf16.mxu0 0
        %412 = vmatpush2.bf16.msra.mxu0 0
        %413 = vmatprep.subr.bf16.mxu0 0
        %414 = vmatpush2.bf16.msra.mxu0 0
        %415 = vmatprep.subr.bf16.mxu0 0
        %416 = vmatpush2.bf16.msra.mxu0 0
        %417 = vmatprep.subr.bf16.mxu0 0
        %418 = vmatpush2.bf16.msra.mxu0 0
        %419 = vmatprep.subr.bf16.mxu0 0
        %420 = vmatpush2.bf16.msra.mxu0 0
        %421 = vmatprep.subr.bf16.mxu0 0
        %422 = vmatpush2.bf16.msra.mxu0 0
        %423 = vmatprep.mubr.bf16.mxu0 0
        %424 = vmatmul.mubr.bf16.gmra.mxu0 %v389
        %v425 = vpop.f32.mrf.mxu0
        %v426 = vadd.f32 0.0, %v425
        %v427 = vpop.f32.mrf.mxu0
        %v428 = vpop.f32.mrf.mxu0
        %v429 = vadd.f32 0.0, %v428
        %v430 = vpop.f32.mrf.mxu0
        %431 = vdwg.mxu0
        %v433 = vsel %vm339, %v308, 0
        %435 = vmatprep.subr.bf16.mxu0 0
        %436 = vmatpush1.bf16.msra.mxu0 0
        %437 = vmatprep.subr.bf16.mxu0 0
        %438 = vmatpush1.bf16.msra.mxu0 0
        %439 = vmatprep.subr.bf16.mxu0 0
        %440 = vmatpush1.bf16.msra.mxu0 0
        %441 = vmatprep.subr.bf16.mxu0 0
        %442 = vmatpush1.bf16.msra.mxu0 0
        %443 = vmatprep.subr.bf16.mxu0 0
        %444 = vmatpush1.bf16.msra.mxu0 0
        %445 = vmatprep.subr.bf16.mxu0 0
        %446 = vmatpush1.bf16.msra.mxu0 0
        %447 = vmatprep.subr.bf16.mxu0 0
        %448 = vmatpush1.bf16.msra.mxu0 %v345
        %449 = vmatprep.subr.bf16.mxu0 0
        %450 = vmatpush1.bf16.msra.mxu0 %v336
        %451 = vmatprep.subr.bf16.mxu0 0
        %452 = vmatpush2.bf16.msra.mxu0 0
        %453 = vmatprep.subr.bf16.mxu0 0
        %454 = vmatpush2.bf16.msra.mxu0 0
        %455 = vmatprep.subr.bf16.mxu0 0
        %456 = vmatpush2.bf16.msra.mxu0 0
        %457 = vmatprep.subr.bf16.mxu0 0
        %458 = vmatpush2.bf16.msra.mxu0 0
        %459 = vmatprep.subr.bf16.mxu0 0
        %460 = vmatpush2.bf16.msra.mxu0 0
        %461 = vmatprep.subr.bf16.mxu0 0
        %462 = vmatpush2.bf16.msra.mxu0 0
        %463 = vmatprep.subr.bf16.mxu0 0
        %464 = vmatpush2.bf16.msra.mxu0 0
        %465 = vmatprep.subr.bf16.mxu0 0
        %466 = vmatpush2.bf16.msra.mxu0 0
        %467 = vmatprep.mubr.bf16.mxu0 0
        %468 = vmatmul.mubr.bf16.gmra.mxu0 %v433
        %v469 = vpop.f32.mrf.mxu0
        %v470 = vadd.f32 0.0, %v469
        %v471 = vpop.f32.mrf.mxu0
        %v472 = vpop.f32.mrf.mxu0
        %v473 = vadd.f32 0.0, %v472
        %v474 = vpop.f32.mrf.mxu0
        %475 = vdwg.mxu0
        %v477 = vsel %vm339, %v309, 0
        %479 = vmatprep.subr.bf16.mxu0 0
        %480 = vmatpush1.bf16.msra.mxu0 0
        %481 = vmatprep.subr.bf16.mxu0 0
        %482 = vmatpush1.bf16.msra.mxu0 0
        %483 = vmatprep.subr.bf16.mxu0 0
        %484 = vmatpush1.bf16.msra.mxu0 0
        %485 = vmatprep.subr.bf16.mxu0 0
        %486 = vmatpush1.bf16.msra.mxu0 0
        %487 = vmatprep.subr.bf16.mxu0 0
        %488 = vmatpush1.bf16.msra.mxu0 0
        %489 = vmatprep.subr.bf16.mxu0 0
        %490 = vmatpush1.bf16.msra.mxu0 0
        %491 = vmatprep.subr.bf16.mxu0 0
        %492 = vmatpush1.bf16.msra.mxu0 %v345
        %493 = vmatprep.subr.bf16.mxu0 0
        %494 = vmatpush1.bf16.msra.mxu0 %v336
        %495 = vmatprep.subr.bf16.mxu0 0
        %496 = vmatpush2.bf16.msra.mxu0 0
        %497 = vmatprep.subr.bf16.mxu0 0
        %498 = vmatpush2.bf16.msra.mxu0 0
        %499 = vmatprep.subr.bf16.mxu0 0
        %500 = vmatpush2.bf16.msra.mxu0 0
        %501 = vmatprep.subr.bf16.mxu0 0
        %502 = vmatpush2.bf16.msra.mxu0 0
        %503 = vmatprep.subr.bf16.mxu0 0
        %504 = vmatpush2.bf16.msra.mxu0 0
        %505 = vmatprep.subr.bf16.mxu0 0
        %506 = vmatpush2.bf16.msra.mxu0 0
        %507 = vmatprep.subr.bf16.mxu0 0
        %508 = vmatpush2.bf16.msra.mxu0 0
        %509 = vmatprep.subr.bf16.mxu0 0
        %510 = vmatpush2.bf16.msra.mxu0 0
        %511 = vmatprep.mubr.bf16.mxu0 0
        %512 = vmatmul.mubr.bf16.gmra.mxu0 %v477
        %v513 = vpop.f32.mrf.mxu0
        %v514 = vadd.f32 0.0, %v513
        %v515 = vpop.f32.mrf.mxu0
        %v516 = vpop.f32.mrf.mxu0
        %v517 = vadd.f32 0.0, %v516
        %v518 = vpop.f32.mrf.mxu0
        %519 = vdwg.mxu0
        %v521 = vsel %vm339, %v310, 0
        %523 = vmatprep.subr.bf16.mxu0 0
        %524 = vmatpush1.bf16.msra.mxu0 0
        %525 = vmatprep.subr.bf16.mxu0 0
        %526 = vmatpush1.bf16.msra.mxu0 0
        %527 = vmatprep.subr.bf16.mxu0 0
        %528 = vmatpush1.bf16.msra.mxu0 0
        %529 = vmatprep.subr.bf16.mxu0 0
        %530 = vmatpush1.bf16.msra.mxu0 0
        %531 = vmatprep.subr.bf16.mxu0 0
        %532 = vmatpush1.bf16.msra.mxu0 0
        %533 = vmatprep.subr.bf16.mxu0 0
        %534 = vmatpush1.bf16.msra.mxu0 0
        %535 = vmatprep.subr.bf16.mxu0 0
        %536 = vmatpush1.bf16.msra.mxu0 %v345
        %537 = vmatprep.subr.bf16.mxu0 0
        %538 = vmatpush1.bf16.msra.mxu0 %v336
        %539 = vmatprep.subr.bf16.mxu0 0
        %540 = vmatpush2.bf16.msra.mxu0 0
        %541 = vmatprep.subr.bf16.mxu0 0
        %542 = vmatpush2.bf16.msra.mxu0 0
        %543 = vmatprep.subr.bf16.mxu0 0
        %544 = vmatpush2.bf16.msra.mxu0 0
        %545 = vmatprep.subr.bf16.mxu0 0
        %546 = vmatpush2.bf16.msra.mxu0 0
        %547 = vmatprep.subr.bf16.mxu0 0
        %548 = vmatpush2.bf16.msra.mxu0 0
        %549 = vmatprep.subr.bf16.mxu0 0
        %550 = vmatpush2.bf16.msra.mxu0 0
        %551 = vmatprep.subr.bf16.mxu0 0
        %552 = vmatpush2.bf16.msra.mxu0 0
        %553 = vmatprep.subr.bf16.mxu0 0
        %554 = vmatpush2.bf16.msra.mxu0 0
        %555 = vmatprep.mubr.bf16.mxu0 0
        %556 = vmatmul.mubr.bf16.gmra.mxu0 %v521
        %v557 = vpop.f32.mrf.mxu0
        %v558 = vadd.f32 0.0, %v557
        %v559 = vpop.f32.mrf.mxu0
        %v560 = vpop.f32.mrf.mxu0
        %v561 = vadd.f32 0.0, %v560
        %v562 = vpop.f32.mrf.mxu0
        %563 = vdwg.mxu0
        %v565 = vsel %vm339, %v311, 0
        %567 = vmatprep.subr.bf16.mxu0 0
        %568 = vmatpush1.bf16.msra.mxu0 0
        %569 = vmatprep.subr.bf16.mxu0 0
        %570 = vmatpush1.bf16.msra.mxu0 0
        %571 = vmatprep.subr.bf16.mxu0 0
        %572 = vmatpush1.bf16.msra.mxu0 0
        %573 = vmatprep.subr.bf16.mxu0 0
        %574 = vmatpush1.bf16.msra.mxu0 0
        %575 = vmatprep.subr.bf16.mxu0 0
        %576 = vmatpush1.bf16.msra.mxu0 0
        %577 = vmatprep.subr.bf16.mxu0 0
        %578 = vmatpush1.bf16.msra.mxu0 0
        %579 = vmatprep.subr.bf16.mxu0 0
        %580 = vmatpush1.bf16.msra.mxu0 %v345
        %581 = vmatprep.subr.bf16.mxu0 0
        %582 = vmatpush1.bf16.msra.mxu0 %v336
        %583 = vmatprep.subr.bf16.mxu0 0
        %584 = vmatpush2.bf16.msra.mxu0 0
        %585 = vmatprep.subr.bf16.mxu0 0
        %586 = vmatpush2.bf16.msra.mxu0 0
        %587 = vmatprep.subr.bf16.mxu0 0
        %588 = vmatpush2.bf16.msra.mxu0 0
        %589 = vmatprep.subr.bf16.mxu0 0
        %590 = vmatpush2.bf16.msra.mxu0 0
        %591 = vmatprep.subr.bf16.mxu0 0
        %592 = vmatpush2.bf16.msra.mxu0 0
        %593 = vmatprep.subr.bf16.mxu0 0
        %594 = vmatpush2.bf16.msra.mxu0 0
        %595 = vmatprep.subr.bf16.mxu0 0
        %596 = vmatpush2.bf16.msra.mxu0 0
        %597 = vmatprep.subr.bf16.mxu0 0
        %598 = vmatpush2.bf16.msra.mxu0 0
        %599 = vmatprep.mubr.bf16.mxu0 0
        %600 = vmatmul.mubr.bf16.gmra.mxu0 %v565
        %v601 = vpop.f32.mrf.mxu0
        %v602 = vadd.f32 0.0, %v601
        %v603 = vpop.f32.mrf.mxu0
        %v604 = vpop.f32.mrf.mxu0
        %v605 = vadd.f32 0.0, %v604
        %v606 = vpop.f32.mrf.mxu0
        %607 = vdwg.mxu0
        %v609 = vsel %vm339, %v312, 0
        %611 = vmatprep.subr.bf16.mxu0 0
        %612 = vmatpush1.bf16.msra.mxu0 0
        %613 = vmatprep.subr.bf16.mxu0 0
        %614 = vmatpush1.bf16.msra.mxu0 0
        %615 = vmatprep.subr.bf16.mxu0 0
        %616 = vmatpush1.bf16.msra.mxu0 0
        %617 = vmatprep.subr.bf16.mxu0 0
        %618 = vmatpush1.bf16.msra.mxu0 0
        %619 = vmatprep.subr.bf16.mxu0 0
        %620 = vmatpush1.bf16.msra.mxu0 0
        %621 = vmatprep.subr.bf16.mxu0 0
        %622 = vmatpush1.bf16.msra.mxu0 0
        %623 = vmatprep.subr.bf16.mxu0 0
        %624 = vmatpush1.bf16.msra.mxu0 %v345
        %625 = vmatprep.subr.bf16.mxu0 0
        %626 = vmatpush1.bf16.msra.mxu0 %v336
        %627 = vmatprep.subr.bf16.mxu0 0
        %628 = vmatpush2.bf16.msra.mxu0 0
        %629 = vmatprep.subr.bf16.mxu0 0
        %630 = vmatpush2.bf16.msra.mxu0 0
        %631 = vmatprep.subr.bf16.mxu0 0
        %632 = vmatpush2.bf16.msra.mxu0 0
        %633 = vmatprep.subr.bf16.mxu0 0
        %634 = vmatpush2.bf16.msra.mxu0 0
        %635 = vmatprep.subr.bf16.mxu0 0
        %636 = vmatpush2.bf16.msra.mxu0 0
        %637 = vmatprep.subr.bf16.mxu0 0
        %638 = vmatpush2.bf16.msra.mxu0 0
        %639 = vmatprep.subr.bf16.mxu0 0
        %640 = vmatpush2.bf16.msra.mxu0 0
        %641 = vmatprep.subr.bf16.mxu0 0
        %642 = vmatpush2.bf16.msra.mxu0 0
        %643 = vmatprep.mubr.bf16.mxu0 0
        %644 = vmatmul.mubr.bf16.gmra.mxu0 %v609
        %v645 = vpop.f32.mrf.mxu0
        %v646 = vadd.f32 0.0, %v645
        %v647 = vpop.f32.mrf.mxu0
        %v648 = vpop.f32.mrf.mxu0
        %v649 = vadd.f32 0.0, %v648
        %v650 = vpop.f32.mrf.mxu0
        %651 = vdwg.mxu0
        %v653 = vsel %vm339, %v313, 0
        %655 = vmatprep.subr.bf16.mxu0 0
        %656 = vmatpush1.bf16.msra.mxu0 0
        %657 = vmatprep.subr.bf16.mxu0 0
        %658 = vmatpush1.bf16.msra.mxu0 0
        %659 = vmatprep.subr.bf16.mxu0 0
        %660 = vmatpush1.bf16.msra.mxu0 0
        %661 = vmatprep.subr.bf16.mxu0 0
        %662 = vmatpush1.bf16.msra.mxu0 0
        %663 = vmatprep.subr.bf16.mxu0 0
        %664 = vmatpush1.bf16.msra.mxu0 0
        %665 = vmatprep.subr.bf16.mxu0 0
        %666 = vmatpush1.bf16.msra.mxu0 0
        %667 = vmatprep.subr.bf16.mxu0 0
        %668 = vmatpush1.bf16.msra.mxu0 %v345
        %669 = vmatprep.subr.bf16.mxu0 0
        %670 = vmatpush1.bf16.msra.mxu0 %v336
        %671 = vmatprep.subr.bf16.mxu0 0
        %672 = vmatpush2.bf16.msra.mxu0 0
        %673 = vmatprep.subr.bf16.mxu0 0
        %674 = vmatpush2.bf16.msra.mxu0 0
        %675 = vmatprep.subr.bf16.mxu0 0
        %676 = vmatpush2.bf16.msra.mxu0 0
        %677 = vmatprep.subr.bf16.mxu0 0
        %678 = vmatpush2.bf16.msra.mxu0 0
        %679 = vmatprep.subr.bf16.mxu0 0
        %680 = vmatpush2.bf16.msra.mxu0 0
        %681 = vmatprep.subr.bf16.mxu0 0
        %682 = vmatpush2.bf16.msra.mxu0 0
        %683 = vmatprep.subr.bf16.mxu0 0
        %684 = vmatpush2.bf16.msra.mxu0 0
        %685 = vmatprep.subr.bf16.mxu0 0
        %686 = vmatpush2.bf16.msra.mxu0 0
        %687 = vmatprep.mubr.bf16.mxu0 0
        %688 = vmatmul.mubr.bf16.gmra.mxu0 %v653
        %v689 = vpop.f32.mrf.mxu0
        %v690 = vadd.f32 0.0, %v689
        %v691 = vpop.f32.mrf.mxu0
        %v692 = vpop.f32.mrf.mxu0
        %v693 = vadd.f32 0.0, %v692
        %v694 = vpop.f32.mrf.mxu0
        %695 = vdwg.mxu0
        %v697 = vsel %vm339, %v314, 0
        %699 = vmatprep.subr.bf16.mxu0 0
        %700 = vmatpush1.bf16.msra.mxu0 0
        %701 = vmatprep.subr.bf16.mxu0 0
        %702 = vmatpush1.bf16.msra.mxu0 0
        %703 = vmatprep.subr.bf16.mxu0 0
        %704 = vmatpush1.bf16.msra.mxu0 0
        %705 = vmatprep.subr.bf16.mxu0 0
        %706 = vmatpush1.bf16.msra.mxu0 0
        %707 = vmatprep.subr.bf16.mxu0 0
        %708 = vmatpush1.bf16.msra.mxu0 0
        %709 = vmatprep.subr.bf16.mxu0 0
        %710 = vmatpush1.bf16.msra.mxu0 0
        %711 = vmatprep.subr.bf16.mxu0 0
        %712 = vmatpush1.bf16.msra.mxu0 %v345
        %713 = vmatprep.subr.bf16.mxu0 0
        %714 = vmatpush1.bf16.msra.mxu0 %v336
        %715 = vmatprep.subr.bf16.mxu0 0
        %716 = vmatpush2.bf16.msra.mxu0 0
        %717 = vmatprep.subr.bf16.mxu0 0
        %718 = vmatpush2.bf16.msra.mxu0 0
        %719 = vmatprep.subr.bf16.mxu0 0
        %720 = vmatpush2.bf16.msra.mxu0 0
        %721 = vmatprep.subr.bf16.mxu0 0
        %722 = vmatpush2.bf16.msra.mxu0 0
        %723 = vmatprep.subr.bf16.mxu0 0
        %724 = vmatpush2.bf16.msra.mxu0 0
        %725 = vmatprep.subr.bf16.mxu0 0
        %726 = vmatpush2.bf16.msra.mxu0 0
        %727 = vmatprep.subr.bf16.mxu0 0
        %728 = vmatpush2.bf16.msra.mxu0 0
        %729 = vmatprep.subr.bf16.mxu0 0
        %730 = vmatpush2.bf16.msra.mxu0 0
        %731 = vmatprep.mubr.bf16.mxu0 0
        %732 = vmatmul.mubr.bf16.gmra.mxu0 %v697
        %v733 = vpop.f32.mrf.mxu0
        %v734 = vadd.f32 0.0, %v733
        %v735 = vpop.f32.mrf.mxu0
        %v736 = vpop.f32.mrf.mxu0
        %v737 = vadd.f32 0.0, %v736
        %v738 = vpop.f32.mrf.mxu0
        %739 = vdwg.mxu0
        %v741 = vsel %vm339, %v315, 0
        %743 = vmatprep.subr.bf16.mxu0 0
        %744 = vmatpush1.bf16.msra.mxu0 0
        %745 = vmatprep.subr.bf16.mxu0 0
        %746 = vmatpush1.bf16.msra.mxu0 0
        %747 = vmatprep.subr.bf16.mxu0 0
        %748 = vmatpush1.bf16.msra.mxu0 0
        %749 = vmatprep.subr.bf16.mxu0 0
        %750 = vmatpush1.bf16.msra.mxu0 0
        %751 = vmatprep.subr.bf16.mxu0 0
        %752 = vmatpush1.bf16.msra.mxu0 0
        %753 = vmatprep.subr.bf16.mxu0 0
        %754 = vmatpush1.bf16.msra.mxu0 0
        %755 = vmatprep.subr.bf16.mxu0 0
        %756 = vmatpush1.bf16.msra.mxu0 %v345
        %757 = vmatprep.subr.bf16.mxu0 0
        %758 = vmatpush1.bf16.msra.mxu0 %v336
        %759 = vmatprep.subr.bf16.mxu0 0
        %760 = vmatpush2.bf16.msra.mxu0 0
        %761 = vmatprep.subr.bf16.mxu0 0
        %762 = vmatpush2.bf16.msra.mxu0 0
        %763 = vmatprep.subr.bf16.mxu0 0
        %764 = vmatpush2.bf16.msra.mxu0 0
        %765 = vmatprep.subr.bf16.mxu0 0
        %766 = vmatpush2.bf16.msra.mxu0 0
        %767 = vmatprep.subr.bf16.mxu0 0
        %768 = vmatpush2.bf16.msra.mxu0 0
        %769 = vmatprep.subr.bf16.mxu0 0
        %770 = vmatpush2.bf16.msra.mxu0 0
        %771 = vmatprep.subr.bf16.mxu0 0
        %772 = vmatpush2.bf16.msra.mxu0 0
        %773 = vmatprep.subr.bf16.mxu0 0
        %774 = vmatpush2.bf16.msra.mxu0 0
        %775 = vmatprep.mubr.bf16.mxu0 0
        %776 = vmatmul.mubr.bf16.gmra.mxu0 %v741
        %v777 = vpop.f32.mrf.mxu0
        %v778 = vadd.f32 0.0, %v777
        %v779 = vpop.f32.mrf.mxu0
        %v780 = vpop.f32.mrf.mxu0
        %v781 = vadd.f32 0.0, %v780
        %v782 = vpop.f32.mrf.mxu0
        %783 = vdwg.mxu0
        %v788 = vunpack.c.l.b16 %v319
        %v789 = vunpack.c.l.b16 %v320
        %v790 = vunpack.c.l.b16 %v321
        %v791 = vunpack.c.l.b16 %v322
        %v792 = vpack.c.b16 %v789, %v788
        %v793 = vpack.c.b16 %v791, %v790
        %v796 = vsel %vm339, %v305, 0
        %v799 = vsel %vm343, %v793, 0
        %801 = vmatprep.subr.bf16.mxu0 0
        %802 = vmatpush1.bf16.msra.mxu0 0
        %803 = vmatprep.subr.bf16.mxu0 0
        %804 = vmatpush1.bf16.msra.mxu0 0
        %805 = vmatprep.subr.bf16.mxu0 0
        %806 = vmatpush1.bf16.msra.mxu0 0
        %807 = vmatprep.subr.bf16.mxu0 0
        %808 = vmatpush1.bf16.msra.mxu0 0
        %809 = vmatprep.subr.bf16.mxu0 0
        %810 = vmatpush1.bf16.msra.mxu0 0
        %811 = vmatprep.subr.bf16.mxu0 0
        %812 = vmatpush1.bf16.msra.mxu0 0
        %813 = vmatprep.subr.bf16.mxu0 0
        %814 = vmatpush1.bf16.msra.mxu0 %v799
        %815 = vmatprep.subr.bf16.mxu0 0
        %816 = vmatpush1.bf16.msra.mxu0 %v792
        %817 = vmatprep.subr.bf16.mxu0 0
        %818 = vmatpush2.bf16.msra.mxu0 0
        %819 = vmatprep.subr.bf16.mxu0 0
        %820 = vmatpush2.bf16.msra.mxu0 0
        %821 = vmatprep.subr.bf16.mxu0 0
        %822 = vmatpush2.bf16.msra.mxu0 0
        %823 = vmatprep.subr.bf16.mxu0 0
        %824 = vmatpush2.bf16.msra.mxu0 0
        %825 = vmatprep.subr.bf16.mxu0 0
        %826 = vmatpush2.bf16.msra.mxu0 0
        %827 = vmatprep.subr.bf16.mxu0 0
        %828 = vmatpush2.bf16.msra.mxu0 0
        %829 = vmatprep.subr.bf16.mxu0 0
        %830 = vmatpush2.bf16.msra.mxu0 0
        %831 = vmatprep.subr.bf16.mxu0 0
        %832 = vmatpush2.bf16.msra.mxu0 0
        %833 = vmatprep.mubr.bf16.mxu0 0
        %834 = vmatmul.mubr.bf16.gmra.mxu0 %v796
        %v835 = vpop.f32.mrf.mxu0
        %v836 = vadd.f32 %v382, %v835
        %v837 = vpop.f32.mrf.mxu0
        %v838 = vpop.f32.mrf.mxu0
        %v839 = vadd.f32 %v385, %v838
        %v840 = vpop.f32.mrf.mxu0
        %841 = vdwg.mxu0
        %842 = vmatprep.subr.bf16.mxu0 0
        %843 = vmatpush1.bf16.msra.mxu0 0
        %844 = vmatprep.subr.bf16.mxu0 0
        %845 = vmatpush1.bf16.msra.mxu0 0
        %846 = vmatprep.subr.bf16.mxu0 0
        %847 = vmatpush1.bf16.msra.mxu0 0
        %848 = vmatprep.subr.bf16.mxu0 0
        %849 = vmatpush1.bf16.msra.mxu0 0
        %850 = vmatprep.subr.bf16.mxu0 0
        %851 = vmatpush1.bf16.msra.mxu0 0
        %852 = vmatprep.subr.bf16.mxu0 0
        %853 = vmatpush1.bf16.msra.mxu0 0
        %854 = vmatprep.subr.bf16.mxu0 0
        %855 = vmatpush1.bf16.msra.mxu0 %v799
        %856 = vmatprep.subr.bf16.mxu0 0
        %857 = vmatpush1.bf16.msra.mxu0 %v792
        %858 = vmatprep.subr.bf16.mxu0 0
        %859 = vmatpush2.bf16.msra.mxu0 0
        %860 = vmatprep.subr.bf16.mxu0 0
        %861 = vmatpush2.bf16.msra.mxu0 0
        %862 = vmatprep.subr.bf16.mxu0 0
        %863 = vmatpush2.bf16.msra.mxu0 0
        %864 = vmatprep.subr.bf16.mxu0 0
        %865 = vmatpush2.bf16.msra.mxu0 0
        %866 = vmatprep.subr.bf16.mxu0 0
        %867 = vmatpush2.bf16.msra.mxu0 0
        %868 = vmatprep.subr.bf16.mxu0 0
        %869 = vmatpush2.bf16.msra.mxu0 0
        %870 = vmatprep.subr.bf16.mxu0 0
        %871 = vmatpush2.bf16.msra.mxu0 0
        %872 = vmatprep.subr.bf16.mxu0 0
        %873 = vmatpush2.bf16.msra.mxu0 0
        %874 = vmatprep.mubr.bf16.mxu0 0
        %875 = vmatmul.mubr.bf16.gmra.mxu0 %v341
        %v876 = vpop.f32.mrf.mxu0
        %v877 = vadd.f32 %v426, %v876
        %v878 = vpop.f32.mrf.mxu0
        %v879 = vpop.f32.mrf.mxu0
        %v880 = vadd.f32 %v429, %v879
        %v881 = vpop.f32.mrf.mxu0
        %882 = vdwg.mxu0
        %883 = vmatprep.subr.bf16.mxu0 0
        %884 = vmatpush1.bf16.msra.mxu0 0
        %885 = vmatprep.subr.bf16.mxu0 0
        %886 = vmatpush1.bf16.msra.mxu0 0
        %887 = vmatprep.subr.bf16.mxu0 0
        %888 = vmatpush1.bf16.msra.mxu0 0
        %889 = vmatprep.subr.bf16.mxu0 0
        %890 = vmatpush1.bf16.msra.mxu0 0
        %891 = vmatprep.subr.bf16.mxu0 0
        %892 = vmatpush1.bf16.msra.mxu0 0
        %893 = vmatprep.subr.bf16.mxu0 0
        %894 = vmatpush1.bf16.msra.mxu0 0
        %895 = vmatprep.subr.bf16.mxu0 0
        %896 = vmatpush1.bf16.msra.mxu0 %v799
        %897 = vmatprep.subr.bf16.mxu0 0
        %898 = vmatpush1.bf16.msra.mxu0 %v792
        %899 = vmatprep.subr.bf16.mxu0 0
        %900 = vmatpush2.bf16.msra.mxu0 0
        %901 = vmatprep.subr.bf16.mxu0 0
        %902 = vmatpush2.bf16.msra.mxu0 0
        %903 = vmatprep.subr.bf16.mxu0 0
        %904 = vmatpush2.bf16.msra.mxu0 0
        %905 = vmatprep.subr.bf16.mxu0 0
        %906 = vmatpush2.bf16.msra.mxu0 0
        %907 = vmatprep.subr.bf16.mxu0 0
        %908 = vmatpush2.bf16.msra.mxu0 0
        %909 = vmatprep.subr.bf16.mxu0 0
        %910 = vmatpush2.bf16.msra.mxu0 0
        %911 = vmatprep.subr.bf16.mxu0 0
        %912 = vmatpush2.bf16.msra.mxu0 0
        %913 = vmatprep.subr.bf16.mxu0 0
        %914 = vmatpush2.bf16.msra.mxu0 0
        %915 = vmatprep.mubr.bf16.mxu0 0
        %916 = vmatmul.mubr.bf16.gmra.mxu0 %v389
        %v917 = vpop.f32.mrf.mxu0
        %v918 = vadd.f32 %v470, %v917
        %v919 = vpop.f32.mrf.mxu0
        %v920 = vpop.f32.mrf.mxu0
        %v921 = vadd.f32 %v473, %v920
        %v922 = vpop.f32.mrf.mxu0
        %923 = vdwg.mxu0
        %924 = vmatprep.subr.bf16.mxu0 0
        %925 = vmatpush1.bf16.msra.mxu0 0
        %926 = vmatprep.subr.bf16.mxu0 0
        %927 = vmatpush1.bf16.msra.mxu0 0
        %928 = vmatprep.subr.bf16.mxu0 0
        %929 = vmatpush1.bf16.msra.mxu0 0
        %930 = vmatprep.subr.bf16.mxu0 0
        %931 = vmatpush1.bf16.msra.mxu0 0
        %932 = vmatprep.subr.bf16.mxu0 0
        %933 = vmatpush1.bf16.msra.mxu0 0
        %934 = vmatprep.subr.bf16.mxu0 0
        %935 = vmatpush1.bf16.msra.mxu0 0
        %936 = vmatprep.subr.bf16.mxu0 0
        %937 = vmatpush1.bf16.msra.mxu0 %v799
        %938 = vmatprep.subr.bf16.mxu0 0
        %939 = vmatpush1.bf16.msra.mxu0 %v792
        %940 = vmatprep.subr.bf16.mxu0 0
        %941 = vmatpush2.bf16.msra.mxu0 0
        %942 = vmatprep.subr.bf16.mxu0 0
        %943 = vmatpush2.bf16.msra.mxu0 0
        %944 = vmatprep.subr.bf16.mxu0 0
        %945 = vmatpush2.bf16.msra.mxu0 0
        %946 = vmatprep.subr.bf16.mxu0 0
        %947 = vmatpush2.bf16.msra.mxu0 0
        %948 = vmatprep.subr.bf16.mxu0 0
        %949 = vmatpush2.bf16.msra.mxu0 0
        %950 = vmatprep.subr.bf16.mxu0 0
        %951 = vmatpush2.bf16.msra.mxu0 0
        %952 = vmatprep.subr.bf16.mxu0 0
        %953 = vmatpush2.bf16.msra.mxu0 0
        %954 = vmatprep.subr.bf16.mxu0 0
        %955 = vmatpush2.bf16.msra.mxu0 0
        %956 = vmatprep.mubr.bf16.mxu0 0
        %957 = vmatmul.mubr.bf16.gmra.mxu0 %v433
        %v958 = vpop.f32.mrf.mxu0
        %v959 = vadd.f32 %v514, %v958
        %v960 = vpop.f32.mrf.mxu0
        %v961 = vpop.f32.mrf.mxu0
        %v962 = vadd.f32 %v517, %v961
        %v963 = vpop.f32.mrf.mxu0
        %964 = vdwg.mxu0
        %965 = vmatprep.subr.bf16.mxu0 0
        %966 = vmatpush1.bf16.msra.mxu0 0
        %967 = vmatprep.subr.bf16.mxu0 0
        %968 = vmatpush1.bf16.msra.mxu0 0
        %969 = vmatprep.subr.bf16.mxu0 0
        %970 = vmatpush1.bf16.msra.mxu0 0
        %971 = vmatprep.subr.bf16.mxu0 0
        %972 = vmatpush1.bf16.msra.mxu0 0
        %973 = vmatprep.subr.bf16.mxu0 0
        %974 = vmatpush1.bf16.msra.mxu0 0
        %975 = vmatprep.subr.bf16.mxu0 0
        %976 = vmatpush1.bf16.msra.mxu0 0
        %977 = vmatprep.subr.bf16.mxu0 0
        %978 = vmatpush1.bf16.msra.mxu0 %v799
        %979 = vmatprep.subr.bf16.mxu0 0
        %980 = vmatpush1.bf16.msra.mxu0 %v792
        %981 = vmatprep.subr.bf16.mxu0 0
        %982 = vmatpush2.bf16.msra.mxu0 0
        %983 = vmatprep.subr.bf16.mxu0 0
        %984 = vmatpush2.bf16.msra.mxu0 0
        %985 = vmatprep.subr.bf16.mxu0 0
        %986 = vmatpush2.bf16.msra.mxu0 0
        %987 = vmatprep.subr.bf16.mxu0 0
        %988 = vmatpush2.bf16.msra.mxu0 0
        %989 = vmatprep.subr.bf16.mxu0 0
        %990 = vmatpush2.bf16.msra.mxu0 0
        %991 = vmatprep.subr.bf16.mxu0 0
        %992 = vmatpush2.bf16.msra.mxu0 0
        %993 = vmatprep.subr.bf16.mxu0 0
        %994 = vmatpush2.bf16.msra.mxu0 0
        %995 = vmatprep.subr.bf16.mxu0 0
        %996 = vmatpush2.bf16.msra.mxu0 0
        %997 = vmatprep.mubr.bf16.mxu0 0
        %998 = vmatmul.mubr.bf16.gmra.mxu0 %v477
        %v999 = vpop.f32.mrf.mxu0
        %v1000 = vadd.f32 %v558, %v999
        %v1001 = vpop.f32.mrf.mxu0
        %v1002 = vpop.f32.mrf.mxu0
        %v1003 = vadd.f32 %v561, %v1002
        %v1004 = vpop.f32.mrf.mxu0
        %1005 = vdwg.mxu0
        %1006 = vmatprep.subr.bf16.mxu0 0
        %1007 = vmatpush1.bf16.msra.mxu0 0
        %1008 = vmatprep.subr.bf16.mxu0 0
        %1009 = vmatpush1.bf16.msra.mxu0 0
        %1010 = vmatprep.subr.bf16.mxu0 0
        %1011 = vmatpush1.bf16.msra.mxu0 0
        %1012 = vmatprep.subr.bf16.mxu0 0
        %1013 = vmatpush1.bf16.msra.mxu0 0
        %1014 = vmatprep.subr.bf16.mxu0 0
        %1015 = vmatpush1.bf16.msra.mxu0 0
        %1016 = vmatprep.subr.bf16.mxu0 0
        %1017 = vmatpush1.bf16.msra.mxu0 0
        %1018 = vmatprep.subr.bf16.mxu0 0
        %1019 = vmatpush1.bf16.msra.mxu0 %v799
        %1020 = vmatprep.subr.bf16.mxu0 0
        %1021 = vmatpush1.bf16.msra.mxu0 %v792
        %1022 = vmatprep.subr.bf16.mxu0 0
        %1023 = vmatpush2.bf16.msra.mxu0 0
        %1024 = vmatprep.subr.bf16.mxu0 0
        %1025 = vmatpush2.bf16.msra.mxu0 0
        %1026 = vmatprep.subr.bf16.mxu0 0
        %1027 = vmatpush2.bf16.msra.mxu0 0
        %1028 = vmatprep.subr.bf16.mxu0 0
        %1029 = vmatpush2.bf16.msra.mxu0 0
        %1030 = vmatprep.subr.bf16.mxu0 0
        %1031 = vmatpush2.bf16.msra.mxu0 0
        %1032 = vmatprep.subr.bf16.mxu0 0
        %1033 = vmatpush2.bf16.msra.mxu0 0
        %1034 = vmatprep.subr.bf16.mxu0 0
        %1035 = vmatpush2.bf16.msra.mxu0 0
        %1036 = vmatprep.subr.bf16.mxu0 0
        %1037 = vmatpush2.bf16.msra.mxu0 0
        %1038 = vmatprep.mubr.bf16.mxu0 0
        %1039 = vmatmul.mubr.bf16.gmra.mxu0 %v521
        %v1040 = vpop.f32.mrf.mxu0
        %v1041 = vadd.f32 %v602, %v1040
        %v1042 = vpop.f32.mrf.mxu0
        %v1043 = vpop.f32.mrf.mxu0
        %v1044 = vadd.f32 %v605, %v1043
        %v1045 = vpop.f32.mrf.mxu0
        %1046 = vdwg.mxu0
        %1047 = vmatprep.subr.bf16.mxu0 0
        %1048 = vmatpush1.bf16.msra.mxu0 0
        %1049 = vmatprep.subr.bf16.mxu0 0
        %1050 = vmatpush1.bf16.msra.mxu0 0
        %1051 = vmatprep.subr.bf16.mxu0 0
        %1052 = vmatpush1.bf16.msra.mxu0 0
        %1053 = vmatprep.subr.bf16.mxu0 0
        %1054 = vmatpush1.bf16.msra.mxu0 0
        %1055 = vmatprep.subr.bf16.mxu0 0
        %1056 = vmatpush1.bf16.msra.mxu0 0
        %1057 = vmatprep.subr.bf16.mxu0 0
        %1058 = vmatpush1.bf16.msra.mxu0 0
        %1059 = vmatprep.subr.bf16.mxu0 0
        %1060 = vmatpush1.bf16.msra.mxu0 %v799
        %1061 = vmatprep.subr.bf16.mxu0 0
        %1062 = vmatpush1.bf16.msra.mxu0 %v792
        %1063 = vmatprep.subr.bf16.mxu0 0
        %1064 = vmatpush2.bf16.msra.mxu0 0
        %1065 = vmatprep.subr.bf16.mxu0 0
        %1066 = vmatpush2.bf16.msra.mxu0 0
        %1067 = vmatprep.subr.bf16.mxu0 0
        %1068 = vmatpush2.bf16.msra.mxu0 0
        %1069 = vmatprep.subr.bf16.mxu0 0
        %1070 = vmatpush2.bf16.msra.mxu0 0
        %1071 = vmatprep.subr.bf16.mxu0 0
        %1072 = vmatpush2.bf16.msra.mxu0 0
        %1073 = vmatprep.subr.bf16.mxu0 0
        %1074 = vmatpush2.bf16.msra.mxu0 0
        %1075 = vmatprep.subr.bf16.mxu0 0
        %1076 = vmatpush2.bf16.msra.mxu0 0
        %1077 = vmatprep.subr.bf16.mxu0 0
        %1078 = vmatpush2.bf16.msra.mxu0 0
        %1079 = vmatprep.mubr.bf16.mxu0 0
        %1080 = vmatmul.mubr.bf16.gmra.mxu0 %v565
        %v1081 = vpop.f32.mrf.mxu0
        %v1082 = vadd.f32 %v646, %v1081
        %v1083 = vpop.f32.mrf.mxu0
        %v1084 = vpop.f32.mrf.mxu0
        %v1085 = vadd.f32 %v649, %v1084
        %v1086 = vpop.f32.mrf.mxu0
        %1087 = vdwg.mxu0
        %1088 = vmatprep.subr.bf16.mxu0 0
        %1089 = vmatpush1.bf16.msra.mxu0 0
        %1090 = vmatprep.subr.bf16.mxu0 0
        %1091 = vmatpush1.bf16.msra.mxu0 0
        %1092 = vmatprep.subr.bf16.mxu0 0
        %1093 = vmatpush1.bf16.msra.mxu0 0
        %1094 = vmatprep.subr.bf16.mxu0 0
        %1095 = vmatpush1.bf16.msra.mxu0 0
        %1096 = vmatprep.subr.bf16.mxu0 0
        %1097 = vmatpush1.bf16.msra.mxu0 0
        %1098 = vmatprep.subr.bf16.mxu0 0
        %1099 = vmatpush1.bf16.msra.mxu0 0
        %1100 = vmatprep.subr.bf16.mxu0 0
        %1101 = vmatpush1.bf16.msra.mxu0 %v799
        %1102 = vmatprep.subr.bf16.mxu0 0
        %1103 = vmatpush1.bf16.msra.mxu0 %v792
        %1104 = vmatprep.subr.bf16.mxu0 0
        %1105 = vmatpush2.bf16.msra.mxu0 0
        %1106 = vmatprep.subr.bf16.mxu0 0
        %1107 = vmatpush2.bf16.msra.mxu0 0
        %1108 = vmatprep.subr.bf16.mxu0 0
        %1109 = vmatpush2.bf16.msra.mxu0 0
        %1110 = vmatprep.subr.bf16.mxu0 0
        %1111 = vmatpush2.bf16.msra.mxu0 0
        %1112 = vmatprep.subr.bf16.mxu0 0
        %1113 = vmatpush2.bf16.msra.mxu0 0
        %1114 = vmatprep.subr.bf16.mxu0 0
        %1115 = vmatpush2.bf16.msra.mxu0 0
        %1116 = vmatprep.subr.bf16.mxu0 0
        %1117 = vmatpush2.bf16.msra.mxu0 0
        %1118 = vmatprep.subr.bf16.mxu0 0
        %1119 = vmatpush2.bf16.msra.mxu0 0
        %1120 = vmatprep.mubr.bf16.mxu0 0
        %1121 = vmatmul.mubr.bf16.gmra.mxu0 %v609
        %v1122 = vpop.f32.mrf.mxu0
        %v1123 = vadd.f32 %v690, %v1122
        %v1124 = vpop.f32.mrf.mxu0
        %v1125 = vpop.f32.mrf.mxu0
        %v1126 = vadd.f32 %v693, %v1125
        %v1127 = vpop.f32.mrf.mxu0
        %1128 = vdwg.mxu0
        %1129 = vmatprep.subr.bf16.mxu0 0
        %1130 = vmatpush1.bf16.msra.mxu0 0
        %1131 = vmatprep.subr.bf16.mxu0 0
        %1132 = vmatpush1.bf16.msra.mxu0 0
        %1133 = vmatprep.subr.bf16.mxu0 0
        %1134 = vmatpush1.bf16.msra.mxu0 0
        %1135 = vmatprep.subr.bf16.mxu0 0
        %1136 = vmatpush1.bf16.msra.mxu0 0
        %1137 = vmatprep.subr.bf16.mxu0 0
        %1138 = vmatpush1.bf16.msra.mxu0 0
        %1139 = vmatprep.subr.bf16.mxu0 0
        %1140 = vmatpush1.bf16.msra.mxu0 0
        %1141 = vmatprep.subr.bf16.mxu0 0
        %1142 = vmatpush1.bf16.msra.mxu0 %v799
        %1143 = vmatprep.subr.bf16.mxu0 0
        %1144 = vmatpush1.bf16.msra.mxu0 %v792
        %1145 = vmatprep.subr.bf16.mxu0 0
        %1146 = vmatpush2.bf16.msra.mxu0 0
        %1147 = vmatprep.subr.bf16.mxu0 0
        %1148 = vmatpush2.bf16.msra.mxu0 0
        %1149 = vmatprep.subr.bf16.mxu0 0
        %1150 = vmatpush2.bf16.msra.mxu0 0
        %1151 = vmatprep.subr.bf16.mxu0 0
        %1152 = vmatpush2.bf16.msra.mxu0 0
        %1153 = vmatprep.subr.bf16.mxu0 0
        %1154 = vmatpush2.bf16.msra.mxu0 0
        %1155 = vmatprep.subr.bf16.mxu0 0
        %1156 = vmatpush2.bf16.msra.mxu0 0
        %1157 = vmatprep.subr.bf16.mxu0 0
        %1158 = vmatpush2.bf16.msra.mxu0 0
        %1159 = vmatprep.subr.bf16.mxu0 0
        %1160 = vmatpush2.bf16.msra.mxu0 0
        %1161 = vmatprep.mubr.bf16.mxu0 0
        %1162 = vmatmul.mubr.bf16.gmra.mxu0 %v653
        %v1163 = vpop.f32.mrf.mxu0
        %v1164 = vadd.f32 %v734, %v1163
        %v1165 = vpop.f32.mrf.mxu0
        %v1166 = vpop.f32.mrf.mxu0
        %v1167 = vadd.f32 %v737, %v1166
        %v1168 = vpop.f32.mrf.mxu0
        %1169 = vdwg.mxu0
        %1170 = vmatprep.subr.bf16.mxu0 0
        %1171 = vmatpush1.bf16.msra.mxu0 0
        %1172 = vmatprep.subr.bf16.mxu0 0
        %1173 = vmatpush1.bf16.msra.mxu0 0
        %1174 = vmatprep.subr.bf16.mxu0 0
        %1175 = vmatpush1.bf16.msra.mxu0 0
        %1176 = vmatprep.subr.bf16.mxu0 0
        %1177 = vmatpush1.bf16.msra.mxu0 0
        %1178 = vmatprep.subr.bf16.mxu0 0
        %1179 = vmatpush1.bf16.msra.mxu0 0
        %1180 = vmatprep.subr.bf16.mxu0 0
        %1181 = vmatpush1.bf16.msra.mxu0 0
        %1182 = vmatprep.subr.bf16.mxu0 0
        %1183 = vmatpush1.bf16.msra.mxu0 %v799
        %1184 = vmatprep.subr.bf16.mxu0 0
        %1185 = vmatpush1.bf16.msra.mxu0 %v792
        %1186 = vmatprep.subr.bf16.mxu0 0
        %1187 = vmatpush2.bf16.msra.mxu0 0
        %1188 = vmatprep.subr.bf16.mxu0 0
        %1189 = vmatpush2.bf16.msra.mxu0 0
        %1190 = vmatprep.subr.bf16.mxu0 0
        %1191 = vmatpush2.bf16.msra.mxu0 0
        %1192 = vmatprep.subr.bf16.mxu0 0
        %1193 = vmatpush2.bf16.msra.mxu0 0
        %1194 = vmatprep.subr.bf16.mxu0 0
        %1195 = vmatpush2.bf16.msra.mxu0 0
        %1196 = vmatprep.subr.bf16.mxu0 0
        %1197 = vmatpush2.bf16.msra.mxu0 0
        %1198 = vmatprep.subr.bf16.mxu0 0
        %1199 = vmatpush2.bf16.msra.mxu0 0
        %1200 = vmatprep.subr.bf16.mxu0 0
        %1201 = vmatpush2.bf16.msra.mxu0 0
        %1202 = vmatprep.mubr.bf16.mxu0 0
        %1203 = vmatmul.mubr.bf16.gmra.mxu0 %v697
        %v1204 = vpop.f32.mrf.mxu0
        %v1205 = vadd.f32 %v778, %v1204
        %v1206 = vpop.f32.mrf.mxu0
        %v1207 = vpop.f32.mrf.mxu0
        %v1208 = vadd.f32 %v781, %v1207
        %v1209 = vpop.f32.mrf.mxu0
        %1210 = vdwg.mxu0
        %s1211 = scalar_lea.vmem %s1, 32
        %v1212 = vld [vmem:[%s1211] sm:$0xf]
        %v1213 = vld [vmem:[%s1211 + $0x4] sm:$0xf]
        %v1214 = vld [vmem:[%s1211 + $0x8] sm:$0xf]
        %v1215 = vld [vmem:[%s1211 + $0xc] sm:$0x7]
        %v1220 = vunpack.c.l.b16 %v1212
        %v1221 = vunpack.c.l.b16 %v1213
        %v1222 = vunpack.c.l.b16 %v1214
        %v1223 = vunpack.c.l.b16 %v1215
        %v1224 = vpack.c.b16 %v1221, %v1220
        %v1225 = vpack.c.b16 %v1223, %v1222
        %v1228 = vsel %vm343, %v1225, 0
        %1230 = vmatprep.subr.bf16.mxu0 0
        %1231 = vmatpush1.bf16.msra.mxu0 0
        %1232 = vmatprep.subr.bf16.mxu0 0
        %1233 = vmatpush1.bf16.msra.mxu0 0
        %1234 = vmatprep.subr.bf16.mxu0 0
        %1235 = vmatpush1.bf16.msra.mxu0 0
        %1236 = vmatprep.subr.bf16.mxu0 0
        %1237 = vmatpush1.bf16.msra.mxu0 0
        %1238 = vmatprep.subr.bf16.mxu0 0
        %1239 = vmatpush1.bf16.msra.mxu0 0
        %1240 = vmatprep.subr.bf16.mxu0 0
        %1241 = vmatpush1.bf16.msra.mxu0 0
        %1242 = vmatprep.subr.bf16.mxu0 0
        %1243 = vmatpush1.bf16.msra.mxu0 %v1228
        %1244 = vmatprep.subr.bf16.mxu0 0
        %1245 = vmatpush1.bf16.msra.mxu0 %v1224
        %1246 = vmatprep.subr.bf16.mxu0 0
        %1247 = vmatpush2.bf16.msra.mxu0 0
        %1248 = vmatprep.subr.bf16.mxu0 0
        %1249 = vmatpush2.bf16.msra.mxu0 0
        %1250 = vmatprep.subr.bf16.mxu0 0
        %1251 = vmatpush2.bf16.msra.mxu0 0
        %1252 = vmatprep.subr.bf16.mxu0 0
        %1253 = vmatpush2.bf16.msra.mxu0 0
        %1254 = vmatprep.subr.bf16.mxu0 0
        %1255 = vmatpush2.bf16.msra.mxu0 0
        %1256 = vmatprep.subr.bf16.mxu0 0
        %1257 = vmatpush2.bf16.msra.mxu0 0
        %1258 = vmatprep.subr.bf16.mxu0 0
        %1259 = vmatpush2.bf16.msra.mxu0 0
        %1260 = vmatprep.subr.bf16.mxu0 0
        %1261 = vmatpush2.bf16.msra.mxu0 0
        %1262 = vmatprep.mubr.bf16.mxu0 0
        %1263 = vmatmul.mubr.bf16.gmra.mxu0 %v389
        %v1264 = vpop.f32.mrf.mxu0
        %v1265 = vadd.f32 0.0, %v1264
        %v1266 = vpop.f32.mrf.mxu0
        %v1267 = vpop.f32.mrf.mxu0
        %v1268 = vadd.f32 0.0, %v1267
        %v1269 = vpop.f32.mrf.mxu0
        %1270 = vdwg.mxu0
        %1271 = vmatprep.subr.bf16.mxu0 0
        %1272 = vmatpush1.bf16.msra.mxu0 0
        %1273 = vmatprep.subr.bf16.mxu0 0
        %1274 = vmatpush1.bf16.msra.mxu0 0
        %1275 = vmatprep.subr.bf16.mxu0 0
        %1276 = vmatpush1.bf16.msra.mxu0 0
        %1277 = vmatprep.subr.bf16.mxu0 0
        %1278 = vmatpush1.bf16.msra.mxu0 0
        %1279 = vmatprep.subr.bf16.mxu0 0
        %1280 = vmatpush1.bf16.msra.mxu0 0
        %1281 = vmatprep.subr.bf16.mxu0 0
        %1282 = vmatpush1.bf16.msra.mxu0 0
        %1283 = vmatprep.subr.bf16.mxu0 0
        %1284 = vmatpush1.bf16.msra.mxu0 %v1228
        %1285 = vmatprep.subr.bf16.mxu0 0
        %1286 = vmatpush1.bf16.msra.mxu0 %v1224
        %1287 = vmatprep.subr.bf16.mxu0 0
        %1288 = vmatpush2.bf16.msra.mxu0 0
        %1289 = vmatprep.subr.bf16.mxu0 0
        %1290 = vmatpush2.bf16.msra.mxu0 0
        %1291 = vmatprep.subr.bf16.mxu0 0
        %1292 = vmatpush2.bf16.msra.mxu0 0
        %1293 = vmatprep.subr.bf16.mxu0 0
        %1294 = vmatpush2.bf16.msra.mxu0 0
        %1295 = vmatprep.subr.bf16.mxu0 0
        %1296 = vmatpush2.bf16.msra.mxu0 0
        %1297 = vmatprep.subr.bf16.mxu0 0
        %1298 = vmatpush2.bf16.msra.mxu0 0
        %1299 = vmatprep.subr.bf16.mxu0 0
        %1300 = vmatpush2.bf16.msra.mxu0 0
        %1301 = vmatprep.subr.bf16.mxu0 0
        %1302 = vmatpush2.bf16.msra.mxu0 0
        %1303 = vmatprep.mubr.bf16.mxu0 0
        %1304 = vmatmul.mubr.bf16.gmra.mxu0 %v433
        %v1305 = vpop.f32.mrf.mxu0
        %v1306 = vadd.f32 0.0, %v1305
        %v1307 = vpop.f32.mrf.mxu0
        %v1308 = vpop.f32.mrf.mxu0
        %v1309 = vadd.f32 0.0, %v1308
        %v1310 = vpop.f32.mrf.mxu0
        %1311 = vdwg.mxu0
        %1312 = vmatprep.subr.bf16.mxu0 0
        %1313 = vmatpush1.bf16.msra.mxu0 0
        %1314 = vmatprep.subr.bf16.mxu0 0
        %1315 = vmatpush1.bf16.msra.mxu0 0
        %1316 = vmatprep.subr.bf16.mxu0 0
        %1317 = vmatpush1.bf16.msra.mxu0 0
        %1318 = vmatprep.subr.bf16.mxu0 0
        %1319 = vmatpush1.bf16.msra.mxu0 0
        %1320 = vmatprep.subr.bf16.mxu0 0
        %1321 = vmatpush1.bf16.msra.mxu0 0
        %1322 = vmatprep.subr.bf16.mxu0 0
        %1323 = vmatpush1.bf16.msra.mxu0 0
        %1324 = vmatprep.subr.bf16.mxu0 0
        %1325 = vmatpush1.bf16.msra.mxu0 %v1228
        %1326 = vmatprep.subr.bf16.mxu0 0
        %1327 = vmatpush1.bf16.msra.mxu0 %v1224
        %1328 = vmatprep.subr.bf16.mxu0 0
        %1329 = vmatpush2.bf16.msra.mxu0 0
        %1330 = vmatprep.subr.bf16.mxu0 0
        %1331 = vmatpush2.bf16.msra.mxu0 0
        %1332 = vmatprep.subr.bf16.mxu0 0
        %1333 = vmatpush2.bf16.msra.mxu0 0
        %1334 = vmatprep.subr.bf16.mxu0 0
        %1335 = vmatpush2.bf16.msra.mxu0 0
        %1336 = vmatprep.subr.bf16.mxu0 0
        %1337 = vmatpush2.bf16.msra.mxu0 0
        %1338 = vmatprep.subr.bf16.mxu0 0
        %1339 = vmatpush2.bf16.msra.mxu0 0
        %1340 = vmatprep.subr.bf16.mxu0 0
        %1341 = vmatpush2.bf16.msra.mxu0 0
        %1342 = vmatprep.subr.bf16.mxu0 0
        %1343 = vmatpush2.bf16.msra.mxu0 0
        %1344 = vmatprep.mubr.bf16.mxu0 0
        %1345 = vmatmul.mubr.bf16.gmra.mxu0 %v477
        %v1346 = vpop.f32.mrf.mxu0
        %v1347 = vadd.f32 0.0, %v1346
        %v1348 = vpop.f32.mrf.mxu0
        %v1349 = vpop.f32.mrf.mxu0
        %v1350 = vadd.f32 0.0, %v1349
        %v1351 = vpop.f32.mrf.mxu0
        %1352 = vdwg.mxu0
        %1353 = vmatprep.subr.bf16.mxu0 0
        %1354 = vmatpush1.bf16.msra.mxu0 0
        %1355 = vmatprep.subr.bf16.mxu0 0
        %1356 = vmatpush1.bf16.msra.mxu0 0
        %1357 = vmatprep.subr.bf16.mxu0 0
        %1358 = vmatpush1.bf16.msra.mxu0 0
        %1359 = vmatprep.subr.bf16.mxu0 0
        %1360 = vmatpush1.bf16.msra.mxu0 0
        %1361 = vmatprep.subr.bf16.mxu0 0
        %1362 = vmatpush1.bf16.msra.mxu0 0
        %1363 = vmatprep.subr.bf16.mxu0 0
        %1364 = vmatpush1.bf16.msra.mxu0 0
        %1365 = vmatprep.subr.bf16.mxu0 0
        %1366 = vmatpush1.bf16.msra.mxu0 %v1228
        %1367 = vmatprep.subr.bf16.mxu0 0
        %1368 = vmatpush1.bf16.msra.mxu0 %v1224
        %1369 = vmatprep.subr.bf16.mxu0 0
        %1370 = vmatpush2.bf16.msra.mxu0 0
        %1371 = vmatprep.subr.bf16.mxu0 0
        %1372 = vmatpush2.bf16.msra.mxu0 0
        %1373 = vmatprep.subr.bf16.mxu0 0
        %1374 = vmatpush2.bf16.msra.mxu0 0
        %1375 = vmatprep.subr.bf16.mxu0 0
        %1376 = vmatpush2.bf16.msra.mxu0 0
        %1377 = vmatprep.subr.bf16.mxu0 0
        %1378 = vmatpush2.bf16.msra.mxu0 0
        %1379 = vmatprep.subr.bf16.mxu0 0
        %1380 = vmatpush2.bf16.msra.mxu0 0
        %1381 = vmatprep.subr.bf16.mxu0 0
        %1382 = vmatpush2.bf16.msra.mxu0 0
        %1383 = vmatprep.subr.bf16.mxu0 0
        %1384 = vmatpush2.bf16.msra.mxu0 0
        %1385 = vmatprep.mubr.bf16.mxu0 0
        %1386 = vmatmul.mubr.bf16.gmra.mxu0 %v521
        %v1387 = vpop.f32.mrf.mxu0
        %v1388 = vadd.f32 0.0, %v1387
        %v1389 = vpop.f32.mrf.mxu0
        %v1390 = vpop.f32.mrf.mxu0
        %v1391 = vadd.f32 0.0, %v1390
        %v1392 = vpop.f32.mrf.mxu0
        %1393 = vdwg.mxu0
        %1394 = vmatprep.subr.bf16.mxu0 0
        %1395 = vmatpush1.bf16.msra.mxu0 0
        %1396 = vmatprep.subr.bf16.mxu0 0
        %1397 = vmatpush1.bf16.msra.mxu0 0
        %1398 = vmatprep.subr.bf16.mxu0 0
        %1399 = vmatpush1.bf16.msra.mxu0 0
        %1400 = vmatprep.subr.bf16.mxu0 0
        %1401 = vmatpush1.bf16.msra.mxu0 0
        %1402 = vmatprep.subr.bf16.mxu0 0
        %1403 = vmatpush1.bf16.msra.mxu0 0
        %1404 = vmatprep.subr.bf16.mxu0 0
        %1405 = vmatpush1.bf16.msra.mxu0 0
        %1406 = vmatprep.subr.bf16.mxu0 0
        %1407 = vmatpush1.bf16.msra.mxu0 %v1228
        %1408 = vmatprep.subr.bf16.mxu0 0
        %1409 = vmatpush1.bf16.msra.mxu0 %v1224
        %1410 = vmatprep.subr.bf16.mxu0 0
        %1411 = vmatpush2.bf16.msra.mxu0 0
        %1412 = vmatprep.subr.bf16.mxu0 0
        %1413 = vmatpush2.bf16.msra.mxu0 0
        %1414 = vmatprep.subr.bf16.mxu0 0
        %1415 = vmatpush2.bf16.msra.mxu0 0
        %1416 = vmatprep.subr.bf16.mxu0 0
        %1417 = vmatpush2.bf16.msra.mxu0 0
        %1418 = vmatprep.subr.bf16.mxu0 0
        %1419 = vmatpush2.bf16.msra.mxu0 0
        %1420 = vmatprep.subr.bf16.mxu0 0
        %1421 = vmatpush2.bf16.msra.mxu0 0
        %1422 = vmatprep.subr.bf16.mxu0 0
        %1423 = vmatpush2.bf16.msra.mxu0 0
        %1424 = vmatprep.subr.bf16.mxu0 0
        %1425 = vmatpush2.bf16.msra.mxu0 0
        %1426 = vmatprep.mubr.bf16.mxu0 0
        %1427 = vmatmul.mubr.bf16.gmra.mxu0 %v565
        %v1428 = vpop.f32.mrf.mxu0
        %v1429 = vadd.f32 0.0, %v1428
        %v1430 = vpop.f32.mrf.mxu0
        %v1431 = vpop.f32.mrf.mxu0
        %v1432 = vadd.f32 0.0, %v1431
        %v1433 = vpop.f32.mrf.mxu0
        %1434 = vdwg.mxu0
        %1435 = vmatprep.subr.bf16.mxu0 0
        %1436 = vmatpush1.bf16.msra.mxu0 0
        %1437 = vmatprep.subr.bf16.mxu0 0
        %1438 = vmatpush1.bf16.msra.mxu0 0
        %1439 = vmatprep.subr.bf16.mxu0 0
        %1440 = vmatpush1.bf16.msra.mxu0 0
        %1441 = vmatprep.subr.bf16.mxu0 0
        %1442 = vmatpush1.bf16.msra.mxu0 0
        %1443 = vmatprep.subr.bf16.mxu0 0
        %1444 = vmatpush1.bf16.msra.mxu0 0
        %1445 = vmatprep.subr.bf16.mxu0 0
        %1446 = vmatpush1.bf16.msra.mxu0 0
        %1447 = vmatprep.subr.bf16.mxu0 0
        %1448 = vmatpush1.bf16.msra.mxu0 %v1228
        %1449 = vmatprep.subr.bf16.mxu0 0
        %1450 = vmatpush1.bf16.msra.mxu0 %v1224
        %1451 = vmatprep.subr.bf16.mxu0 0
        %1452 = vmatpush2.bf16.msra.mxu0 0
        %1453 = vmatprep.subr.bf16.mxu0 0
        %1454 = vmatpush2.bf16.msra.mxu0 0
        %1455 = vmatprep.subr.bf16.mxu0 0
        %1456 = vmatpush2.bf16.msra.mxu0 0
        %1457 = vmatprep.subr.bf16.mxu0 0
        %1458 = vmatpush2.bf16.msra.mxu0 0
        %1459 = vmatprep.subr.bf16.mxu0 0
        %1460 = vmatpush2.bf16.msra.mxu0 0
        %1461 = vmatprep.subr.bf16.mxu0 0
        %1462 = vmatpush2.bf16.msra.mxu0 0
        %1463 = vmatprep.subr.bf16.mxu0 0
        %1464 = vmatpush2.bf16.msra.mxu0 0
        %1465 = vmatprep.subr.bf16.mxu0 0
        %1466 = vmatpush2.bf16.msra.mxu0 0
        %1467 = vmatprep.mubr.bf16.mxu0 0
        %1468 = vmatmul.mubr.bf16.gmra.mxu0 %v609
        %v1469 = vpop.f32.mrf.mxu0
        %v1470 = vadd.f32 0.0, %v1469
        %v1471 = vpop.f32.mrf.mxu0
        %v1472 = vpop.f32.mrf.mxu0
        %v1473 = vadd.f32 0.0, %v1472
        %v1474 = vpop.f32.mrf.mxu0
        %1475 = vdwg.mxu0
        %1476 = vmatprep.subr.bf16.mxu0 0
        %1477 = vmatpush1.bf16.msra.mxu0 0
        %1478 = vmatprep.subr.bf16.mxu0 0
        %1479 = vmatpush1.bf16.msra.mxu0 0
        %1480 = vmatprep.subr.bf16.mxu0 0
        %1481 = vmatpush1.bf16.msra.mxu0 0
        %1482 = vmatprep.subr.bf16.mxu0 0
        %1483 = vmatpush1.bf16.msra.mxu0 0
        %1484 = vmatprep.subr.bf16.mxu0 0
        %1485 = vmatpush1.bf16.msra.mxu0 0
        %1486 = vmatprep.subr.bf16.mxu0 0
        %1487 = vmatpush1.bf16.msra.mxu0 0
        %1488 = vmatprep.subr.bf16.mxu0 0
        %1489 = vmatpush1.bf16.msra.mxu0 %v1228
        %1490 = vmatprep.subr.bf16.mxu0 0
        %1491 = vmatpush1.bf16.msra.mxu0 %v1224
        %1492 = vmatprep.subr.bf16.mxu0 0
        %1493 = vmatpush2.bf16.msra.mxu0 0
        %1494 = vmatprep.subr.bf16.mxu0 0
        %1495 = vmatpush2.bf16.msra.mxu0 0
        %1496 = vmatprep.subr.bf16.mxu0 0
        %1497 = vmatpush2.bf16.msra.mxu0 0
        %1498 = vmatprep.subr.bf16.mxu0 0
        %1499 = vmatpush2.bf16.msra.mxu0 0
        %1500 = vmatprep.subr.bf16.mxu0 0
        %1501 = vmatpush2.bf16.msra.mxu0 0
        %1502 = vmatprep.subr.bf16.mxu0 0
        %1503 = vmatpush2.bf16.msra.mxu0 0
        %1504 = vmatprep.subr.bf16.mxu0 0
        %1505 = vmatpush2.bf16.msra.mxu0 0
        %1506 = vmatprep.subr.bf16.mxu0 0
        %1507 = vmatpush2.bf16.msra.mxu0 0
        %1508 = vmatprep.mubr.bf16.mxu0 0
        %1509 = vmatmul.mubr.bf16.gmra.mxu0 %v653
        %v1510 = vpop.f32.mrf.mxu0
        %v1511 = vadd.f32 0.0, %v1510
        %v1512 = vpop.f32.mrf.mxu0
        %v1513 = vpop.f32.mrf.mxu0
        %v1514 = vadd.f32 0.0, %v1513
        %v1515 = vpop.f32.mrf.mxu0
        %1516 = vdwg.mxu0
        %1517 = vmatprep.subr.bf16.mxu0 0
        %1518 = vmatpush1.bf16.msra.mxu0 0
        %1519 = vmatprep.subr.bf16.mxu0 0
        %1520 = vmatpush1.bf16.msra.mxu0 0
        %1521 = vmatprep.subr.bf16.mxu0 0
        %1522 = vmatpush1.bf16.msra.mxu0 0
        %1523 = vmatprep.subr.bf16.mxu0 0
        %1524 = vmatpush1.bf16.msra.mxu0 0
        %1525 = vmatprep.subr.bf16.mxu0 0
        %1526 = vmatpush1.bf16.msra.mxu0 0
        %1527 = vmatprep.subr.bf16.mxu0 0
        %1528 = vmatpush1.bf16.msra.mxu0 0
        %1529 = vmatprep.subr.bf16.mxu0 0
        %1530 = vmatpush1.bf16.msra.mxu0 %v1228
        %1531 = vmatprep.subr.bf16.mxu0 0
        %1532 = vmatpush1.bf16.msra.mxu0 %v1224
        %1533 = vmatprep.subr.bf16.mxu0 0
        %1534 = vmatpush2.bf16.msra.mxu0 0
        %1535 = vmatprep.subr.bf16.mxu0 0
        %1536 = vmatpush2.bf16.msra.mxu0 0
        %1537 = vmatprep.subr.bf16.mxu0 0
        %1538 = vmatpush2.bf16.msra.mxu0 0
        %1539 = vmatprep.subr.bf16.mxu0 0
        %1540 = vmatpush2.bf16.msra.mxu0 0
        %1541 = vmatprep.subr.bf16.mxu0 0
        %1542 = vmatpush2.bf16.msra.mxu0 0
        %1543 = vmatprep.subr.bf16.mxu0 0
        %1544 = vmatpush2.bf16.msra.mxu0 0
        %1545 = vmatprep.subr.bf16.mxu0 0
        %1546 = vmatpush2.bf16.msra.mxu0 0
        %1547 = vmatprep.subr.bf16.mxu0 0
        %1548 = vmatpush2.bf16.msra.mxu0 0
        %1549 = vmatprep.mubr.bf16.mxu0 0
        %1550 = vmatmul.mubr.bf16.gmra.mxu0 %v697
        %v1551 = vpop.f32.mrf.mxu0
        %v1552 = vadd.f32 0.0, %v1551
        %v1553 = vpop.f32.mrf.mxu0
        %v1554 = vpop.f32.mrf.mxu0
        %v1555 = vadd.f32 0.0, %v1554
        %v1556 = vpop.f32.mrf.mxu0
        %1557 = vdwg.mxu0
        %1558 = vmatprep.subr.bf16.mxu0 0
        %1559 = vmatpush1.bf16.msra.mxu0 0
        %1560 = vmatprep.subr.bf16.mxu0 0
        %1561 = vmatpush1.bf16.msra.mxu0 0
        %1562 = vmatprep.subr.bf16.mxu0 0
        %1563 = vmatpush1.bf16.msra.mxu0 0
        %1564 = vmatprep.subr.bf16.mxu0 0
        %1565 = vmatpush1.bf16.msra.mxu0 0
        %1566 = vmatprep.subr.bf16.mxu0 0
        %1567 = vmatpush1.bf16.msra.mxu0 0
        %1568 = vmatprep.subr.bf16.mxu0 0
        %1569 = vmatpush1.bf16.msra.mxu0 0
        %1570 = vmatprep.subr.bf16.mxu0 0
        %1571 = vmatpush1.bf16.msra.mxu0 %v1228
        %1572 = vmatprep.subr.bf16.mxu0 0
        %1573 = vmatpush1.bf16.msra.mxu0 %v1224
        %1574 = vmatprep.subr.bf16.mxu0 0
        %1575 = vmatpush2.bf16.msra.mxu0 0
        %1576 = vmatprep.subr.bf16.mxu0 0
        %1577 = vmatpush2.bf16.msra.mxu0 0
        %1578 = vmatprep.subr.bf16.mxu0 0
        %1579 = vmatpush2.bf16.msra.mxu0 0
        %1580 = vmatprep.subr.bf16.mxu0 0
        %1581 = vmatpush2.bf16.msra.mxu0 0
        %1582 = vmatprep.subr.bf16.mxu0 0
        %1583 = vmatpush2.bf16.msra.mxu0 0
        %1584 = vmatprep.subr.bf16.mxu0 0
        %1585 = vmatpush2.bf16.msra.mxu0 0
        %1586 = vmatprep.subr.bf16.mxu0 0
        %1587 = vmatpush2.bf16.msra.mxu0 0
        %1588 = vmatprep.subr.bf16.mxu0 0
        %1589 = vmatpush2.bf16.msra.mxu0 0
        %1590 = vmatprep.mubr.bf16.mxu0 0
        %1591 = vmatmul.mubr.bf16.gmra.mxu0 %v741
        %v1592 = vpop.f32.mrf.mxu0
        %v1593 = vadd.f32 0.0, %v1592
        %v1594 = vpop.f32.mrf.mxu0
        %v1595 = vpop.f32.mrf.mxu0
        %v1596 = vadd.f32 0.0, %v1595
        %v1597 = vpop.f32.mrf.mxu0
        %1598 = vdwg.mxu0
        %v1600 = vsel %vm339, %v316, 0
        %1602 = vmatprep.subr.bf16.mxu0 0
        %1603 = vmatpush1.bf16.msra.mxu0 0
        %1604 = vmatprep.subr.bf16.mxu0 0
        %1605 = vmatpush1.bf16.msra.mxu0 0
        %1606 = vmatprep.subr.bf16.mxu0 0
        %1607 = vmatpush1.bf16.msra.mxu0 0
        %1608 = vmatprep.subr.bf16.mxu0 0
        %1609 = vmatpush1.bf16.msra.mxu0 0
        %1610 = vmatprep.subr.bf16.mxu0 0
        %1611 = vmatpush1.bf16.msra.mxu0 0
        %1612 = vmatprep.subr.bf16.mxu0 0
        %1613 = vmatpush1.bf16.msra.mxu0 0
        %1614 = vmatprep.subr.bf16.mxu0 0
        %1615 = vmatpush1.bf16.msra.mxu0 %v1228
        %1616 = vmatprep.subr.bf16.mxu0 0
        %1617 = vmatpush1.bf16.msra.mxu0 %v1224
        %1618 = vmatprep.subr.bf16.mxu0 0
        %1619 = vmatpush2.bf16.msra.mxu0 0
        %1620 = vmatprep.subr.bf16.mxu0 0
        %1621 = vmatpush2.bf16.msra.mxu0 0
        %1622 = vmatprep.subr.bf16.mxu0 0
        %1623 = vmatpush2.bf16.msra.mxu0 0
        %1624 = vmatprep.subr.bf16.mxu0 0
        %1625 = vmatpush2.bf16.msra.mxu0 0
        %1626 = vmatprep.subr.bf16.mxu0 0
        %1627 = vmatpush2.bf16.msra.mxu0 0
        %1628 = vmatprep.subr.bf16.mxu0 0
        %1629 = vmatpush2.bf16.msra.mxu0 0
        %1630 = vmatprep.subr.bf16.mxu0 0
        %1631 = vmatpush2.bf16.msra.mxu0 0
        %1632 = vmatprep.subr.bf16.mxu0 0
        %1633 = vmatpush2.bf16.msra.mxu0 0
        %1634 = vmatprep.mubr.bf16.mxu0 0
        %1635 = vmatmul.mubr.bf16.gmra.mxu0 %v1600
        %v1636 = vpop.f32.mrf.mxu0
        %v1637 = vadd.f32 0.0, %v1636
        %v1638 = vpop.f32.mrf.mxu0
        %v1639 = vpop.f32.mrf.mxu0
        %v1640 = vadd.f32 0.0, %v1639
        %v1641 = vpop.f32.mrf.mxu0
        %1642 = vdwg.mxu0
        %v1643 = vadd.f32 %v836, %v1265
        %v1644 = vadd.f32 %v839, %v1268
        %v1645 = vadd.f32 %v877, %v1306
        %v1646 = vadd.f32 %v880, %v1309
        %v1647 = vadd.f32 %v918, %v1347
        %v1648 = vadd.f32 %v921, %v1350
        %v1649 = vadd.f32 %v959, %v1388
        %v1650 = vadd.f32 %v962, %v1391
        %v1651 = vadd.f32 %v1000, %v1429
        %v1652 = vadd.f32 %v1003, %v1432
        %v1653 = vadd.f32 %v1041, %v1470
        %v1654 = vadd.f32 %v1044, %v1473
        %v1655 = vadd.f32 %v1082, %v1511
        %v1656 = vadd.f32 %v1085, %v1514
        %v1657 = vadd.f32 %v1123, %v1552
        %v1658 = vadd.f32 %v1126, %v1555
        %v1659 = vadd.f32 %v1164, %v1593
        %v1660 = vadd.f32 %v1167, %v1596
        %v1661 = vadd.f32 %v1205, %v1637
        %v1662 = vadd.f32 %v1208, %v1640
        %s1663 = scalar_lea.vmem %s1, 48
        %v1664 = vld [vmem:[%s1663] sm:$0xf]
        %v1665 = vld [vmem:[%s1663 + $0x4] sm:$0xf]
        %v1666 = vld [vmem:[%s1663 + $0x8] sm:$0xf]
        %v1667 = vld [vmem:[%s1663 + $0xc] sm:$0x7]
        %v1672 = vunpack.c.l.b16 %v1664
        %v1673 = vunpack.c.l.b16 %v1665
        %v1674 = vunpack.c.l.b16 %v1666
        %v1675 = vunpack.c.l.b16 %v1667
        %v1676 = vpack.c.b16 %v1673, %v1672
        %v1677 = vpack.c.b16 %v1675, %v1674
        %v1680 = vsel %vm343, %v1677, 0
        %1682 = vmatprep.subr.bf16.mxu0 0
        %1683 = vmatpush1.bf16.msra.mxu0 0
        %1684 = vmatprep.subr.bf16.mxu0 0
        %1685 = vmatpush1.bf16.msra.mxu0 0
        %1686 = vmatprep.subr.bf16.mxu0 0
        %1687 = vmatpush1.bf16.msra.mxu0 0
        %1688 = vmatprep.subr.bf16.mxu0 0
        %1689 = vmatpush1.bf16.msra.mxu0 0
        %1690 = vmatprep.subr.bf16.mxu0 0
        %1691 = vmatpush1.bf16.msra.mxu0 0
        %1692 = vmatprep.subr.bf16.mxu0 0
        %1693 = vmatpush1.bf16.msra.mxu0 0
        %1694 = vmatprep.subr.bf16.mxu0 0
        %1695 = vmatpush1.bf16.msra.mxu0 %v1680
        %1696 = vmatprep.subr.bf16.mxu0 0
        %1697 = vmatpush1.bf16.msra.mxu0 %v1676
        %1698 = vmatprep.subr.bf16.mxu0 0
        %1699 = vmatpush2.bf16.msra.mxu0 0
        %1700 = vmatprep.subr.bf16.mxu0 0
        %1701 = vmatpush2.bf16.msra.mxu0 0
        %1702 = vmatprep.subr.bf16.mxu0 0
        %1703 = vmatpush2.bf16.msra.mxu0 0
        %1704 = vmatprep.subr.bf16.mxu0 0
        %1705 = vmatpush2.bf16.msra.mxu0 0
        %1706 = vmatprep.subr.bf16.mxu0 0
        %1707 = vmatpush2.bf16.msra.mxu0 0
        %1708 = vmatprep.subr.bf16.mxu0 0
        %1709 = vmatpush2.bf16.msra.mxu0 0
        %1710 = vmatprep.subr.bf16.mxu0 0
        %1711 = vmatpush2.bf16.msra.mxu0 0
        %1712 = vmatprep.subr.bf16.mxu0 0
        %1713 = vmatpush2.bf16.msra.mxu0 0
        %1714 = vmatprep.mubr.bf16.mxu0 0
        %1715 = vmatmul.mubr.bf16.gmra.mxu0 %v433
        %v1716 = vpop.f32.mrf.mxu0
        %v1717 = vadd.f32 0.0, %v1716
        %v1718 = vpop.f32.mrf.mxu0
        %v1719 = vpop.f32.mrf.mxu0
        %v1720 = vadd.f32 0.0, %v1719
        %v1721 = vpop.f32.mrf.mxu0
        %1722 = vdwg.mxu0
        %1723 = vmatprep.subr.bf16.mxu0 0
        %1724 = vmatpush1.bf16.msra.mxu0 0
        %1725 = vmatprep.subr.bf16.mxu0 0
        %1726 = vmatpush1.bf16.msra.mxu0 0
        %1727 = vmatprep.subr.bf16.mxu0 0
        %1728 = vmatpush1.bf16.msra.mxu0 0
        %1729 = vmatprep.subr.bf16.mxu0 0
        %1730 = vmatpush1.bf16.msra.mxu0 0
        %1731 = vmatprep.subr.bf16.mxu0 0
        %1732 = vmatpush1.bf16.msra.mxu0 0
        %1733 = vmatprep.subr.bf16.mxu0 0
        %1734 = vmatpush1.bf16.msra.mxu0 0
        %1735 = vmatprep.subr.bf16.mxu0 0
        %1736 = vmatpush1.bf16.msra.mxu0 %v1680
        %1737 = vmatprep.subr.bf16.mxu0 0
        %1738 = vmatpush1.bf16.msra.mxu0 %v1676
        %1739 = vmatprep.subr.bf16.mxu0 0
        %1740 = vmatpush2.bf16.msra.mxu0 0
        %1741 = vmatprep.subr.bf16.mxu0 0
        %1742 = vmatpush2.bf16.msra.mxu0 0
        %1743 = vmatprep.subr.bf16.mxu0 0
        %1744 = vmatpush2.bf16.msra.mxu0 0
        %1745 = vmatprep.subr.bf16.mxu0 0
        %1746 = vmatpush2.bf16.msra.mxu0 0
        %1747 = vmatprep.subr.bf16.mxu0 0
        %1748 = vmatpush2.bf16.msra.mxu0 0
        %1749 = vmatprep.subr.bf16.mxu0 0
        %1750 = vmatpush2.bf16.msra.mxu0 0
        %1751 = vmatprep.subr.bf16.mxu0 0
        %1752 = vmatpush2.bf16.msra.mxu0 0
        %1753 = vmatprep.subr.bf16.mxu0 0
        %1754 = vmatpush2.bf16.msra.mxu0 0
        %1755 = vmatprep.mubr.bf16.mxu0 0
        %1756 = vmatmul.mubr.bf16.gmra.mxu0 %v477
        %v1757 = vpop.f32.mrf.mxu0
        %v1758 = vadd.f32 0.0, %v1757
        %v1759 = vpop.f32.mrf.mxu0
        %v1760 = vpop.f32.mrf.mxu0
        %v1761 = vadd.f32 0.0, %v1760
        %v1762 = vpop.f32.mrf.mxu0
        %1763 = vdwg.mxu0
        %1764 = vmatprep.subr.bf16.mxu0 0
        %1765 = vmatpush1.bf16.msra.mxu0 0
        %1766 = vmatprep.subr.bf16.mxu0 0
        %1767 = vmatpush1.bf16.msra.mxu0 0
        %1768 = vmatprep.subr.bf16.mxu0 0
        %1769 = vmatpush1.bf16.msra.mxu0 0
        %1770 = vmatprep.subr.bf16.mxu0 0
        %1771 = vmatpush1.bf16.msra.mxu0 0
        %1772 = vmatprep.subr.bf16.mxu0 0
        %1773 = vmatpush1.bf16.msra.mxu0 0
        %1774 = vmatprep.subr.bf16.mxu0 0
        %1775 = vmatpush1.bf16.msra.mxu0 0
        %1776 = vmatprep.subr.bf16.mxu0 0
        %1777 = vmatpush1.bf16.msra.mxu0 %v1680
        %1778 = vmatprep.subr.bf16.mxu0 0
        %1779 = vmatpush1.bf16.msra.mxu0 %v1676
        %1780 = vmatprep.subr.bf16.mxu0 0
        %1781 = vmatpush2.bf16.msra.mxu0 0
        %1782 = vmatprep.subr.bf16.mxu0 0
        %1783 = vmatpush2.bf16.msra.mxu0 0
        %1784 = vmatprep.subr.bf16.mxu0 0
        %1785 = vmatpush2.bf16.msra.mxu0 0
        %1786 = vmatprep.subr.bf16.mxu0 0
        %1787 = vmatpush2.bf16.msra.mxu0 0
        %1788 = vmatprep.subr.bf16.mxu0 0
        %1789 = vmatpush2.bf16.msra.mxu0 0
        %1790 = vmatprep.subr.bf16.mxu0 0
        %1791 = vmatpush2.bf16.msra.mxu0 0
        %1792 = vmatprep.subr.bf16.mxu0 0
        %1793 = vmatpush2.bf16.msra.mxu0 0
        %1794 = vmatprep.subr.bf16.mxu0 0
        %1795 = vmatpush2.bf16.msra.mxu0 0
        %1796 = vmatprep.mubr.bf16.mxu0 0
        %1797 = vmatmul.mubr.bf16.gmra.mxu0 %v521
        %v1798 = vpop.f32.mrf.mxu0
        %v1799 = vadd.f32 0.0, %v1798
        %v1800 = vpop.f32.mrf.mxu0
        %v1801 = vpop.f32.mrf.mxu0
        %v1802 = vadd.f32 0.0, %v1801
        %v1803 = vpop.f32.mrf.mxu0
        %1804 = vdwg.mxu0
        %1805 = vmatprep.subr.bf16.mxu0 0
        %1806 = vmatpush1.bf16.msra.mxu0 0
        %1807 = vmatprep.subr.bf16.mxu0 0
        %1808 = vmatpush1.bf16.msra.mxu0 0
        %1809 = vmatprep.subr.bf16.mxu0 0
        %1810 = vmatpush1.bf16.msra.mxu0 0
        %1811 = vmatprep.subr.bf16.mxu0 0
        %1812 = vmatpush1.bf16.msra.mxu0 0
        %1813 = vmatprep.subr.bf16.mxu0 0
        %1814 = vmatpush1.bf16.msra.mxu0 0
        %1815 = vmatprep.subr.bf16.mxu0 0
        %1816 = vmatpush1.bf16.msra.mxu0 0
        %1817 = vmatprep.subr.bf16.mxu0 0
        %1818 = vmatpush1.bf16.msra.mxu0 %v1680
        %1819 = vmatprep.subr.bf16.mxu0 0
        %1820 = vmatpush1.bf16.msra.mxu0 %v1676
        %1821 = vmatprep.subr.bf16.mxu0 0
        %1822 = vmatpush2.bf16.msra.mxu0 0
        %1823 = vmatprep.subr.bf16.mxu0 0
        %1824 = vmatpush2.bf16.msra.mxu0 0
        %1825 = vmatprep.subr.bf16.mxu0 0
        %1826 = vmatpush2.bf16.msra.mxu0 0
        %1827 = vmatprep.subr.bf16.mxu0 0
        %1828 = vmatpush2.bf16.msra.mxu0 0
        %1829 = vmatprep.subr.bf16.mxu0 0
        %1830 = vmatpush2.bf16.msra.mxu0 0
        %1831 = vmatprep.subr.bf16.mxu0 0
        %1832 = vmatpush2.bf16.msra.mxu0 0
        %1833 = vmatprep.subr.bf16.mxu0 0
        %1834 = vmatpush2.bf16.msra.mxu0 0
        %1835 = vmatprep.subr.bf16.mxu0 0
        %1836 = vmatpush2.bf16.msra.mxu0 0
        %1837 = vmatprep.mubr.bf16.mxu0 0
        %1838 = vmatmul.mubr.bf16.gmra.mxu0 %v565
        %v1839 = vpop.f32.mrf.mxu0
        %v1840 = vadd.f32 0.0, %v1839
        %v1841 = vpop.f32.mrf.mxu0
        %v1842 = vpop.f32.mrf.mxu0
        %v1843 = vadd.f32 0.0, %v1842
        %v1844 = vpop.f32.mrf.mxu0
        %1845 = vdwg.mxu0
        %1846 = vmatprep.subr.bf16.mxu0 0
        %1847 = vmatpush1.bf16.msra.mxu0 0
        %1848 = vmatprep.subr.bf16.mxu0 0
        %1849 = vmatpush1.bf16.msra.mxu0 0
        %1850 = vmatprep.subr.bf16.mxu0 0
        %1851 = vmatpush1.bf16.msra.mxu0 0
        %1852 = vmatprep.subr.bf16.mxu0 0
        %1853 = vmatpush1.bf16.msra.mxu0 0
        %1854 = vmatprep.subr.bf16.mxu0 0
        %1855 = vmatpush1.bf16.msra.mxu0 0
        %1856 = vmatprep.subr.bf16.mxu0 0
        %1857 = vmatpush1.bf16.msra.mxu0 0
        %1858 = vmatprep.subr.bf16.mxu0 0
        %1859 = vmatpush1.bf16.msra.mxu0 %v1680
        %1860 = vmatprep.subr.bf16.mxu0 0
        %1861 = vmatpush1.bf16.msra.mxu0 %v1676
        %1862 = vmatprep.subr.bf16.mxu0 0
        %1863 = vmatpush2.bf16.msra.mxu0 0
        %1864 = vmatprep.subr.bf16.mxu0 0
        %1865 = vmatpush2.bf16.msra.mxu0 0
        %1866 = vmatprep.subr.bf16.mxu0 0
        %1867 = vmatpush2.bf16.msra.mxu0 0
        %1868 = vmatprep.subr.bf16.mxu0 0
        %1869 = vmatpush2.bf16.msra.mxu0 0
        %1870 = vmatprep.subr.bf16.mxu0 0
        %1871 = vmatpush2.bf16.msra.mxu0 0
        %1872 = vmatprep.subr.bf16.mxu0 0
        %1873 = vmatpush2.bf16.msra.mxu0 0
        %1874 = vmatprep.subr.bf16.mxu0 0
        %1875 = vmatpush2.bf16.msra.mxu0 0
        %1876 = vmatprep.subr.bf16.mxu0 0
        %1877 = vmatpush2.bf16.msra.mxu0 0
        %1878 = vmatprep.mubr.bf16.mxu0 0
        %1879 = vmatmul.mubr.bf16.gmra.mxu0 %v609
        %v1880 = vpop.f32.mrf.mxu0
        %v1881 = vadd.f32 0.0, %v1880
        %v1882 = vpop.f32.mrf.mxu0
        %v1883 = vpop.f32.mrf.mxu0
        %v1884 = vadd.f32 0.0, %v1883
        %v1885 = vpop.f32.mrf.mxu0
        %1886 = vdwg.mxu0
        %1887 = vmatprep.subr.bf16.mxu0 0
        %1888 = vmatpush1.bf16.msra.mxu0 0
        %1889 = vmatprep.subr.bf16.mxu0 0
        %1890 = vmatpush1.bf16.msra.mxu0 0
        %1891 = vmatprep.subr.bf16.mxu0 0
        %1892 = vmatpush1.bf16.msra.mxu0 0
        %1893 = vmatprep.subr.bf16.mxu0 0
        %1894 = vmatpush1.bf16.msra.mxu0 0
        %1895 = vmatprep.subr.bf16.mxu0 0
        %1896 = vmatpush1.bf16.msra.mxu0 0
        %1897 = vmatprep.subr.bf16.mxu0 0
        %1898 = vmatpush1.bf16.msra.mxu0 0
        %1899 = vmatprep.subr.bf16.mxu0 0
        %1900 = vmatpush1.bf16.msra.mxu0 %v1680
        %1901 = vmatprep.subr.bf16.mxu0 0
        %1902 = vmatpush1.bf16.msra.mxu0 %v1676
        %1903 = vmatprep.subr.bf16.mxu0 0
        %1904 = vmatpush2.bf16.msra.mxu0 0
        %1905 = vmatprep.subr.bf16.mxu0 0
        %1906 = vmatpush2.bf16.msra.mxu0 0
        %1907 = vmatprep.subr.bf16.mxu0 0
        %1908 = vmatpush2.bf16.msra.mxu0 0
        %1909 = vmatprep.subr.bf16.mxu0 0
        %1910 = vmatpush2.bf16.msra.mxu0 0
        %1911 = vmatprep.subr.bf16.mxu0 0
        %1912 = vmatpush2.bf16.msra.mxu0 0
        %1913 = vmatprep.subr.bf16.mxu0 0
        %1914 = vmatpush2.bf16.msra.mxu0 0
        %1915 = vmatprep.subr.bf16.mxu0 0
        %1916 = vmatpush2.bf16.msra.mxu0 0
        %1917 = vmatprep.subr.bf16.mxu0 0
        %1918 = vmatpush2.bf16.msra.mxu0 0
        %1919 = vmatprep.mubr.bf16.mxu0 0
        %1920 = vmatmul.mubr.bf16.gmra.mxu0 %v653
        %v1921 = vpop.f32.mrf.mxu0
        %v1922 = vadd.f32 0.0, %v1921
        %v1923 = vpop.f32.mrf.mxu0
        %v1924 = vpop.f32.mrf.mxu0
        %v1925 = vadd.f32 0.0, %v1924
        %v1926 = vpop.f32.mrf.mxu0
        %1927 = vdwg.mxu0
        %1928 = vmatprep.subr.bf16.mxu0 0
        %1929 = vmatpush1.bf16.msra.mxu0 0
        %1930 = vmatprep.subr.bf16.mxu0 0
        %1931 = vmatpush1.bf16.msra.mxu0 0
        %1932 = vmatprep.subr.bf16.mxu0 0
        %1933 = vmatpush1.bf16.msra.mxu0 0
        %1934 = vmatprep.subr.bf16.mxu0 0
        %1935 = vmatpush1.bf16.msra.mxu0 0
        %1936 = vmatprep.subr.bf16.mxu0 0
        %1937 = vmatpush1.bf16.msra.mxu0 0
        %1938 = vmatprep.subr.bf16.mxu0 0
        %1939 = vmatpush1.bf16.msra.mxu0 0
        %1940 = vmatprep.subr.bf16.mxu0 0
        %1941 = vmatpush1.bf16.msra.mxu0 %v1680
        %1942 = vmatprep.subr.bf16.mxu0 0
        %1943 = vmatpush1.bf16.msra.mxu0 %v1676
        %1944 = vmatprep.subr.bf16.mxu0 0
        %1945 = vmatpush2.bf16.msra.mxu0 0
        %1946 = vmatprep.subr.bf16.mxu0 0
        %1947 = vmatpush2.bf16.msra.mxu0 0
        %1948 = vmatprep.subr.bf16.mxu0 0
        %1949 = vmatpush2.bf16.msra.mxu0 0
        %1950 = vmatprep.subr.bf16.mxu0 0
        %1951 = vmatpush2.bf16.msra.mxu0 0
        %1952 = vmatprep.subr.bf16.mxu0 0
        %1953 = vmatpush2.bf16.msra.mxu0 0
        %1954 = vmatprep.subr.bf16.mxu0 0
        %1955 = vmatpush2.bf16.msra.mxu0 0
        %1956 = vmatprep.subr.bf16.mxu0 0
        %1957 = vmatpush2.bf16.msra.mxu0 0
        %1958 = vmatprep.subr.bf16.mxu0 0
        %1959 = vmatpush2.bf16.msra.mxu0 0
        %1960 = vmatprep.mubr.bf16.mxu0 0
        %1961 = vmatmul.mubr.bf16.gmra.mxu0 %v697
        %v1962 = vpop.f32.mrf.mxu0
        %v1963 = vadd.f32 0.0, %v1962
        %v1964 = vpop.f32.mrf.mxu0
        %v1965 = vpop.f32.mrf.mxu0
        %v1966 = vadd.f32 0.0, %v1965
        %v1967 = vpop.f32.mrf.mxu0
        %1968 = vdwg.mxu0
        %1969 = vmatprep.subr.bf16.mxu0 0
        %1970 = vmatpush1.bf16.msra.mxu0 0
        %1971 = vmatprep.subr.bf16.mxu0 0
        %1972 = vmatpush1.bf16.msra.mxu0 0
        %1973 = vmatprep.subr.bf16.mxu0 0
        %1974 = vmatpush1.bf16.msra.mxu0 0
        %1975 = vmatprep.subr.bf16.mxu0 0
        %1976 = vmatpush1.bf16.msra.mxu0 0
        %1977 = vmatprep.subr.bf16.mxu0 0
        %1978 = vmatpush1.bf16.msra.mxu0 0
        %1979 = vmatprep.subr.bf16.mxu0 0
        %1980 = vmatpush1.bf16.msra.mxu0 0
        %1981 = vmatprep.subr.bf16.mxu0 0
        %1982 = vmatpush1.bf16.msra.mxu0 %v1680
        %1983 = vmatprep.subr.bf16.mxu0 0
        %1984 = vmatpush1.bf16.msra.mxu0 %v1676
        %1985 = vmatprep.subr.bf16.mxu0 0
        %1986 = vmatpush2.bf16.msra.mxu0 0
        %1987 = vmatprep.subr.bf16.mxu0 0
        %1988 = vmatpush2.bf16.msra.mxu0 0
        %1989 = vmatprep.subr.bf16.mxu0 0
        %1990 = vmatpush2.bf16.msra.mxu0 0
        %1991 = vmatprep.subr.bf16.mxu0 0
        %1992 = vmatpush2.bf16.msra.mxu0 0
        %1993 = vmatprep.subr.bf16.mxu0 0
        %1994 = vmatpush2.bf16.msra.mxu0 0
        %1995 = vmatprep.subr.bf16.mxu0 0
        %1996 = vmatpush2.bf16.msra.mxu0 0
        %1997 = vmatprep.subr.bf16.mxu0 0
        %1998 = vmatpush2.bf16.msra.mxu0 0
        %1999 = vmatprep.subr.bf16.mxu0 0
        %2000 = vmatpush2.bf16.msra.mxu0 0
        %2001 = vmatprep.mubr.bf16.mxu0 0
        %2002 = vmatmul.mubr.bf16.gmra.mxu0 %v741
        %v2003 = vpop.f32.mrf.mxu0
        %v2004 = vadd.f32 0.0, %v2003
        %v2005 = vpop.f32.mrf.mxu0
        %v2006 = vpop.f32.mrf.mxu0
        %v2007 = vadd.f32 0.0, %v2006
        %v2008 = vpop.f32.mrf.mxu0
        %2009 = vdwg.mxu0
        %2010 = vmatprep.subr.bf16.mxu0 0
        %2011 = vmatpush1.bf16.msra.mxu0 0
        %2012 = vmatprep.subr.bf16.mxu0 0
        %2013 = vmatpush1.bf16.msra.mxu0 0
        %2014 = vmatprep.subr.bf16.mxu0 0
        %2015 = vmatpush1.bf16.msra.mxu0 0
        %2016 = vmatprep.subr.bf16.mxu0 0
        %2017 = vmatpush1.bf16.msra.mxu0 0
        %2018 = vmatprep.subr.bf16.mxu0 0
        %2019 = vmatpush1.bf16.msra.mxu0 0
        %2020 = vmatprep.subr.bf16.mxu0 0
        %2021 = vmatpush1.bf16.msra.mxu0 0
        %2022 = vmatprep.subr.bf16.mxu0 0
        %2023 = vmatpush1.bf16.msra.mxu0 %v1680
        %2024 = vmatprep.subr.bf16.mxu0 0
        %2025 = vmatpush1.bf16.msra.mxu0 %v1676
        %2026 = vmatprep.subr.bf16.mxu0 0
        %2027 = vmatpush2.bf16.msra.mxu0 0
        %2028 = vmatprep.subr.bf16.mxu0 0
        %2029 = vmatpush2.bf16.msra.mxu0 0
        %2030 = vmatprep.subr.bf16.mxu0 0
        %2031 = vmatpush2.bf16.msra.mxu0 0
        %2032 = vmatprep.subr.bf16.mxu0 0
        %2033 = vmatpush2.bf16.msra.mxu0 0
        %2034 = vmatprep.subr.bf16.mxu0 0
        %2035 = vmatpush2.bf16.msra.mxu0 0
        %2036 = vmatprep.subr.bf16.mxu0 0
        %2037 = vmatpush2.bf16.msra.mxu0 0
        %2038 = vmatprep.subr.bf16.mxu0 0
        %2039 = vmatpush2.bf16.msra.mxu0 0
        %2040 = vmatprep.subr.bf16.mxu0 0
        %2041 = vmatpush2.bf16.msra.mxu0 0
        %2042 = vmatprep.mubr.bf16.mxu0 0
        %2043 = vmatmul.mubr.bf16.gmra.mxu0 %v1600
        %v2044 = vpop.f32.mrf.mxu0
        %v2045 = vadd.f32 0.0, %v2044
        %v2046 = vpop.f32.mrf.mxu0
        %v2047 = vpop.f32.mrf.mxu0
        %v2048 = vadd.f32 0.0, %v2047
        %v2049 = vpop.f32.mrf.mxu0
        %2050 = vdwg.mxu0
        %v2052 = vsel %vm339, %v317, 0
        %2054 = vmatprep.subr.bf16.mxu0 0
        %2055 = vmatpush1.bf16.msra.mxu0 0
        %2056 = vmatprep.subr.bf16.mxu0 0
        %2057 = vmatpush1.bf16.msra.mxu0 0
        %2058 = vmatprep.subr.bf16.mxu0 0
        %2059 = vmatpush1.bf16.msra.mxu0 0
        %2060 = vmatprep.subr.bf16.mxu0 0
        %2061 = vmatpush1.bf16.msra.mxu0 0
        %2062 = vmatprep.subr.bf16.mxu0 0
        %2063 = vmatpush1.bf16.msra.mxu0 0
        %2064 = vmatprep.subr.bf16.mxu0 0
        %2065 = vmatpush1.bf16.msra.mxu0 0
        %2066 = vmatprep.subr.bf16.mxu0 0
        %2067 = vmatpush1.bf16.msra.mxu0 %v1680
        %2068 = vmatprep.subr.bf16.mxu0 0
        %2069 = vmatpush1.bf16.msra.mxu0 %v1676
        %2070 = vmatprep.subr.bf16.mxu0 0
        %2071 = vmatpush2.bf16.msra.mxu0 0
        %2072 = vmatprep.subr.bf16.mxu0 0
        %2073 = vmatpush2.bf16.msra.mxu0 0
        %2074 = vmatprep.subr.bf16.mxu0 0
        %2075 = vmatpush2.bf16.msra.mxu0 0
        %2076 = vmatprep.subr.bf16.mxu0 0
        %2077 = vmatpush2.bf16.msra.mxu0 0
        %2078 = vmatprep.subr.bf16.mxu0 0
        %2079 = vmatpush2.bf16.msra.mxu0 0
        %2080 = vmatprep.subr.bf16.mxu0 0
        %2081 = vmatpush2.bf16.msra.mxu0 0
        %2082 = vmatprep.subr.bf16.mxu0 0
        %2083 = vmatpush2.bf16.msra.mxu0 0
        %2084 = vmatprep.subr.bf16.mxu0 0
        %2085 = vmatpush2.bf16.msra.mxu0 0
        %2086 = vmatprep.mubr.bf16.mxu0 0
        %2087 = vmatmul.mubr.bf16.gmra.mxu0 %v2052
        %v2088 = vpop.f32.mrf.mxu0
        %v2089 = vadd.f32 0.0, %v2088
        %v2090 = vpop.f32.mrf.mxu0
        %v2091 = vpop.f32.mrf.mxu0
        %v2092 = vadd.f32 0.0, %v2091
        %v2093 = vpop.f32.mrf.mxu0
        %2094 = vdwg.mxu0
        %v2095 = vadd.f32 %v1643, %v1717
        %v2096 = vadd.f32 %v1644, %v1720
        %v2097 = vadd.f32 %v1645, %v1758
        %v2098 = vadd.f32 %v1646, %v1761
        %v2099 = vadd.f32 %v1647, %v1799
        %v2100 = vadd.f32 %v1648, %v1802
        %v2101 = vadd.f32 %v1649, %v1840
        %v2102 = vadd.f32 %v1650, %v1843
        %v2103 = vadd.f32 %v1651, %v1881
        %v2104 = vadd.f32 %v1652, %v1884
        %v2105 = vadd.f32 %v1653, %v1922
        %v2106 = vadd.f32 %v1654, %v1925
        %v2107 = vadd.f32 %v1655, %v1963
        %v2108 = vadd.f32 %v1656, %v1966
        %v2109 = vadd.f32 %v1657, %v2004
        %v2110 = vadd.f32 %v1658, %v2007
        %v2111 = vadd.f32 %v1659, %v2045
        %v2112 = vadd.f32 %v1660, %v2048
        %v2113 = vadd.f32 %v1661, %v2089
        %v2114 = vadd.f32 %v1662, %v2092
        %s2115 = scalar_lea.vmem %s1, 64
        %v2116 = vld [vmem:[%s2115] sm:$0xf]
        %v2117 = vld [vmem:[%s2115 + $0x4] sm:$0xf]
        %v2118 = vld [vmem:[%s2115 + $0x8] sm:$0xf]
        %v2119 = vld [vmem:[%s2115 + $0xc] sm:$0x7]
        %v2124 = vunpack.c.l.b16 %v2116
        %v2125 = vunpack.c.l.b16 %v2117
        %v2126 = vunpack.c.l.b16 %v2118
        %v2127 = vunpack.c.l.b16 %v2119
        %v2128 = vpack.c.b16 %v2125, %v2124
        %v2129 = vpack.c.b16 %v2127, %v2126
        %v2132 = vsel %vm343, %v2129, 0
        %2134 = vmatprep.subr.bf16.mxu0 0
        %2135 = vmatpush1.bf16.msra.mxu0 0
        %2136 = vmatprep.subr.bf16.mxu0 0
        %2137 = vmatpush1.bf16.msra.mxu0 0
        %2138 = vmatprep.subr.bf16.mxu0 0
        %2139 = vmatpush1.bf16.msra.mxu0 0
        %2140 = vmatprep.subr.bf16.mxu0 0
        %2141 = vmatpush1.bf16.msra.mxu0 0
        %2142 = vmatprep.subr.bf16.mxu0 0
        %2143 = vmatpush1.bf16.msra.mxu0 0
        %2144 = vmatprep.subr.bf16.mxu0 0
        %2145 = vmatpush1.bf16.msra.mxu0 0
        %2146 = vmatprep.subr.bf16.mxu0 0
        %2147 = vmatpush1.bf16.msra.mxu0 %v2132
        %2148 = vmatprep.subr.bf16.mxu0 0
        %2149 = vmatpush1.bf16.msra.mxu0 %v2128
        %2150 = vmatprep.subr.bf16.mxu0 0
        %2151 = vmatpush2.bf16.msra.mxu0 0
        %2152 = vmatprep.subr.bf16.mxu0 0
        %2153 = vmatpush2.bf16.msra.mxu0 0
        %2154 = vmatprep.subr.bf16.mxu0 0
        %2155 = vmatpush2.bf16.msra.mxu0 0
        %2156 = vmatprep.subr.bf16.mxu0 0
        %2157 = vmatpush2.bf16.msra.mxu0 0
        %2158 = vmatprep.subr.bf16.mxu0 0
        %2159 = vmatpush2.bf16.msra.mxu0 0
        %2160 = vmatprep.subr.bf16.mxu0 0
        %2161 = vmatpush2.bf16.msra.mxu0 0
        %2162 = vmatprep.subr.bf16.mxu0 0
        %2163 = vmatpush2.bf16.msra.mxu0 0
        %2164 = vmatprep.subr.bf16.mxu0 0
        %2165 = vmatpush2.bf16.msra.mxu0 0
        %2166 = vmatprep.mubr.bf16.mxu0 0
        %2167 = vmatmul.mubr.bf16.gmra.mxu0 %v477
        %v2168 = vpop.f32.mrf.mxu0
        %v2169 = vadd.f32 0.0, %v2168
        %v2170 = vpop.f32.mrf.mxu0
        %v2171 = vpop.f32.mrf.mxu0
        %v2172 = vadd.f32 0.0, %v2171
        %v2173 = vpop.f32.mrf.mxu0
        %2174 = vdwg.mxu0
        %2175 = vmatprep.subr.bf16.mxu0 0
        %2176 = vmatpush1.bf16.msra.mxu0 0
        %2177 = vmatprep.subr.bf16.mxu0 0
        %2178 = vmatpush1.bf16.msra.mxu0 0
        %2179 = vmatprep.subr.bf16.mxu0 0
        %2180 = vmatpush1.bf16.msra.mxu0 0
        %2181 = vmatprep.subr.bf16.mxu0 0
        %2182 = vmatpush1.bf16.msra.mxu0 0
        %2183 = vmatprep.subr.bf16.mxu0 0
        %2184 = vmatpush1.bf16.msra.mxu0 0
        %2185 = vmatprep.subr.bf16.mxu0 0
        %2186 = vmatpush1.bf16.msra.mxu0 0
        %2187 = vmatprep.subr.bf16.mxu0 0
        %2188 = vmatpush1.bf16.msra.mxu0 %v2132
        %2189 = vmatprep.subr.bf16.mxu0 0
        %2190 = vmatpush1.bf16.msra.mxu0 %v2128
        %2191 = vmatprep.subr.bf16.mxu0 0
        %2192 = vmatpush2.bf16.msra.mxu0 0
        %2193 = vmatprep.subr.bf16.mxu0 0
        %2194 = vmatpush2.bf16.msra.mxu0 0
        %2195 = vmatprep.subr.bf16.mxu0 0
        %2196 = vmatpush2.bf16.msra.mxu0 0
        %2197 = vmatprep.subr.bf16.mxu0 0
        %2198 = vmatpush2.bf16.msra.mxu0 0
        %2199 = vmatprep.subr.bf16.mxu0 0
        %2200 = vmatpush2.bf16.msra.mxu0 0
        %2201 = vmatprep.subr.bf16.mxu0 0
        %2202 = vmatpush2.bf16.msra.mxu0 0
        %2203 = vmatprep.subr.bf16.mxu0 0
        %2204 = vmatpush2.bf16.msra.mxu0 0
        %2205 = vmatprep.subr.bf16.mxu0 0
        %2206 = vmatpush2.bf16.msra.mxu0 0
        %2207 = vmatprep.mubr.bf16.mxu0 0
        %2208 = vmatmul.mubr.bf16.gmra.mxu0 %v521
        %v2209 = vpop.f32.mrf.mxu0
        %v2210 = vadd.f32 0.0, %v2209
        %v2211 = vpop.f32.mrf.mxu0
        %v2212 = vpop.f32.mrf.mxu0
        %v2213 = vadd.f32 0.0, %v2212
        %v2214 = vpop.f32.mrf.mxu0
        %2215 = vdwg.mxu0
        %2216 = vmatprep.subr.bf16.mxu0 0
        %2217 = vmatpush1.bf16.msra.mxu0 0
        %2218 = vmatprep.subr.bf16.mxu0 0
        %2219 = vmatpush1.bf16.msra.mxu0 0
        %2220 = vmatprep.subr.bf16.mxu0 0
        %2221 = vmatpush1.bf16.msra.mxu0 0
        %2222 = vmatprep.subr.bf16.mxu0 0
        %2223 = vmatpush1.bf16.msra.mxu0 0
        %2224 = vmatprep.subr.bf16.mxu0 0
        %2225 = vmatpush1.bf16.msra.mxu0 0
        %2226 = vmatprep.subr.bf16.mxu0 0
        %2227 = vmatpush1.bf16.msra.mxu0 0
        %2228 = vmatprep.subr.bf16.mxu0 0
        %2229 = vmatpush1.bf16.msra.mxu0 %v2132
        %2230 = vmatprep.subr.bf16.mxu0 0
        %2231 = vmatpush1.bf16.msra.mxu0 %v2128
        %2232 = vmatprep.subr.bf16.mxu0 0
        %2233 = vmatpush2.bf16.msra.mxu0 0
        %2234 = vmatprep.subr.bf16.mxu0 0
        %2235 = vmatpush2.bf16.msra.mxu0 0
        %2236 = vmatprep.subr.bf16.mxu0 0
        %2237 = vmatpush2.bf16.msra.mxu0 0
        %2238 = vmatprep.subr.bf16.mxu0 0
        %2239 = vmatpush2.bf16.msra.mxu0 0
        %2240 = vmatprep.subr.bf16.mxu0 0
        %2241 = vmatpush2.bf16.msra.mxu0 0
        %2242 = vmatprep.subr.bf16.mxu0 0
        %2243 = vmatpush2.bf16.msra.mxu0 0
        %2244 = vmatprep.subr.bf16.mxu0 0
        %2245 = vmatpush2.bf16.msra.mxu0 0
        %2246 = vmatprep.subr.bf16.mxu0 0
        %2247 = vmatpush2.bf16.msra.mxu0 0
        %2248 = vmatprep.mubr.bf16.mxu0 0
        %2249 = vmatmul.mubr.bf16.gmra.mxu0 %v565
        %v2250 = vpop.f32.mrf.mxu0
        %v2251 = vadd.f32 0.0, %v2250
        %v2252 = vpop.f32.mrf.mxu0
        %v2253 = vpop.f32.mrf.mxu0
        %v2254 = vadd.f32 0.0, %v2253
        %v2255 = vpop.f32.mrf.mxu0
        %2256 = vdwg.mxu0
        %2257 = vmatprep.subr.bf16.mxu0 0
        %2258 = vmatpush1.bf16.msra.mxu0 0
        %2259 = vmatprep.subr.bf16.mxu0 0
        %2260 = vmatpush1.bf16.msra.mxu0 0
        %2261 = vmatprep.subr.bf16.mxu0 0
        %2262 = vmatpush1.bf16.msra.mxu0 0
        %2263 = vmatprep.subr.bf16.mxu0 0
        %2264 = vmatpush1.bf16.msra.mxu0 0
        %2265 = vmatprep.subr.bf16.mxu0 0
        %2266 = vmatpush1.bf16.msra.mxu0 0
        %2267 = vmatprep.subr.bf16.mxu0 0
        %2268 = vmatpush1.bf16.msra.mxu0 0
        %2269 = vmatprep.subr.bf16.mxu0 0
        %2270 = vmatpush1.bf16.msra.mxu0 %v2132
        %2271 = vmatprep.subr.bf16.mxu0 0
        %2272 = vmatpush1.bf16.msra.mxu0 %v2128
        %2273 = vmatprep.subr.bf16.mxu0 0
        %2274 = vmatpush2.bf16.msra.mxu0 0
        %2275 = vmatprep.subr.bf16.mxu0 0
        %2276 = vmatpush2.bf16.msra.mxu0 0
        %2277 = vmatprep.subr.bf16.mxu0 0
        %2278 = vmatpush2.bf16.msra.mxu0 0
        %2279 = vmatprep.subr.bf16.mxu0 0
        %2280 = vmatpush2.bf16.msra.mxu0 0
        %2281 = vmatprep.subr.bf16.mxu0 0
        %2282 = vmatpush2.bf16.msra.mxu0 0
        %2283 = vmatprep.subr.bf16.mxu0 0
        %2284 = vmatpush2.bf16.msra.mxu0 0
        %2285 = vmatprep.subr.bf16.mxu0 0
        %2286 = vmatpush2.bf16.msra.mxu0 0
        %2287 = vmatprep.subr.bf16.mxu0 0
        %2288 = vmatpush2.bf16.msra.mxu0 0
        %2289 = vmatprep.mubr.bf16.mxu0 0
        %2290 = vmatmul.mubr.bf16.gmra.mxu0 %v609
        %v2291 = vpop.f32.mrf.mxu0
        %v2292 = vadd.f32 0.0, %v2291
        %v2293 = vpop.f32.mrf.mxu0
        %v2294 = vpop.f32.mrf.mxu0
        %v2295 = vadd.f32 0.0, %v2294
        %v2296 = vpop.f32.mrf.mxu0
        %2297 = vdwg.mxu0
        %2298 = vmatprep.subr.bf16.mxu0 0
        %2299 = vmatpush1.bf16.msra.mxu0 0
        %2300 = vmatprep.subr.bf16.mxu0 0
        %2301 = vmatpush1.bf16.msra.mxu0 0
        %2302 = vmatprep.subr.bf16.mxu0 0
        %2303 = vmatpush1.bf16.msra.mxu0 0
        %2304 = vmatprep.subr.bf16.mxu0 0
        %2305 = vmatpush1.bf16.msra.mxu0 0
        %2306 = vmatprep.subr.bf16.mxu0 0
        %2307 = vmatpush1.bf16.msra.mxu0 0
        %2308 = vmatprep.subr.bf16.mxu0 0
        %2309 = vmatpush1.bf16.msra.mxu0 0
        %2310 = vmatprep.subr.bf16.mxu0 0
        %2311 = vmatpush1.bf16.msra.mxu0 %v2132
        %2312 = vmatprep.subr.bf16.mxu0 0
        %2313 = vmatpush1.bf16.msra.mxu0 %v2128
        %2314 = vmatprep.subr.bf16.mxu0 0
        %2315 = vmatpush2.bf16.msra.mxu0 0
        %2316 = vmatprep.subr.bf16.mxu0 0
        %2317 = vmatpush2.bf16.msra.mxu0 0
        %2318 = vmatprep.subr.bf16.mxu0 0
        %2319 = vmatpush2.bf16.msra.mxu0 0
        %2320 = vmatprep.subr.bf16.mxu0 0
        %2321 = vmatpush2.bf16.msra.mxu0 0
        %2322 = vmatprep.subr.bf16.mxu0 0
        %2323 = vmatpush2.bf16.msra.mxu0 0
        %2324 = vmatprep.subr.bf16.mxu0 0
        %2325 = vmatpush2.bf16.msra.mxu0 0
        %2326 = vmatprep.subr.bf16.mxu0 0
        %2327 = vmatpush2.bf16.msra.mxu0 0
        %2328 = vmatprep.subr.bf16.mxu0 0
        %2329 = vmatpush2.bf16.msra.mxu0 0
        %2330 = vmatprep.mubr.bf16.mxu0 0
        %2331 = vmatmul.mubr.bf16.gmra.mxu0 %v653
        %v2332 = vpop.f32.mrf.mxu0
        %v2333 = vadd.f32 0.0, %v2332
        %v2334 = vpop.f32.mrf.mxu0
        %v2335 = vpop.f32.mrf.mxu0
        %v2336 = vadd.f32 0.0, %v2335
        %v2337 = vpop.f32.mrf.mxu0
        %2338 = vdwg.mxu0
        %2339 = vmatprep.subr.bf16.mxu0 0
        %2340 = vmatpush1.bf16.msra.mxu0 0
        %2341 = vmatprep.subr.bf16.mxu0 0
        %2342 = vmatpush1.bf16.msra.mxu0 0
        %2343 = vmatprep.subr.bf16.mxu0 0
        %2344 = vmatpush1.bf16.msra.mxu0 0
        %2345 = vmatprep.subr.bf16.mxu0 0
        %2346 = vmatpush1.bf16.msra.mxu0 0
        %2347 = vmatprep.subr.bf16.mxu0 0
        %2348 = vmatpush1.bf16.msra.mxu0 0
        %2349 = vmatprep.subr.bf16.mxu0 0
        %2350 = vmatpush1.bf16.msra.mxu0 0
        %2351 = vmatprep.subr.bf16.mxu0 0
        %2352 = vmatpush1.bf16.msra.mxu0 %v2132
        %2353 = vmatprep.subr.bf16.mxu0 0
        %2354 = vmatpush1.bf16.msra.mxu0 %v2128
        %2355 = vmatprep.subr.bf16.mxu0 0
        %2356 = vmatpush2.bf16.msra.mxu0 0
        %2357 = vmatprep.subr.bf16.mxu0 0
        %2358 = vmatpush2.bf16.msra.mxu0 0
        %2359 = vmatprep.subr.bf16.mxu0 0
        %2360 = vmatpush2.bf16.msra.mxu0 0
        %2361 = vmatprep.subr.bf16.mxu0 0
        %2362 = vmatpush2.bf16.msra.mxu0 0
        %2363 = vmatprep.subr.bf16.mxu0 0
        %2364 = vmatpush2.bf16.msra.mxu0 0
        %2365 = vmatprep.subr.bf16.mxu0 0
        %2366 = vmatpush2.bf16.msra.mxu0 0
        %2367 = vmatprep.subr.bf16.mxu0 0
        %2368 = vmatpush2.bf16.msra.mxu0 0
        %2369 = vmatprep.subr.bf16.mxu0 0
        %2370 = vmatpush2.bf16.msra.mxu0 0
        %2371 = vmatprep.mubr.bf16.mxu0 0
        %2372 = vmatmul.mubr.bf16.gmra.mxu0 %v697
        %v2373 = vpop.f32.mrf.mxu0
        %v2374 = vadd.f32 0.0, %v2373
        %v2375 = vpop.f32.mrf.mxu0
        %v2376 = vpop.f32.mrf.mxu0
        %v2377 = vadd.f32 0.0, %v2376
        %v2378 = vpop.f32.mrf.mxu0
        %2379 = vdwg.mxu0
        %2380 = vmatprep.subr.bf16.mxu0 0
        %2381 = vmatpush1.bf16.msra.mxu0 0
        %2382 = vmatprep.subr.bf16.mxu0 0
        %2383 = vmatpush1.bf16.msra.mxu0 0
        %2384 = vmatprep.subr.bf16.mxu0 0
        %2385 = vmatpush1.bf16.msra.mxu0 0
        %2386 = vmatprep.subr.bf16.mxu0 0
        %2387 = vmatpush1.bf16.msra.mxu0 0
        %2388 = vmatprep.subr.bf16.mxu0 0
        %2389 = vmatpush1.bf16.msra.mxu0 0
        %2390 = vmatprep.subr.bf16.mxu0 0
        %2391 = vmatpush1.bf16.msra.mxu0 0
        %2392 = vmatprep.subr.bf16.mxu0 0
        %2393 = vmatpush1.bf16.msra.mxu0 %v2132
        %2394 = vmatprep.subr.bf16.mxu0 0
        %2395 = vmatpush1.bf16.msra.mxu0 %v2128
        %2396 = vmatprep.subr.bf16.mxu0 0
        %2397 = vmatpush2.bf16.msra.mxu0 0
        %2398 = vmatprep.subr.bf16.mxu0 0
        %2399 = vmatpush2.bf16.msra.mxu0 0
        %2400 = vmatprep.subr.bf16.mxu0 0
        %2401 = vmatpush2.bf16.msra.mxu0 0
        %2402 = vmatprep.subr.bf16.mxu0 0
        %2403 = vmatpush2.bf16.msra.mxu0 0
        %2404 = vmatprep.subr.bf16.mxu0 0
        %2405 = vmatpush2.bf16.msra.mxu0 0
        %2406 = vmatprep.subr.bf16.mxu0 0
        %2407 = vmatpush2.bf16.msra.mxu0 0
        %2408 = vmatprep.subr.bf16.mxu0 0
        %2409 = vmatpush2.bf16.msra.mxu0 0
        %2410 = vmatprep.subr.bf16.mxu0 0
        %2411 = vmatpush2.bf16.msra.mxu0 0
        %2412 = vmatprep.mubr.bf16.mxu0 0
        %2413 = vmatmul.mubr.bf16.gmra.mxu0 %v741
        %v2414 = vpop.f32.mrf.mxu0
        %v2415 = vadd.f32 0.0, %v2414
        %v2416 = vpop.f32.mrf.mxu0
        %v2417 = vpop.f32.mrf.mxu0
        %v2418 = vadd.f32 0.0, %v2417
        %v2419 = vpop.f32.mrf.mxu0
        %2420 = vdwg.mxu0
        %2421 = vmatprep.subr.bf16.mxu0 0
        %2422 = vmatpush1.bf16.msra.mxu0 0
        %2423 = vmatprep.subr.bf16.mxu0 0
        %2424 = vmatpush1.bf16.msra.mxu0 0
        %2425 = vmatprep.subr.bf16.mxu0 0
        %2426 = vmatpush1.bf16.msra.mxu0 0
        %2427 = vmatprep.subr.bf16.mxu0 0
        %2428 = vmatpush1.bf16.msra.mxu0 0
        %2429 = vmatprep.subr.bf16.mxu0 0
        %2430 = vmatpush1.bf16.msra.mxu0 0
        %2431 = vmatprep.subr.bf16.mxu0 0
        %2432 = vmatpush1.bf16.msra.mxu0 0
        %2433 = vmatprep.subr.bf16.mxu0 0
        %2434 = vmatpush1.bf16.msra.mxu0 %v2132
        %2435 = vmatprep.subr.bf16.mxu0 0
        %2436 = vmatpush1.bf16.msra.mxu0 %v2128
        %2437 = vmatprep.subr.bf16.mxu0 0
        %2438 = vmatpush2.bf16.msra.mxu0 0
        %2439 = vmatprep.subr.bf16.mxu0 0
        %2440 = vmatpush2.bf16.msra.mxu0 0
        %2441 = vmatprep.subr.bf16.mxu0 0
        %2442 = vmatpush2.bf16.msra.mxu0 0
        %2443 = vmatprep.subr.bf16.mxu0 0
        %2444 = vmatpush2.bf16.msra.mxu0 0
        %2445 = vmatprep.subr.bf16.mxu0 0
        %2446 = vmatpush2.bf16.msra.mxu0 0
        %2447 = vmatprep.subr.bf16.mxu0 0
        %2448 = vmatpush2.bf16.msra.mxu0 0
        %2449 = vmatprep.subr.bf16.mxu0 0
        %2450 = vmatpush2.bf16.msra.mxu0 0
        %2451 = vmatprep.subr.bf16.mxu0 0
        %2452 = vmatpush2.bf16.msra.mxu0 0
        %2453 = vmatprep.mubr.bf16.mxu0 0
        %2454 = vmatmul.mubr.bf16.gmra.mxu0 %v1600
        %v2455 = vpop.f32.mrf.mxu0
        %v2456 = vadd.f32 0.0, %v2455
        %v2457 = vpop.f32.mrf.mxu0
        %v2458 = vpop.f32.mrf.mxu0
        %v2459 = vadd.f32 0.0, %v2458
        %v2460 = vpop.f32.mrf.mxu0
        %2461 = vdwg.mxu0
        %2462 = vmatprep.subr.bf16.mxu0 0
        %2463 = vmatpush1.bf16.msra.mxu0 0
        %2464 = vmatprep.subr.bf16.mxu0 0
        %2465 = vmatpush1.bf16.msra.mxu0 0
        %2466 = vmatprep.subr.bf16.mxu0 0
        %2467 = vmatpush1.bf16.msra.mxu0 0
        %2468 = vmatprep.subr.bf16.mxu0 0
        %2469 = vmatpush1.bf16.msra.mxu0 0
        %2470 = vmatprep.subr.bf16.mxu0 0
        %2471 = vmatpush1.bf16.msra.mxu0 0
        %2472 = vmatprep.subr.bf16.mxu0 0
        %2473 = vmatpush1.bf16.msra.mxu0 0
        %2474 = vmatprep.subr.bf16.mxu0 0
        %2475 = vmatpush1.bf16.msra.mxu0 %v2132
        %2476 = vmatprep.subr.bf16.mxu0 0
        %2477 = vmatpush1.bf16.msra.mxu0 %v2128
        %2478 = vmatprep.subr.bf16.mxu0 0
        %2479 = vmatpush2.bf16.msra.mxu0 0
        %2480 = vmatprep.subr.bf16.mxu0 0
        %2481 = vmatpush2.bf16.msra.mxu0 0
        %2482 = vmatprep.subr.bf16.mxu0 0
        %2483 = vmatpush2.bf16.msra.mxu0 0
        %2484 = vmatprep.subr.bf16.mxu0 0
        %2485 = vmatpush2.bf16.msra.mxu0 0
        %2486 = vmatprep.subr.bf16.mxu0 0
        %2487 = vmatpush2.bf16.msra.mxu0 0
        %2488 = vmatprep.subr.bf16.mxu0 0
        %2489 = vmatpush2.bf16.msra.mxu0 0
        %2490 = vmatprep.subr.bf16.mxu0 0
        %2491 = vmatpush2.bf16.msra.mxu0 0
        %2492 = vmatprep.subr.bf16.mxu0 0
        %2493 = vmatpush2.bf16.msra.mxu0 0
        %2494 = vmatprep.mubr.bf16.mxu0 0
        %2495 = vmatmul.mubr.bf16.gmra.mxu0 %v2052
        %v2496 = vpop.f32.mrf.mxu0
        %v2497 = vadd.f32 0.0, %v2496
        %v2498 = vpop.f32.mrf.mxu0
        %v2499 = vpop.f32.mrf.mxu0
        %v2500 = vadd.f32 0.0, %v2499
        %v2501 = vpop.f32.mrf.mxu0
        %2502 = vdwg.mxu0
        %v2504 = vsel %vm339, %v318, 0
        %2506 = vmatprep.subr.bf16.mxu0 0
        %2507 = vmatpush1.bf16.msra.mxu0 0
        %2508 = vmatprep.subr.bf16.mxu0 0
        %2509 = vmatpush1.bf16.msra.mxu0 0
        %2510 = vmatprep.subr.bf16.mxu0 0
        %2511 = vmatpush1.bf16.msra.mxu0 0
        %2512 = vmatprep.subr.bf16.mxu0 0
        %2513 = vmatpush1.bf16.msra.mxu0 0
        %2514 = vmatprep.subr.bf16.mxu0 0
        %2515 = vmatpush1.bf16.msra.mxu0 0
        %2516 = vmatprep.subr.bf16.mxu0 0
        %2517 = vmatpush1.bf16.msra.mxu0 0
        %2518 = vmatprep.subr.bf16.mxu0 0
        %2519 = vmatpush1.bf16.msra.mxu0 %v2132
        %2520 = vmatprep.subr.bf16.mxu0 0
        %2521 = vmatpush1.bf16.msra.mxu0 %v2128
        %2522 = vmatprep.subr.bf16.mxu0 0
        %2523 = vmatpush2.bf16.msra.mxu0 0
        %2524 = vmatprep.subr.bf16.mxu0 0
        %2525 = vmatpush2.bf16.msra.mxu0 0
        %2526 = vmatprep.subr.bf16.mxu0 0
        %2527 = vmatpush2.bf16.msra.mxu0 0
        %2528 = vmatprep.subr.bf16.mxu0 0
        %2529 = vmatpush2.bf16.msra.mxu0 0
        %2530 = vmatprep.subr.bf16.mxu0 0
        %2531 = vmatpush2.bf16.msra.mxu0 0
        %2532 = vmatprep.subr.bf16.mxu0 0
        %2533 = vmatpush2.bf16.msra.mxu0 0
        %2534 = vmatprep.subr.bf16.mxu0 0
        %2535 = vmatpush2.bf16.msra.mxu0 0
        %2536 = vmatprep.subr.bf16.mxu0 0
        %2537 = vmatpush2.bf16.msra.mxu0 0
        %2538 = vmatprep.mubr.bf16.mxu0 0
        %2539 = vmatmul.mubr.bf16.gmra.mxu0 %v2504
        %v2540 = vpop.f32.mrf.mxu0
        %v2541 = vadd.f32 0.0, %v2540
        %v2542 = vpop.f32.mrf.mxu0
        %v2543 = vpop.f32.mrf.mxu0
        %v2544 = vadd.f32 0.0, %v2543
        %v2545 = vpop.f32.mrf.mxu0
        %2546 = vdwg.mxu0
        %v2547 = vadd.f32 %v2095, %v2169
        %v2548 = vadd.f32 %v2096, %v2172
        %v2549 = vadd.f32 %v2097, %v2210
        %v2550 = vadd.f32 %v2098, %v2213
        %v2551 = vadd.f32 %v2099, %v2251
        %v2552 = vadd.f32 %v2100, %v2254
        %v2553 = vadd.f32 %v2101, %v2292
        %v2554 = vadd.f32 %v2102, %v2295
        %v2555 = vadd.f32 %v2103, %v2333
        %v2556 = vadd.f32 %v2104, %v2336
        %v2557 = vadd.f32 %v2105, %v2374
        %v2558 = vadd.f32 %v2106, %v2377
        %v2559 = vadd.f32 %v2107, %v2415
        %v2560 = vadd.f32 %v2108, %v2418
        %v2561 = vadd.f32 %v2109, %v2456
        %v2562 = vadd.f32 %v2110, %v2459
        %v2563 = vadd.f32 %v2111, %v2497
        %v2564 = vadd.f32 %v2112, %v2500
        %v2565 = vadd.f32 %v2113, %v2541
        %v2566 = vadd.f32 %v2114, %v2544
        %v2567 = vld [vmem:[%s2] sm:$0x1]
        %v2569 = vlaneseq
        %v2570 = vshrl.u32 %v2569, 7
        %v2571 = vsub.s32 0, %v2570
        %v2572 = vrot.slane %v2567, %v2571
        %v2574 = vadd.f32 %v2547, %v2572
        %v2575 = vadd.f32 %v2548, %v2572
        %v2576 = vadd.f32 %v2549, %v2572
        %v2577 = vadd.f32 %v2550, %v2572
        %v2578 = vadd.f32 %v2551, %v2572
        %v2579 = vadd.f32 %v2552, %v2572
        %v2580 = vadd.f32 %v2553, %v2572
        %v2581 = vadd.f32 %v2554, %v2572
        %v2582 = vadd.f32 %v2555, %v2572
        %v2583 = vadd.f32 %v2556, %v2572
        %v2584 = vadd.f32 %v2557, %v2572
        %v2585 = vadd.f32 %v2558, %v2572
        %v2586 = vadd.f32 %v2559, %v2572
        %v2587 = vadd.f32 %v2560, %v2572
        %v2588 = vadd.f32 %v2561, %v2572
        %v2589 = vadd.f32 %v2562, %v2572
        %v2590 = vadd.f32 %v2563, %v2572
        %v2591 = vadd.f32 %v2564, %v2572
        %v2592 = vadd.f32 %v2565, %v2572
        %v2593 = vadd.f32 %v2566, %v2572
        %v2594 = vmax.f32 %v2574, 0.0
        %v2595 = vmax.f32 %v2575, 0.0
        %v2596 = vmax.f32 %v2576, 0.0
        %v2597 = vmax.f32 %v2577, 0.0
        %v2598 = vmax.f32 %v2578, 0.0
        %v2599 = vmax.f32 %v2579, 0.0
        %v2600 = vmax.f32 %v2580, 0.0
        %v2601 = vmax.f32 %v2581, 0.0
        %v2602 = vmax.f32 %v2582, 0.0
        %v2603 = vmax.f32 %v2583, 0.0
        %v2604 = vmax.f32 %v2584, 0.0
        %v2605 = vmax.f32 %v2585, 0.0
        %v2606 = vmax.f32 %v2586, 0.0
        %v2607 = vmax.f32 %v2587, 0.0
        %v2608 = vmax.f32 %v2588, 0.0
        %v2609 = vmax.f32 %v2589, 0.0
        %v2610 = vmax.f32 %v2590, 0.0
        %v2611 = vmax.f32 %v2591, 0.0
        %v2612 = vmax.f32 %v2592, 0.0
        %v2613 = vmax.f32 %v2593, 0.0
        %v2615 = vrot.slane %v2594, 1
        %v2617 = vmax.f32 %v2594, %v2615
        %v2619 = vrot.slane %v2596, 1
        %v2621 = vmax.f32 %v2596, %v2619
        %v2622 = vmax.f32 %v2617, %v2621
        %v2623 = vpack.c.bf16 %v2622, %v2622
        %v2624 = vld [vmem:[%s3] sm:$0xf]
        %v2625 = vld [vmem:[%s3 + $0x4] sm:$0xf]
        %s2626 = scalar_lea.vmem %s3, 8
        %v2627 = vld [vmem:[%s2626] sm:$0xf]
        %v2628 = vld [vmem:[%s2626 + $0x4] sm:$0xf]
        %v2630 = vrot.slane %v2623, 1
        %v2633 = vunpack.c.l.b16 %v2627
        %v2634 = vunpack.c.l.b16 %v2628
        %v2635 = vpack.c.b16 %v2634, %v2633
        %vm2637 = vcmask 130048
        %v2639 = vsel %vm2637, %v2630, 0
        %2641 = vmatprep.subr.bf16.mxu0 0
        %2642 = vmatpush1.bf16.msra.mxu0 0
        %2643 = vmatprep.subr.bf16.mxu0 0
        %2644 = vmatpush1.bf16.msra.mxu0 0
        %2645 = vmatprep.subr.bf16.mxu0 0
        %2646 = vmatpush1.bf16.msra.mxu0 0
        %2647 = vmatprep.subr.bf16.mxu0 0
        %2648 = vmatpush1.bf16.msra.mxu0 0
        %2649 = vmatprep.subr.bf16.mxu0 0
        %2650 = vmatpush1.bf16.msra.mxu0 0
        %2651 = vmatprep.subr.bf16.mxu0 0
        %2652 = vmatpush1.bf16.msra.mxu0 0
        %2653 = vmatprep.subr.bf16.mxu0 0
        %2654 = vmatpush1.bf16.msra.mxu0 0
        %2655 = vmatprep.subr.bf16.mxu0 0
        %2656 = vmatpush1.bf16.msra.mxu0 %v2635
        %2657 = vmatprep.subr.bf16.mxu0 0
        %2658 = vmatpush2.bf16.msra.mxu0 0
        %2659 = vmatprep.subr.bf16.mxu0 0
        %2660 = vmatpush2.bf16.msra.mxu0 0
        %2661 = vmatprep.subr.bf16.mxu0 0
        %2662 = vmatpush2.bf16.msra.mxu0 0
        %2663 = vmatprep.subr.bf16.mxu0 0
        %2664 = vmatpush2.bf16.msra.mxu0 0
        %2665 = vmatprep.subr.bf16.mxu0 0
        %2666 = vmatpush2.bf16.msra.mxu0 0
        %2667 = vmatprep.subr.bf16.mxu0 0
        %2668 = vmatpush2.bf16.msra.mxu0 0
        %2669 = vmatprep.subr.bf16.mxu0 0
        %2670 = vmatpush2.bf16.msra.mxu0 0
        %2671 = vmatprep.subr.bf16.mxu0 0
        %2672 = vmatpush2.bf16.msra.mxu0 0
        %2673 = vmatprep.mubr.bf16.mxu0 0
        %2674 = vmatmul.mubr.bf16.gmra.mxu0 %v2639
        %v2675 = vpop.f32.mrf.mxu0
        %v2676 = vadd.f32 0.0, %v2675
        %v2677 = vpop.f32.mrf.mxu0
        %v2678 = vpop.f32.mrf.mxu0
        %v2679 = vpop.f32.mrf.mxu0
        %2680 = vdwg.mxu0
        %v2683 = vunpack.c.l.b16 %v2624
        %v2684 = vunpack.c.l.b16 %v2625
        %v2685 = vpack.c.b16 %v2684, %v2683
        %v2688 = vsel %vm2637, %v2623, 0
        %2690 = vmatprep.subr.bf16.mxu0 0
        %2691 = vmatpush1.bf16.msra.mxu0 0
        %2692 = vmatprep.subr.bf16.mxu0 0
        %2693 = vmatpush1.bf16.msra.mxu0 0
        %2694 = vmatprep.subr.bf16.mxu0 0
        %2695 = vmatpush1.bf16.msra.mxu0 0
        %2696 = vmatprep.subr.bf16.mxu0 0
        %2697 = vmatpush1.bf16.msra.mxu0 0
        %2698 = vmatprep.subr.bf16.mxu0 0
        %2699 = vmatpush1.bf16.msra.mxu0 0
        %2700 = vmatprep.subr.bf16.mxu0 0
        %2701 = vmatpush1.bf16.msra.mxu0 0
        %2702 = vmatprep.subr.bf16.mxu0 0
        %2703 = vmatpush1.bf16.msra.mxu0 0
        %2704 = vmatprep.subr.bf16.mxu0 0
        %2705 = vmatpush1.bf16.msra.mxu0 %v2685
        %2706 = vmatprep.subr.bf16.mxu0 0
        %2707 = vmatpush2.bf16.msra.mxu0 0
        %2708 = vmatprep.subr.bf16.mxu0 0
        %2709 = vmatpush2.bf16.msra.mxu0 0
        %2710 = vmatprep.subr.bf16.mxu0 0
        %2711 = vmatpush2.bf16.msra.mxu0 0
        %2712 = vmatprep.subr.bf16.mxu0 0
        %2713 = vmatpush2.bf16.msra.mxu0 0
        %2714 = vmatprep.subr.bf16.mxu0 0
        %2715 = vmatpush2.bf16.msra.mxu0 0
        %2716 = vmatprep.subr.bf16.mxu0 0
        %2717 = vmatpush2.bf16.msra.mxu0 0
        %2718 = vmatprep.subr.bf16.mxu0 0
        %2719 = vmatpush2.bf16.msra.mxu0 0
        %2720 = vmatprep.subr.bf16.mxu0 0
        %2721 = vmatpush2.bf16.msra.mxu0 0
        %2722 = vmatprep.mubr.bf16.mxu0 0
        %2723 = vmatmul.mubr.bf16.gmra.mxu0 %v2688
        %v2724 = vpop.f32.mrf.mxu0
        %v2725 = vadd.f32 %v2676, %v2724
        %v2726 = vpop.f32.mrf.mxu0
        %v2727 = vpop.f32.mrf.mxu0
        %v2728 = vpop.f32.mrf.mxu0
        %2729 = vdwg.mxu0
        %s2730 = scalar_lea.vmem %s3, 16
        %v2731 = vld [vmem:[%s2730] sm:$0xf]
        %v2732 = vld [vmem:[%s2730 + $0x4] sm:$0xf]
        %v2733 = vrot.slane %v2623, 2
        %v2736 = vunpack.c.l.b16 %v2731
        %v2737 = vunpack.c.l.b16 %v2732
        %v2738 = vpack.c.b16 %v2737, %v2736
        %v2741 = vsel %vm2637, %v2733, 0
        %2743 = vmatprep.subr.bf16.mxu0 0
        %2744 = vmatpush1.bf16.msra.mxu0 0
        %2745 = vmatprep.subr.bf16.mxu0 0
        %2746 = vmatpush1.bf16.msra.mxu0 0
        %2747 = vmatprep.subr.bf16.mxu0 0
        %2748 = vmatpush1.bf16.msra.mxu0 0
        %2749 = vmatprep.subr.bf16.mxu0 0
        %2750 = vmatpush1.bf16.msra.mxu0 0
        %2751 = vmatprep.subr.bf16.mxu0 0
        %2752 = vmatpush1.bf16.msra.mxu0 0
        %2753 = vmatprep.subr.bf16.mxu0 0
        %2754 = vmatpush1.bf16.msra.mxu0 0
        %2755 = vmatprep.subr.bf16.mxu0 0
        %2756 = vmatpush1.bf16.msra.mxu0 0
        %2757 = vmatprep.subr.bf16.mxu0 0
        %2758 = vmatpush1.bf16.msra.mxu0 %v2738
        %2759 = vmatprep.subr.bf16.mxu0 0
        %2760 = vmatpush2.bf16.msra.mxu0 0
        %2761 = vmatprep.subr.bf16.mxu0 0
        %2762 = vmatpush2.bf16.msra.mxu0 0
        %2763 = vmatprep.subr.bf16.mxu0 0
        %2764 = vmatpush2.bf16.msra.mxu0 0
        %2765 = vmatprep.subr.bf16.mxu0 0
        %2766 = vmatpush2.bf16.msra.mxu0 0
        %2767 = vmatprep.subr.bf16.mxu0 0
        %2768 = vmatpush2.bf16.msra.mxu0 0
        %2769 = vmatprep.subr.bf16.mxu0 0
        %2770 = vmatpush2.bf16.msra.mxu0 0
        %2771 = vmatprep.subr.bf16.mxu0 0
        %2772 = vmatpush2.bf16.msra.mxu0 0
        %2773 = vmatprep.subr.bf16.mxu0 0
        %2774 = vmatpush2.bf16.msra.mxu0 0
        %2775 = vmatprep.mubr.bf16.mxu0 0
        %2776 = vmatmul.mubr.bf16.gmra.mxu0 %v2741
        %v2777 = vpop.f32.mrf.mxu0
        %v2778 = vadd.f32 0.0, %v2777
        %v2779 = vpop.f32.mrf.mxu0
        %v2780 = vpop.f32.mrf.mxu0
        %v2781 = vpop.f32.mrf.mxu0
        %2782 = vdwg.mxu0
        %v2783 = vadd.f32 %v2725, %v2778
        %s2784 = scalar_lea.vmem %s3, 24
        %v2785 = vld [vmem:[%s2784] sm:$0xf]
        %v2786 = vld [vmem:[%s2784 + $0x4] sm:$0xf]
        %v2787 = vrot.slane %v2623, 3
        %v2790 = vunpack.c.l.b16 %v2785
        %v2791 = vunpack.c.l.b16 %v2786
        %v2792 = vpack.c.b16 %v2791, %v2790
        %v2795 = vsel %vm2637, %v2787, 0
        %2797 = vmatprep.subr.bf16.mxu0 0
        %2798 = vmatpush1.bf16.msra.mxu0 0
        %2799 = vmatprep.subr.bf16.mxu0 0
        %2800 = vmatpush1.bf16.msra.mxu0 0
        %2801 = vmatprep.subr.bf16.mxu0 0
        %2802 = vmatpush1.bf16.msra.mxu0 0
        %2803 = vmatprep.subr.bf16.mxu0 0
        %2804 = vmatpush1.bf16.msra.mxu0 0
        %2805 = vmatprep.subr.bf16.mxu0 0
        %2806 = vmatpush1.bf16.msra.mxu0 0
        %2807 = vmatprep.subr.bf16.mxu0 0
        %2808 = vmatpush1.bf16.msra.mxu0 0
        %2809 = vmatprep.subr.bf16.mxu0 0
        %2810 = vmatpush1.bf16.msra.mxu0 0
        %2811 = vmatprep.subr.bf16.mxu0 0
        %2812 = vmatpush1.bf16.msra.mxu0 %v2792
        %2813 = vmatprep.subr.bf16.mxu0 0
        %2814 = vmatpush2.bf16.msra.mxu0 0
        %2815 = vmatprep.subr.bf16.mxu0 0
        %2816 = vmatpush2.bf16.msra.mxu0 0
        %2817 = vmatprep.subr.bf16.mxu0 0
        %2818 = vmatpush2.bf16.msra.mxu0 0
        %2819 = vmatprep.subr.bf16.mxu0 0
        %2820 = vmatpush2.bf16.msra.mxu0 0
        %2821 = vmatprep.subr.bf16.mxu0 0
        %2822 = vmatpush2.bf16.msra.mxu0 0
        %2823 = vmatprep.subr.bf16.mxu0 0
        %2824 = vmatpush2.bf16.msra.mxu0 0
        %2825 = vmatprep.subr.bf16.mxu0 0
        %2826 = vmatpush2.bf16.msra.mxu0 0
        %2827 = vmatprep.subr.bf16.mxu0 0
        %2828 = vmatpush2.bf16.msra.mxu0 0
        %2829 = vmatprep.mubr.bf16.mxu0 0
        %2830 = vmatmul.mubr.bf16.gmra.mxu0 %v2795
        %v2831 = vpop.f32.mrf.mxu0
        %v2832 = vadd.f32 0.0, %v2831
        %v2833 = vpop.f32.mrf.mxu0
        %v2834 = vpop.f32.mrf.mxu0
        %v2835 = vpop.f32.mrf.mxu0
        %2836 = vdwg.mxu0
        %v2837 = vadd.f32 %v2783, %v2832
        %v2839 = vrot.slane %v2595, 1
        %v2841 = vmax.f32 %v2595, %v2839
        %v2843 = vrot.slane %v2597, 1
        %v2845 = vmax.f32 %v2597, %v2843
        %v2846 = vmax.f32 %v2841, %v2845
        %v2847 = vpack.c.bf16 %v2846, %v2846
        %s2848 = scalar_lea.vmem %s3, 32
        %v2849 = vld [vmem:[%s2848] sm:$0xf]
        %v2850 = vld [vmem:[%s2848 + $0x4] sm:$0xf]
        %v2853 = vunpack.c.l.b16 %v2849
        %v2854 = vunpack.c.l.b16 %v2850
        %v2855 = vpack.c.b16 %v2854, %v2853
        %v2858 = vsel %vm2637, %v2847, 0
        %2860 = vmatprep.subr.bf16.mxu0 0
        %2861 = vmatpush1.bf16.msra.mxu0 0
        %2862 = vmatprep.subr.bf16.mxu0 0
        %2863 = vmatpush1.bf16.msra.mxu0 0
        %2864 = vmatprep.subr.bf16.mxu0 0
        %2865 = vmatpush1.bf16.msra.mxu0 0
        %2866 = vmatprep.subr.bf16.mxu0 0
        %2867 = vmatpush1.bf16.msra.mxu0 0
        %2868 = vmatprep.subr.bf16.mxu0 0
        %2869 = vmatpush1.bf16.msra.mxu0 0
        %2870 = vmatprep.subr.bf16.mxu0 0
        %2871 = vmatpush1.bf16.msra.mxu0 0
        %2872 = vmatprep.subr.bf16.mxu0 0
        %2873 = vmatpush1.bf16.msra.mxu0 0
        %2874 = vmatprep.subr.bf16.mxu0 0
        %2875 = vmatpush1.bf16.msra.mxu0 %v2855
        %2876 = vmatprep.subr.bf16.mxu0 0
        %2877 = vmatpush2.bf16.msra.mxu0 0
        %2878 = vmatprep.subr.bf16.mxu0 0
        %2879 = vmatpush2.bf16.msra.mxu0 0
        %2880 = vmatprep.subr.bf16.mxu0 0
        %2881 = vmatpush2.bf16.msra.mxu0 0
        %2882 = vmatprep.subr.bf16.mxu0 0
        %2883 = vmatpush2.bf16.msra.mxu0 0
        %2884 = vmatprep.subr.bf16.mxu0 0
        %2885 = vmatpush2.bf16.msra.mxu0 0
        %2886 = vmatprep.subr.bf16.mxu0 0
        %2887 = vmatpush2.bf16.msra.mxu0 0
        %2888 = vmatprep.subr.bf16.mxu0 0
        %2889 = vmatpush2.bf16.msra.mxu0 0
        %2890 = vmatprep.subr.bf16.mxu0 0
        %2891 = vmatpush2.bf16.msra.mxu0 0
        %2892 = vmatprep.mubr.bf16.mxu0 0
        %2893 = vmatmul.mubr.bf16.gmra.mxu0 %v2858
        %v2894 = vpop.f32.mrf.mxu0
        %v2895 = vadd.f32 0.0, %v2894
        %v2896 = vpop.f32.mrf.mxu0
        %v2897 = vpop.f32.mrf.mxu0
        %v2898 = vpop.f32.mrf.mxu0
        %2899 = vdwg.mxu0
        %v2900 = vadd.f32 %v2837, %v2895
        %v2902 = vrot.slane %v2598, 1
        %v2904 = vmax.f32 %v2598, %v2902
        %v2906 = vrot.slane %v2600, 1
        %v2908 = vmax.f32 %v2600, %v2906
        %v2909 = vmax.f32 %v2904, %v2908
        %v2910 = vpack.c.bf16 %v2909, %v2909
        %s2911 = scalar_lea.vmem %s3, 40
        %v2912 = vld [vmem:[%s2911] sm:$0xf]
        %v2913 = vld [vmem:[%s2911 + $0x4] sm:$0xf]
        %v2916 = vunpack.c.l.b16 %v2912
        %v2917 = vunpack.c.l.b16 %v2913
        %v2918 = vpack.c.b16 %v2917, %v2916
        %v2921 = vsel %vm2637, %v2910, 0
        %2923 = vmatprep.subr.bf16.mxu0 0
        %2924 = vmatpush1.bf16.msra.mxu0 0
        %2925 = vmatprep.subr.bf16.mxu0 0
        %2926 = vmatpush1.bf16.msra.mxu0 0
        %2927 = vmatprep.subr.bf16.mxu0 0
        %2928 = vmatpush1.bf16.msra.mxu0 0
        %2929 = vmatprep.subr.bf16.mxu0 0
        %2930 = vmatpush1.bf16.msra.mxu0 0
        %2931 = vmatprep.subr.bf16.mxu0 0
        %2932 = vmatpush1.bf16.msra.mxu0 0
        %2933 = vmatprep.subr.bf16.mxu0 0
        %2934 = vmatpush1.bf16.msra.mxu0 0
        %2935 = vmatprep.subr.bf16.mxu0 0
        %2936 = vmatpush1.bf16.msra.mxu0 0
        %2937 = vmatprep.subr.bf16.mxu0 0
        %2938 = vmatpush1.bf16.msra.mxu0 %v2918
        %2939 = vmatprep.subr.bf16.mxu0 0
        %2940 = vmatpush2.bf16.msra.mxu0 0
        %2941 = vmatprep.subr.bf16.mxu0 0
        %2942 = vmatpush2.bf16.msra.mxu0 0
        %2943 = vmatprep.subr.bf16.mxu0 0
        %2944 = vmatpush2.bf16.msra.mxu0 0
        %2945 = vmatprep.subr.bf16.mxu0 0
        %2946 = vmatpush2.bf16.msra.mxu0 0
        %2947 = vmatprep.subr.bf16.mxu0 0
        %2948 = vmatpush2.bf16.msra.mxu0 0
        %2949 = vmatprep.subr.bf16.mxu0 0
        %2950 = vmatpush2.bf16.msra.mxu0 0
        %2951 = vmatprep.subr.bf16.mxu0 0
        %2952 = vmatpush2.bf16.msra.mxu0 0
        %2953 = vmatprep.subr.bf16.mxu0 0
        %2954 = vmatpush2.bf16.msra.mxu0 0
        %2955 = vmatprep.mubr.bf16.mxu0 0
        %2956 = vmatmul.mubr.bf16.gmra.mxu0 %v2921
        %v2957 = vpop.f32.mrf.mxu0
        %v2958 = vadd.f32 0.0, %v2957
        %v2959 = vpop.f32.mrf.mxu0
        %v2960 = vpop.f32.mrf.mxu0
        %v2961 = vpop.f32.mrf.mxu0
        %2962 = vdwg.mxu0
        %v2963 = vadd.f32 %v2900, %v2958
        %s2964 = scalar_lea.vmem %s3, 48
        %v2965 = vld [vmem:[%s2964] sm:$0xf]
        %v2966 = vld [vmem:[%s2964 + $0x4] sm:$0xf]
        %v2968 = vrot.slane %v2910, 1
        %v2971 = vunpack.c.l.b16 %v2965
        %v2972 = vunpack.c.l.b16 %v2966
        %v2973 = vpack.c.b16 %v2972, %v2971
        %v2976 = vsel %vm2637, %v2968, 0
        %2978 = vmatprep.subr.bf16.mxu0 0
        %2979 = vmatpush1.bf16.msra.mxu0 0
        %2980 = vmatprep.subr.bf16.mxu0 0
        %2981 = vmatpush1.bf16.msra.mxu0 0
        %2982 = vmatprep.subr.bf16.mxu0 0
        %2983 = vmatpush1.bf16.msra.mxu0 0
        %2984 = vmatprep.subr.bf16.mxu0 0
        %2985 = vmatpush1.bf16.msra.mxu0 0
        %2986 = vmatprep.subr.bf16.mxu0 0
        %2987 = vmatpush1.bf16.msra.mxu0 0
        %2988 = vmatprep.subr.bf16.mxu0 0
        %2989 = vmatpush1.bf16.msra.mxu0 0
        %2990 = vmatprep.subr.bf16.mxu0 0
        %2991 = vmatpush1.bf16.msra.mxu0 0
        %2992 = vmatprep.subr.bf16.mxu0 0
        %2993 = vmatpush1.bf16.msra.mxu0 %v2973
        %2994 = vmatprep.subr.bf16.mxu0 0
        %2995 = vmatpush2.bf16.msra.mxu0 0
        %2996 = vmatprep.subr.bf16.mxu0 0
        %2997 = vmatpush2.bf16.msra.mxu0 0
        %2998 = vmatprep.subr.bf16.mxu0 0
        %2999 = vmatpush2.bf16.msra.mxu0 0
        %3000 = vmatprep.subr.bf16.mxu0 0
        %3001 = vmatpush2.bf16.msra.mxu0 0
        %3002 = vmatprep.subr.bf16.mxu0 0
        %3003 = vmatpush2.bf16.msra.mxu0 0
        %3004 = vmatprep.subr.bf16.mxu0 0
        %3005 = vmatpush2.bf16.msra.mxu0 0
        %3006 = vmatprep.subr.bf16.mxu0 0
        %3007 = vmatpush2.bf16.msra.mxu0 0
        %3008 = vmatprep.subr.bf16.mxu0 0
        %3009 = vmatpush2.bf16.msra.mxu0 0
        %3010 = vmatprep.mubr.bf16.mxu0 0
        %3011 = vmatmul.mubr.bf16.gmra.mxu0 %v2976
        %v3012 = vpop.f32.mrf.mxu0
        %v3013 = vadd.f32 0.0, %v3012
        %v3014 = vpop.f32.mrf.mxu0
        %v3015 = vpop.f32.mrf.mxu0
        %v3016 = vpop.f32.mrf.mxu0
        %3017 = vdwg.mxu0
        %v3018 = vadd.f32 %v2963, %v3013
        %s3019 = scalar_lea.vmem %s3, 56
        %v3020 = vld [vmem:[%s3019] sm:$0xf]
        %v3021 = vld [vmem:[%s3019 + $0x4] sm:$0xf]
        %v3022 = vrot.slane %v2910, 2
        %v3025 = vunpack.c.l.b16 %v3020
        %v3026 = vunpack.c.l.b16 %v3021
        %v3027 = vpack.c.b16 %v3026, %v3025
        %v3030 = vsel %vm2637, %v3022, 0
        %3032 = vmatprep.subr.bf16.mxu0 0
        %3033 = vmatpush1.bf16.msra.mxu0 0
        %3034 = vmatprep.subr.bf16.mxu0 0
        %3035 = vmatpush1.bf16.msra.mxu0 0
        %3036 = vmatprep.subr.bf16.mxu0 0
        %3037 = vmatpush1.bf16.msra.mxu0 0
        %3038 = vmatprep.subr.bf16.mxu0 0
        %3039 = vmatpush1.bf16.msra.mxu0 0
        %3040 = vmatprep.subr.bf16.mxu0 0
        %3041 = vmatpush1.bf16.msra.mxu0 0
        %3042 = vmatprep.subr.bf16.mxu0 0
        %3043 = vmatpush1.bf16.msra.mxu0 0
        %3044 = vmatprep.subr.bf16.mxu0 0
        %3045 = vmatpush1.bf16.msra.mxu0 0
        %3046 = vmatprep.subr.bf16.mxu0 0
        %3047 = vmatpush1.bf16.msra.mxu0 %v3027
        %3048 = vmatprep.subr.bf16.mxu0 0
        %3049 = vmatpush2.bf16.msra.mxu0 0
        %3050 = vmatprep.subr.bf16.mxu0 0
        %3051 = vmatpush2.bf16.msra.mxu0 0
        %3052 = vmatprep.subr.bf16.mxu0 0
        %3053 = vmatpush2.bf16.msra.mxu0 0
        %3054 = vmatprep.subr.bf16.mxu0 0
        %3055 = vmatpush2.bf16.msra.mxu0 0
        %3056 = vmatprep.subr.bf16.mxu0 0
        %3057 = vmatpush2.bf16.msra.mxu0 0
        %3058 = vmatprep.subr.bf16.mxu0 0
        %3059 = vmatpush2.bf16.msra.mxu0 0
        %3060 = vmatprep.subr.bf16.mxu0 0
        %3061 = vmatpush2.bf16.msra.mxu0 0
        %3062 = vmatprep.subr.bf16.mxu0 0
        %3063 = vmatpush2.bf16.msra.mxu0 0
        %3064 = vmatprep.mubr.bf16.mxu0 0
        %3065 = vmatmul.mubr.bf16.gmra.mxu0 %v3030
        %v3066 = vpop.f32.mrf.mxu0
        %v3067 = vadd.f32 0.0, %v3066
        %v3068 = vpop.f32.mrf.mxu0
        %v3069 = vpop.f32.mrf.mxu0
        %v3070 = vpop.f32.mrf.mxu0
        %3071 = vdwg.mxu0
        %v3072 = vadd.f32 %v3018, %v3067
        %s3073 = scalar_lea.vmem %s3, 64
        %v3074 = vld [vmem:[%s3073] sm:$0xf]
        %v3075 = vld [vmem:[%s3073 + $0x4] sm:$0xf]
        %v3076 = vrot.slane %v2910, 3
        %v3079 = vunpack.c.l.b16 %v3074
        %v3080 = vunpack.c.l.b16 %v3075
        %v3081 = vpack.c.b16 %v3080, %v3079
        %v3084 = vsel %vm2637, %v3076, 0
        %3086 = vmatprep.subr.bf16.mxu0 0
        %3087 = vmatpush1.bf16.msra.mxu0 0
        %3088 = vmatprep.subr.bf16.mxu0 0
        %3089 = vmatpush1.bf16.msra.mxu0 0
        %3090 = vmatprep.subr.bf16.mxu0 0
        %3091 = vmatpush1.bf16.msra.mxu0 0
        %3092 = vmatprep.subr.bf16.mxu0 0
        %3093 = vmatpush1.bf16.msra.mxu0 0
        %3094 = vmatprep.subr.bf16.mxu0 0
        %3095 = vmatpush1.bf16.msra.mxu0 0
        %3096 = vmatprep.subr.bf16.mxu0 0
        %3097 = vmatpush1.bf16.msra.mxu0 0
        %3098 = vmatprep.subr.bf16.mxu0 0
        %3099 = vmatpush1.bf16.msra.mxu0 0
        %3100 = vmatprep.subr.bf16.mxu0 0
        %3101 = vmatpush1.bf16.msra.mxu0 %v3081
        %3102 = vmatprep.subr.bf16.mxu0 0
        %3103 = vmatpush2.bf16.msra.mxu0 0
        %3104 = vmatprep.subr.bf16.mxu0 0
        %3105 = vmatpush2.bf16.msra.mxu0 0
        %3106 = vmatprep.subr.bf16.mxu0 0
        %3107 = vmatpush2.bf16.msra.mxu0 0
        %3108 = vmatprep.subr.bf16.mxu0 0
        %3109 = vmatpush2.bf16.msra.mxu0 0
        %3110 = vmatprep.subr.bf16.mxu0 0
        %3111 = vmatpush2.bf16.msra.mxu0 0
        %3112 = vmatprep.subr.bf16.mxu0 0
        %3113 = vmatpush2.bf16.msra.mxu0 0
        %3114 = vmatprep.subr.bf16.mxu0 0
        %3115 = vmatpush2.bf16.msra.mxu0 0
        %3116 = vmatprep.subr.bf16.mxu0 0
        %3117 = vmatpush2.bf16.msra.mxu0 0
        %3118 = vmatprep.mubr.bf16.mxu0 0
        %3119 = vmatmul.mubr.bf16.gmra.mxu0 %v3084
        %v3120 = vpop.f32.mrf.mxu0
        %v3121 = vadd.f32 0.0, %v3120
        %v3122 = vpop.f32.mrf.mxu0
        %v3123 = vpop.f32.mrf.mxu0
        %v3124 = vpop.f32.mrf.mxu0
        %3125 = vdwg.mxu0
        %v3126 = vadd.f32 %v3072, %v3121
        %v3128 = vrot.slane %v2599, 1
        %v3130 = vmax.f32 %v2599, %v3128
        %v3132 = vrot.slane %v2601, 1
        %v3134 = vmax.f32 %v2601, %v3132
        %v3135 = vmax.f32 %v3130, %v3134
        %v3136 = vpack.c.bf16 %v3135, %v3135
        %s3137 = scalar_lea.vmem %s3, 72
        %v3138 = vld [vmem:[%s3137] sm:$0xf]
        %v3139 = vld [vmem:[%s3137 + $0x4] sm:$0xf]
        %v3142 = vunpack.c.l.b16 %v3138
        %v3143 = vunpack.c.l.b16 %v3139
        %v3144 = vpack.c.b16 %v3143, %v3142
        %v3147 = vsel %vm2637, %v3136, 0
        %3149 = vmatprep.subr.bf16.mxu0 0
        %3150 = vmatpush1.bf16.msra.mxu0 0
        %3151 = vmatprep.subr.bf16.mxu0 0
        %3152 = vmatpush1.bf16.msra.mxu0 0
        %3153 = vmatprep.subr.bf16.mxu0 0
        %3154 = vmatpush1.bf16.msra.mxu0 0
        %3155 = vmatprep.subr.bf16.mxu0 0
        %3156 = vmatpush1.bf16.msra.mxu0 0
        %3157 = vmatprep.subr.bf16.mxu0 0
        %3158 = vmatpush1.bf16.msra.mxu0 0
        %3159 = vmatprep.subr.bf16.mxu0 0
        %3160 = vmatpush1.bf16.msra.mxu0 0
        %3161 = vmatprep.subr.bf16.mxu0 0
        %3162 = vmatpush1.bf16.msra.mxu0 0
        %3163 = vmatprep.subr.bf16.mxu0 0
        %3164 = vmatpush1.bf16.msra.mxu0 %v3144
        %3165 = vmatprep.subr.bf16.mxu0 0
        %3166 = vmatpush2.bf16.msra.mxu0 0
        %3167 = vmatprep.subr.bf16.mxu0 0
        %3168 = vmatpush2.bf16.msra.mxu0 0
        %3169 = vmatprep.subr.bf16.mxu0 0
        %3170 = vmatpush2.bf16.msra.mxu0 0
        %3171 = vmatprep.subr.bf16.mxu0 0
        %3172 = vmatpush2.bf16.msra.mxu0 0
        %3173 = vmatprep.subr.bf16.mxu0 0
        %3174 = vmatpush2.bf16.msra.mxu0 0
        %3175 = vmatprep.subr.bf16.mxu0 0
        %3176 = vmatpush2.bf16.msra.mxu0 0
        %3177 = vmatprep.subr.bf16.mxu0 0
        %3178 = vmatpush2.bf16.msra.mxu0 0
        %3179 = vmatprep.subr.bf16.mxu0 0
        %3180 = vmatpush2.bf16.msra.mxu0 0
        %3181 = vmatprep.mubr.bf16.mxu0 0
        %3182 = vmatmul.mubr.bf16.gmra.mxu0 %v3147
        %v3183 = vpop.f32.mrf.mxu0
        %v3184 = vadd.f32 0.0, %v3183
        %v3185 = vpop.f32.mrf.mxu0
        %v3186 = vpop.f32.mrf.mxu0
        %v3187 = vpop.f32.mrf.mxu0
        %3188 = vdwg.mxu0
        %v3189 = vadd.f32 %v3126, %v3184
        %v3191 = vrot.slane %v2602, 1
        %v3193 = vmax.f32 %v2602, %v3191
        %v3195 = vrot.slane %v2604, 1
        %v3197 = vmax.f32 %v2604, %v3195
        %v3198 = vmax.f32 %v3193, %v3197
        %v3199 = vpack.c.bf16 %v3198, %v3198
        %s3200 = scalar_lea.vmem %s3, 80
        %v3201 = vld [vmem:[%s3200] sm:$0xf]
        %v3202 = vld [vmem:[%s3200 + $0x4] sm:$0xf]
        %v3205 = vunpack.c.l.b16 %v3201
        %v3206 = vunpack.c.l.b16 %v3202
        %v3207 = vpack.c.b16 %v3206, %v3205
        %v3210 = vsel %vm2637, %v3199, 0
        %3212 = vmatprep.subr.bf16.mxu0 0
        %3213 = vmatpush1.bf16.msra.mxu0 0
        %3214 = vmatprep.subr.bf16.mxu0 0
        %3215 = vmatpush1.bf16.msra.mxu0 0
        %3216 = vmatprep.subr.bf16.mxu0 0
        %3217 = vmatpush1.bf16.msra.mxu0 0
        %3218 = vmatprep.subr.bf16.mxu0 0
        %3219 = vmatpush1.bf16.msra.mxu0 0
        %3220 = vmatprep.subr.bf16.mxu0 0
        %3221 = vmatpush1.bf16.msra.mxu0 0
        %3222 = vmatprep.subr.bf16.mxu0 0
        %3223 = vmatpush1.bf16.msra.mxu0 0
        %3224 = vmatprep.subr.bf16.mxu0 0
        %3225 = vmatpush1.bf16.msra.mxu0 0
        %3226 = vmatprep.subr.bf16.mxu0 0
        %3227 = vmatpush1.bf16.msra.mxu0 %v3207
        %3228 = vmatprep.subr.bf16.mxu0 0
        %3229 = vmatpush2.bf16.msra.mxu0 0
        %3230 = vmatprep.subr.bf16.mxu0 0
        %3231 = vmatpush2.bf16.msra.mxu0 0
        %3232 = vmatprep.subr.bf16.mxu0 0
        %3233 = vmatpush2.bf16.msra.mxu0 0
        %3234 = vmatprep.subr.bf16.mxu0 0
        %3235 = vmatpush2.bf16.msra.mxu0 0
        %3236 = vmatprep.subr.bf16.mxu0 0
        %3237 = vmatpush2.bf16.msra.mxu0 0
        %3238 = vmatprep.subr.bf16.mxu0 0
        %3239 = vmatpush2.bf16.msra.mxu0 0
        %3240 = vmatprep.subr.bf16.mxu0 0
        %3241 = vmatpush2.bf16.msra.mxu0 0
        %3242 = vmatprep.subr.bf16.mxu0 0
        %3243 = vmatpush2.bf16.msra.mxu0 0
        %3244 = vmatprep.mubr.bf16.mxu0 0
        %3245 = vmatmul.mubr.bf16.gmra.mxu0 %v3210
        %v3246 = vpop.f32.mrf.mxu0
        %v3247 = vadd.f32 0.0, %v3246
        %v3248 = vpop.f32.mrf.mxu0
        %v3249 = vpop.f32.mrf.mxu0
        %v3250 = vpop.f32.mrf.mxu0
        %3251 = vdwg.mxu0
        %v3252 = vadd.f32 %v3189, %v3247
        %s3253 = scalar_lea.vmem %s3, 88
        %v3254 = vld [vmem:[%s3253] sm:$0xf]
        %v3255 = vld [vmem:[%s3253 + $0x4] sm:$0xf]
        %v3257 = vrot.slane %v3199, 1
        %v3260 = vunpack.c.l.b16 %v3254
        %v3261 = vunpack.c.l.b16 %v3255
        %v3262 = vpack.c.b16 %v3261, %v3260
        %v3265 = vsel %vm2637, %v3257, 0
        %3267 = vmatprep.subr.bf16.mxu0 0
        %3268 = vmatpush1.bf16.msra.mxu0 0
        %3269 = vmatprep.subr.bf16.mxu0 0
        %3270 = vmatpush1.bf16.msra.mxu0 0
        %3271 = vmatprep.subr.bf16.mxu0 0
        %3272 = vmatpush1.bf16.msra.mxu0 0
        %3273 = vmatprep.subr.bf16.mxu0 0
        %3274 = vmatpush1.bf16.msra.mxu0 0
        %3275 = vmatprep.subr.bf16.mxu0 0
        %3276 = vmatpush1.bf16.msra.mxu0 0
        %3277 = vmatprep.subr.bf16.mxu0 0
        %3278 = vmatpush1.bf16.msra.mxu0 0
        %3279 = vmatprep.subr.bf16.mxu0 0
        %3280 = vmatpush1.bf16.msra.mxu0 0
        %3281 = vmatprep.subr.bf16.mxu0 0
        %3282 = vmatpush1.bf16.msra.mxu0 %v3262
        %3283 = vmatprep.subr.bf16.mxu0 0
        %3284 = vmatpush2.bf16.msra.mxu0 0
        %3285 = vmatprep.subr.bf16.mxu0 0
        %3286 = vmatpush2.bf16.msra.mxu0 0
        %3287 = vmatprep.subr.bf16.mxu0 0
        %3288 = vmatpush2.bf16.msra.mxu0 0
        %3289 = vmatprep.subr.bf16.mxu0 0
        %3290 = vmatpush2.bf16.msra.mxu0 0
        %3291 = vmatprep.subr.bf16.mxu0 0
        %3292 = vmatpush2.bf16.msra.mxu0 0
        %3293 = vmatprep.subr.bf16.mxu0 0
        %3294 = vmatpush2.bf16.msra.mxu0 0
        %3295 = vmatprep.subr.bf16.mxu0 0
        %3296 = vmatpush2.bf16.msra.mxu0 0
        %3297 = vmatprep.subr.bf16.mxu0 0
        %3298 = vmatpush2.bf16.msra.mxu0 0
        %3299 = vmatprep.mubr.bf16.mxu0 0
        %3300 = vmatmul.mubr.bf16.gmra.mxu0 %v3265
        %v3301 = vpop.f32.mrf.mxu0
        %v3302 = vadd.f32 0.0, %v3301
        %v3303 = vpop.f32.mrf.mxu0
        %v3304 = vpop.f32.mrf.mxu0
        %v3305 = vpop.f32.mrf.mxu0
        %3306 = vdwg.mxu0
        %v3307 = vadd.f32 %v3252, %v3302
        %s3308 = scalar_lea.vmem %s3, 96
        %v3309 = vld [vmem:[%s3308] sm:$0xf]
        %v3310 = vld [vmem:[%s3308 + $0x4] sm:$0xf]
        %v3311 = vrot.slane %v3199, 2
        %v3314 = vunpack.c.l.b16 %v3309
        %v3315 = vunpack.c.l.b16 %v3310
        %v3316 = vpack.c.b16 %v3315, %v3314
        %v3319 = vsel %vm2637, %v3311, 0
        %3321 = vmatprep.subr.bf16.mxu0 0
        %3322 = vmatpush1.bf16.msra.mxu0 0
        %3323 = vmatprep.subr.bf16.mxu0 0
        %3324 = vmatpush1.bf16.msra.mxu0 0
        %3325 = vmatprep.subr.bf16.mxu0 0
        %3326 = vmatpush1.bf16.msra.mxu0 0
        %3327 = vmatprep.subr.bf16.mxu0 0
        %3328 = vmatpush1.bf16.msra.mxu0 0
        %3329 = vmatprep.subr.bf16.mxu0 0
        %3330 = vmatpush1.bf16.msra.mxu0 0
        %3331 = vmatprep.subr.bf16.mxu0 0
        %3332 = vmatpush1.bf16.msra.mxu0 0
        %3333 = vmatprep.subr.bf16.mxu0 0
        %3334 = vmatpush1.bf16.msra.mxu0 0
        %3335 = vmatprep.subr.bf16.mxu0 0
        %3336 = vmatpush1.bf16.msra.mxu0 %v3316
        %3337 = vmatprep.subr.bf16.mxu0 0
        %3338 = vmatpush2.bf16.msra.mxu0 0
        %3339 = vmatprep.subr.bf16.mxu0 0
        %3340 = vmatpush2.bf16.msra.mxu0 0
        %3341 = vmatprep.subr.bf16.mxu0 0
        %3342 = vmatpush2.bf16.msra.mxu0 0
        %3343 = vmatprep.subr.bf16.mxu0 0
        %3344 = vmatpush2.bf16.msra.mxu0 0
        %3345 = vmatprep.subr.bf16.mxu0 0
        %3346 = vmatpush2.bf16.msra.mxu0 0
        %3347 = vmatprep.subr.bf16.mxu0 0
        %3348 = vmatpush2.bf16.msra.mxu0 0
        %3349 = vmatprep.subr.bf16.mxu0 0
        %3350 = vmatpush2.bf16.msra.mxu0 0
        %3351 = vmatprep.subr.bf16.mxu0 0
        %3352 = vmatpush2.bf16.msra.mxu0 0
        %3353 = vmatprep.mubr.bf16.mxu0 0
        %3354 = vmatmul.mubr.bf16.gmra.mxu0 %v3319
        %v3355 = vpop.f32.mrf.mxu0
        %v3356 = vadd.f32 0.0, %v3355
        %v3357 = vpop.f32.mrf.mxu0
        %v3358 = vpop.f32.mrf.mxu0
        %v3359 = vpop.f32.mrf.mxu0
        %3360 = vdwg.mxu0
        %v3361 = vadd.f32 %v3307, %v3356
        %s3362 = scalar_lea.vmem %s3, 104
        %v3363 = vld [vmem:[%s3362] sm:$0xf]
        %v3364 = vld [vmem:[%s3362 + $0x4] sm:$0xf]
        %v3365 = vrot.slane %v3199, 3
        %v3368 = vunpack.c.l.b16 %v3363
        %v3369 = vunpack.c.l.b16 %v3364
        %v3370 = vpack.c.b16 %v3369, %v3368
        %v3373 = vsel %vm2637, %v3365, 0
        %3375 = vmatprep.subr.bf16.mxu0 0
        %3376 = vmatpush1.bf16.msra.mxu0 0
        %3377 = vmatprep.subr.bf16.mxu0 0
        %3378 = vmatpush1.bf16.msra.mxu0 0
        %3379 = vmatprep.subr.bf16.mxu0 0
        %3380 = vmatpush1.bf16.msra.mxu0 0
        %3381 = vmatprep.subr.bf16.mxu0 0
        %3382 = vmatpush1.bf16.msra.mxu0 0
        %3383 = vmatprep.subr.bf16.mxu0 0
        %3384 = vmatpush1.bf16.msra.mxu0 0
        %3385 = vmatprep.subr.bf16.mxu0 0
        %3386 = vmatpush1.bf16.msra.mxu0 0
        %3387 = vmatprep.subr.bf16.mxu0 0
        %3388 = vmatpush1.bf16.msra.mxu0 0
        %3389 = vmatprep.subr.bf16.mxu0 0
        %3390 = vmatpush1.bf16.msra.mxu0 %v3370
        %3391 = vmatprep.subr.bf16.mxu0 0
        %3392 = vmatpush2.bf16.msra.mxu0 0
        %3393 = vmatprep.subr.bf16.mxu0 0
        %3394 = vmatpush2.bf16.msra.mxu0 0
        %3395 = vmatprep.subr.bf16.mxu0 0
        %3396 = vmatpush2.bf16.msra.mxu0 0
        %3397 = vmatprep.subr.bf16.mxu0 0
        %3398 = vmatpush2.bf16.msra.mxu0 0
        %3399 = vmatprep.subr.bf16.mxu0 0
        %3400 = vmatpush2.bf16.msra.mxu0 0
        %3401 = vmatprep.subr.bf16.mxu0 0
        %3402 = vmatpush2.bf16.msra.mxu0 0
        %3403 = vmatprep.subr.bf16.mxu0 0
        %3404 = vmatpush2.bf16.msra.mxu0 0
        %3405 = vmatprep.subr.bf16.mxu0 0
        %3406 = vmatpush2.bf16.msra.mxu0 0
        %3407 = vmatprep.mubr.bf16.mxu0 0
        %3408 = vmatmul.mubr.bf16.gmra.mxu0 %v3373
        %v3409 = vpop.f32.mrf.mxu0
        %v3410 = vadd.f32 0.0, %v3409
        %v3411 = vpop.f32.mrf.mxu0
        %v3412 = vpop.f32.mrf.mxu0
        %v3413 = vpop.f32.mrf.mxu0
        %3414 = vdwg.mxu0
        %v3415 = vadd.f32 %v3361, %v3410
        %v3417 = vrot.slane %v2603, 1
        %v3419 = vmax.f32 %v2603, %v3417
        %v3421 = vrot.slane %v2605, 1
        %v3423 = vmax.f32 %v2605, %v3421
        %v3424 = vmax.f32 %v3419, %v3423
        %v3425 = vpack.c.bf16 %v3424, %v3424
        %s3426 = scalar_lea.vmem %s3, 112
        %v3427 = vld [vmem:[%s3426] sm:$0xf]
        %v3428 = vld [vmem:[%s3426 + $0x4] sm:$0xf]
        %v3431 = vunpack.c.l.b16 %v3427
        %v3432 = vunpack.c.l.b16 %v3428
        %v3433 = vpack.c.b16 %v3432, %v3431
        %v3436 = vsel %vm2637, %v3425, 0
        %3438 = vmatprep.subr.bf16.mxu0 0
        %3439 = vmatpush1.bf16.msra.mxu0 0
        %3440 = vmatprep.subr.bf16.mxu0 0
        %3441 = vmatpush1.bf16.msra.mxu0 0
        %3442 = vmatprep.subr.bf16.mxu0 0
        %3443 = vmatpush1.bf16.msra.mxu0 0
        %3444 = vmatprep.subr.bf16.mxu0 0
        %3445 = vmatpush1.bf16.msra.mxu0 0
        %3446 = vmatprep.subr.bf16.mxu0 0
        %3447 = vmatpush1.bf16.msra.mxu0 0
        %3448 = vmatprep.subr.bf16.mxu0 0
        %3449 = vmatpush1.bf16.msra.mxu0 0
        %3450 = vmatprep.subr.bf16.mxu0 0
        %3451 = vmatpush1.bf16.msra.mxu0 0
        %3452 = vmatprep.subr.bf16.mxu0 0
        %3453 = vmatpush1.bf16.msra.mxu0 %v3433
        %3454 = vmatprep.subr.bf16.mxu0 0
        %3455 = vmatpush2.bf16.msra.mxu0 0
        %3456 = vmatprep.subr.bf16.mxu0 0
        %3457 = vmatpush2.bf16.msra.mxu0 0
        %3458 = vmatprep.subr.bf16.mxu0 0
        %3459 = vmatpush2.bf16.msra.mxu0 0
        %3460 = vmatprep.subr.bf16.mxu0 0
        %3461 = vmatpush2.bf16.msra.mxu0 0
        %3462 = vmatprep.subr.bf16.mxu0 0
        %3463 = vmatpush2.bf16.msra.mxu0 0
        %3464 = vmatprep.subr.bf16.mxu0 0
        %3465 = vmatpush2.bf16.msra.mxu0 0
        %3466 = vmatprep.subr.bf16.mxu0 0
        %3467 = vmatpush2.bf16.msra.mxu0 0
        %3468 = vmatprep.subr.bf16.mxu0 0
        %3469 = vmatpush2.bf16.msra.mxu0 0
        %3470 = vmatprep.mubr.bf16.mxu0 0
        %3471 = vmatmul.mubr.bf16.gmra.mxu0 %v3436
        %v3472 = vpop.f32.mrf.mxu0
        %v3473 = vadd.f32 0.0, %v3472
        %v3474 = vpop.f32.mrf.mxu0
        %v3475 = vpop.f32.mrf.mxu0
        %v3476 = vpop.f32.mrf.mxu0
        %3477 = vdwg.mxu0
        %v3478 = vadd.f32 %v3415, %v3473
        %v3480 = vrot.slane %v2606, 1
        %v3482 = vmax.f32 %v2606, %v3480
        %v3484 = vrot.slane %v2608, 1
        %v3486 = vmax.f32 %v2608, %v3484
        %v3487 = vmax.f32 %v3482, %v3486
        %v3488 = vpack.c.bf16 %v3487, %v3487
        %s3489 = scalar_lea.vmem %s3, 120
        %v3490 = vld [vmem:[%s3489] sm:$0xf]
        %v3491 = vld [vmem:[%s3489 + $0x4] sm:$0xf]
        %v3494 = vunpack.c.l.b16 %v3490
        %v3495 = vunpack.c.l.b16 %v3491
        %v3496 = vpack.c.b16 %v3495, %v3494
        %v3499 = vsel %vm2637, %v3488, 0
        %3501 = vmatprep.subr.bf16.mxu0 0
        %3502 = vmatpush1.bf16.msra.mxu0 0
        %3503 = vmatprep.subr.bf16.mxu0 0
        %3504 = vmatpush1.bf16.msra.mxu0 0
        %3505 = vmatprep.subr.bf16.mxu0 0
        %3506 = vmatpush1.bf16.msra.mxu0 0
        %3507 = vmatprep.subr.bf16.mxu0 0
        %3508 = vmatpush1.bf16.msra.mxu0 0
        %3509 = vmatprep.subr.bf16.mxu0 0
        %3510 = vmatpush1.bf16.msra.mxu0 0
        %3511 = vmatprep.subr.bf16.mxu0 0
        %3512 = vmatpush1.bf16.msra.mxu0 0
        %3513 = vmatprep.subr.bf16.mxu0 0
        %3514 = vmatpush1.bf16.msra.mxu0 0
        %3515 = vmatprep.subr.bf16.mxu0 0
        %3516 = vmatpush1.bf16.msra.mxu0 %v3496
        %3517 = vmatprep.subr.bf16.mxu0 0
        %3518 = vmatpush2.bf16.msra.mxu0 0
        %3519 = vmatprep.subr.bf16.mxu0 0
        %3520 = vmatpush2.bf16.msra.mxu0 0
        %3521 = vmatprep.subr.bf16.mxu0 0
        %3522 = vmatpush2.bf16.msra.mxu0 0
        %3523 = vmatprep.subr.bf16.mxu0 0
        %3524 = vmatpush2.bf16.msra.mxu0 0
        %3525 = vmatprep.subr.bf16.mxu0 0
        %3526 = vmatpush2.bf16.msra.mxu0 0
        %3527 = vmatprep.subr.bf16.mxu0 0
        %3528 = vmatpush2.bf16.msra.mxu0 0
        %3529 = vmatprep.subr.bf16.mxu0 0
        %3530 = vmatpush2.bf16.msra.mxu0 0
        %3531 = vmatprep.subr.bf16.mxu0 0
        %3532 = vmatpush2.bf16.msra.mxu0 0
        %3533 = vmatprep.mubr.bf16.mxu0 0
        %3534 = vmatmul.mubr.bf16.gmra.mxu0 %v3499
        %v3535 = vpop.f32.mrf.mxu0
        %v3536 = vadd.f32 0.0, %v3535
        %v3537 = vpop.f32.mrf.mxu0
        %v3538 = vpop.f32.mrf.mxu0
        %v3539 = vpop.f32.mrf.mxu0
        %3540 = vdwg.mxu0
        %v3541 = vadd.f32 %v3478, %v3536
        %s3542 = scalar_lea.vmem %s3, 128
        %v3543 = vld [vmem:[%s3542] sm:$0xf]
        %v3544 = vld [vmem:[%s3542 + $0x4] sm:$0xf]
        %v3546 = vrot.slane %v3488, 1
        %v3549 = vunpack.c.l.b16 %v3543
        %v3550 = vunpack.c.l.b16 %v3544
        %v3551 = vpack.c.b16 %v3550, %v3549
        %v3554 = vsel %vm2637, %v3546, 0
        %3556 = vmatprep.subr.bf16.mxu0 0
        %3557 = vmatpush1.bf16.msra.mxu0 0
        %3558 = vmatprep.subr.bf16.mxu0 0
        %3559 = vmatpush1.bf16.msra.mxu0 0
        %3560 = vmatprep.subr.bf16.mxu0 0
        %3561 = vmatpush1.bf16.msra.mxu0 0
        %3562 = vmatprep.subr.bf16.mxu0 0
        %3563 = vmatpush1.bf16.msra.mxu0 0
        %3564 = vmatprep.subr.bf16.mxu0 0
        %3565 = vmatpush1.bf16.msra.mxu0 0
        %3566 = vmatprep.subr.bf16.mxu0 0
        %3567 = vmatpush1.bf16.msra.mxu0 0
        %3568 = vmatprep.subr.bf16.mxu0 0
        %3569 = vmatpush1.bf16.msra.mxu0 0
        %3570 = vmatprep.subr.bf16.mxu0 0
        %3571 = vmatpush1.bf16.msra.mxu0 %v3551
        %3572 = vmatprep.subr.bf16.mxu0 0
        %3573 = vmatpush2.bf16.msra.mxu0 0
        %3574 = vmatprep.subr.bf16.mxu0 0
        %3575 = vmatpush2.bf16.msra.mxu0 0
        %3576 = vmatprep.subr.bf16.mxu0 0
        %3577 = vmatpush2.bf16.msra.mxu0 0
        %3578 = vmatprep.subr.bf16.mxu0 0
        %3579 = vmatpush2.bf16.msra.mxu0 0
        %3580 = vmatprep.subr.bf16.mxu0 0
        %3581 = vmatpush2.bf16.msra.mxu0 0
        %3582 = vmatprep.subr.bf16.mxu0 0
        %3583 = vmatpush2.bf16.msra.mxu0 0
        %3584 = vmatprep.subr.bf16.mxu0 0
        %3585 = vmatpush2.bf16.msra.mxu0 0
        %3586 = vmatprep.subr.bf16.mxu0 0
        %3587 = vmatpush2.bf16.msra.mxu0 0
        %3588 = vmatprep.mubr.bf16.mxu0 0
        %3589 = vmatmul.mubr.bf16.gmra.mxu0 %v3554
        %v3590 = vpop.f32.mrf.mxu0
        %v3591 = vadd.f32 0.0, %v3590
        %v3592 = vpop.f32.mrf.mxu0
        %v3593 = vpop.f32.mrf.mxu0
        %v3594 = vpop.f32.mrf.mxu0
        %3595 = vdwg.mxu0
        %v3596 = vadd.f32 %v3541, %v3591
        %s3597 = scalar_lea.vmem %s3, 136
        %v3598 = vld [vmem:[%s3597] sm:$0xf]
        %v3599 = vld [vmem:[%s3597 + $0x4] sm:$0xf]
        %v3600 = vrot.slane %v3488, 2
        %v3603 = vunpack.c.l.b16 %v3598
        %v3604 = vunpack.c.l.b16 %v3599
        %v3605 = vpack.c.b16 %v3604, %v3603
        %v3608 = vsel %vm2637, %v3600, 0
        %3610 = vmatprep.subr.bf16.mxu0 0
        %3611 = vmatpush1.bf16.msra.mxu0 0
        %3612 = vmatprep.subr.bf16.mxu0 0
        %3613 = vmatpush1.bf16.msra.mxu0 0
        %3614 = vmatprep.subr.bf16.mxu0 0
        %3615 = vmatpush1.bf16.msra.mxu0 0
        %3616 = vmatprep.subr.bf16.mxu0 0
        %3617 = vmatpush1.bf16.msra.mxu0 0
        %3618 = vmatprep.subr.bf16.mxu0 0
        %3619 = vmatpush1.bf16.msra.mxu0 0
        %3620 = vmatprep.subr.bf16.mxu0 0
        %3621 = vmatpush1.bf16.msra.mxu0 0
        %3622 = vmatprep.subr.bf16.mxu0 0
        %3623 = vmatpush1.bf16.msra.mxu0 0
        %3624 = vmatprep.subr.bf16.mxu0 0
        %3625 = vmatpush1.bf16.msra.mxu0 %v3605
        %3626 = vmatprep.subr.bf16.mxu0 0
        %3627 = vmatpush2.bf16.msra.mxu0 0
        %3628 = vmatprep.subr.bf16.mxu0 0
        %3629 = vmatpush2.bf16.msra.mxu0 0
        %3630 = vmatprep.subr.bf16.mxu0 0
        %3631 = vmatpush2.bf16.msra.mxu0 0
        %3632 = vmatprep.subr.bf16.mxu0 0
        %3633 = vmatpush2.bf16.msra.mxu0 0
        %3634 = vmatprep.subr.bf16.mxu0 0
        %3635 = vmatpush2.bf16.msra.mxu0 0
        %3636 = vmatprep.subr.bf16.mxu0 0
        %3637 = vmatpush2.bf16.msra.mxu0 0
        %3638 = vmatprep.subr.bf16.mxu0 0
        %3639 = vmatpush2.bf16.msra.mxu0 0
        %3640 = vmatprep.subr.bf16.mxu0 0
        %3641 = vmatpush2.bf16.msra.mxu0 0
        %3642 = vmatprep.mubr.bf16.mxu0 0
        %3643 = vmatmul.mubr.bf16.gmra.mxu0 %v3608
        %v3644 = vpop.f32.mrf.mxu0
        %v3645 = vadd.f32 0.0, %v3644
        %v3646 = vpop.f32.mrf.mxu0
        %v3647 = vpop.f32.mrf.mxu0
        %v3648 = vpop.f32.mrf.mxu0
        %3649 = vdwg.mxu0
        %v3650 = vadd.f32 %v3596, %v3645
        %s3651 = scalar_lea.vmem %s3, 144
        %v3652 = vld [vmem:[%s3651] sm:$0xf]
        %v3653 = vld [vmem:[%s3651 + $0x4] sm:$0xf]
        %v3654 = vrot.slane %v3488, 3
        %v3657 = vunpack.c.l.b16 %v3652
        %v3658 = vunpack.c.l.b16 %v3653
        %v3659 = vpack.c.b16 %v3658, %v3657
        %v3662 = vsel %vm2637, %v3654, 0
        %3664 = vmatprep.subr.bf16.mxu0 0
        %3665 = vmatpush1.bf16.msra.mxu0 0
        %3666 = vmatprep.subr.bf16.mxu0 0
        %3667 = vmatpush1.bf16.msra.mxu0 0
        %3668 = vmatprep.subr.bf16.mxu0 0
        %3669 = vmatpush1.bf16.msra.mxu0 0
        %3670 = vmatprep.subr.bf16.mxu0 0
        %3671 = vmatpush1.bf16.msra.mxu0 0
        %3672 = vmatprep.subr.bf16.mxu0 0
        %3673 = vmatpush1.bf16.msra.mxu0 0
        %3674 = vmatprep.subr.bf16.mxu0 0
        %3675 = vmatpush1.bf16.msra.mxu0 0
        %3676 = vmatprep.subr.bf16.mxu0 0
        %3677 = vmatpush1.bf16.msra.mxu0 0
        %3678 = vmatprep.subr.bf16.mxu0 0
        %3679 = vmatpush1.bf16.msra.mxu0 %v3659
        %3680 = vmatprep.subr.bf16.mxu0 0
        %3681 = vmatpush2.bf16.msra.mxu0 0
        %3682 = vmatprep.subr.bf16.mxu0 0
        %3683 = vmatpush2.bf16.msra.mxu0 0
        %3684 = vmatprep.subr.bf16.mxu0 0
        %3685 = vmatpush2.bf16.msra.mxu0 0
        %3686 = vmatprep.subr.bf16.mxu0 0
        %3687 = vmatpush2.bf16.msra.mxu0 0
        %3688 = vmatprep.subr.bf16.mxu0 0
        %3689 = vmatpush2.bf16.msra.mxu0 0
        %3690 = vmatprep.subr.bf16.mxu0 0
        %3691 = vmatpush2.bf16.msra.mxu0 0
        %3692 = vmatprep.subr.bf16.mxu0 0
        %3693 = vmatpush2.bf16.msra.mxu0 0
        %3694 = vmatprep.subr.bf16.mxu0 0
        %3695 = vmatpush2.bf16.msra.mxu0 0
        %3696 = vmatprep.mubr.bf16.mxu0 0
        %3697 = vmatmul.mubr.bf16.gmra.mxu0 %v3662
        %v3698 = vpop.f32.mrf.mxu0
        %v3699 = vadd.f32 0.0, %v3698
        %v3700 = vpop.f32.mrf.mxu0
        %v3701 = vpop.f32.mrf.mxu0
        %v3702 = vpop.f32.mrf.mxu0
        %3703 = vdwg.mxu0
        %v3704 = vadd.f32 %v3650, %v3699
        %v3706 = vrot.slane %v2607, 1
        %v3708 = vmax.f32 %v2607, %v3706
        %v3710 = vrot.slane %v2609, 1
        %v3712 = vmax.f32 %v2609, %v3710
        %v3713 = vmax.f32 %v3708, %v3712
        %v3714 = vpack.c.bf16 %v3713, %v3713
        %s3715 = scalar_lea.vmem %s3, 152
        %v3716 = vld [vmem:[%s3715] sm:$0xf]
        %v3717 = vld [vmem:[%s3715 + $0x4] sm:$0xf]
        %v3720 = vunpack.c.l.b16 %v3716
        %v3721 = vunpack.c.l.b16 %v3717
        %v3722 = vpack.c.b16 %v3721, %v3720
        %v3725 = vsel %vm2637, %v3714, 0
        %3727 = vmatprep.subr.bf16.mxu0 0
        %3728 = vmatpush1.bf16.msra.mxu0 0
        %3729 = vmatprep.subr.bf16.mxu0 0
        %3730 = vmatpush1.bf16.msra.mxu0 0
        %3731 = vmatprep.subr.bf16.mxu0 0
        %3732 = vmatpush1.bf16.msra.mxu0 0
        %3733 = vmatprep.subr.bf16.mxu0 0
        %3734 = vmatpush1.bf16.msra.mxu0 0
        %3735 = vmatprep.subr.bf16.mxu0 0
        %3736 = vmatpush1.bf16.msra.mxu0 0
        %3737 = vmatprep.subr.bf16.mxu0 0
        %3738 = vmatpush1.bf16.msra.mxu0 0
        %3739 = vmatprep.subr.bf16.mxu0 0
        %3740 = vmatpush1.bf16.msra.mxu0 0
        %3741 = vmatprep.subr.bf16.mxu0 0
        %3742 = vmatpush1.bf16.msra.mxu0 %v3722
        %3743 = vmatprep.subr.bf16.mxu0 0
        %3744 = vmatpush2.bf16.msra.mxu0 0
        %3745 = vmatprep.subr.bf16.mxu0 0
        %3746 = vmatpush2.bf16.msra.mxu0 0
        %3747 = vmatprep.subr.bf16.mxu0 0
        %3748 = vmatpush2.bf16.msra.mxu0 0
        %3749 = vmatprep.subr.bf16.mxu0 0
        %3750 = vmatpush2.bf16.msra.mxu0 0
        %3751 = vmatprep.subr.bf16.mxu0 0
        %3752 = vmatpush2.bf16.msra.mxu0 0
        %3753 = vmatprep.subr.bf16.mxu0 0
        %3754 = vmatpush2.bf16.msra.mxu0 0
        %3755 = vmatprep.subr.bf16.mxu0 0
        %3756 = vmatpush2.bf16.msra.mxu0 0
        %3757 = vmatprep.subr.bf16.mxu0 0
        %3758 = vmatpush2.bf16.msra.mxu0 0
        %3759 = vmatprep.mubr.bf16.mxu0 0
        %3760 = vmatmul.mubr.bf16.gmra.mxu0 %v3725
        %v3761 = vpop.f32.mrf.mxu0
        %v3762 = vadd.f32 0.0, %v3761
        %v3763 = vpop.f32.mrf.mxu0
        %v3764 = vpop.f32.mrf.mxu0
        %v3765 = vpop.f32.mrf.mxu0
        %3766 = vdwg.mxu0
        %v3767 = vadd.f32 %v3704, %v3762
        %v3769 = vrot.slane %v2610, 1
        %v3771 = vmax.f32 %v2610, %v3769
        %v3773 = vrot.slane %v2612, 1
        %v3775 = vmax.f32 %v2612, %v3773
        %v3776 = vmax.f32 %v3771, %v3775
        %v3777 = vpack.c.bf16 %v3776, %v3776
        %s3778 = scalar_lea.vmem %s3, 160
        %v3779 = vld [vmem:[%s3778] sm:$0xf]
        %v3780 = vld [vmem:[%s3778 + $0x4] sm:$0xf]
        %v3783 = vunpack.c.l.b16 %v3779
        %v3784 = vunpack.c.l.b16 %v3780
        %v3785 = vpack.c.b16 %v3784, %v3783
        %v3788 = vsel %vm2637, %v3777, 0
        %3790 = vmatprep.subr.bf16.mxu0 0
        %3791 = vmatpush1.bf16.msra.mxu0 0
        %3792 = vmatprep.subr.bf16.mxu0 0
        %3793 = vmatpush1.bf16.msra.mxu0 0
        %3794 = vmatprep.subr.bf16.mxu0 0
        %3795 = vmatpush1.bf16.msra.mxu0 0
        %3796 = vmatprep.subr.bf16.mxu0 0
        %3797 = vmatpush1.bf16.msra.mxu0 0
        %3798 = vmatprep.subr.bf16.mxu0 0
        %3799 = vmatpush1.bf16.msra.mxu0 0
        %3800 = vmatprep.subr.bf16.mxu0 0
        %3801 = vmatpush1.bf16.msra.mxu0 0
        %3802 = vmatprep.subr.bf16.mxu0 0
        %3803 = vmatpush1.bf16.msra.mxu0 0
        %3804 = vmatprep.subr.bf16.mxu0 0
        %3805 = vmatpush1.bf16.msra.mxu0 %v3785
        %3806 = vmatprep.subr.bf16.mxu0 0
        %3807 = vmatpush2.bf16.msra.mxu0 0
        %3808 = vmatprep.subr.bf16.mxu0 0
        %3809 = vmatpush2.bf16.msra.mxu0 0
        %3810 = vmatprep.subr.bf16.mxu0 0
        %3811 = vmatpush2.bf16.msra.mxu0 0
        %3812 = vmatprep.subr.bf16.mxu0 0
        %3813 = vmatpush2.bf16.msra.mxu0 0
        %3814 = vmatprep.subr.bf16.mxu0 0
        %3815 = vmatpush2.bf16.msra.mxu0 0
        %3816 = vmatprep.subr.bf16.mxu0 0
        %3817 = vmatpush2.bf16.msra.mxu0 0
        %3818 = vmatprep.subr.bf16.mxu0 0
        %3819 = vmatpush2.bf16.msra.mxu0 0
        %3820 = vmatprep.subr.bf16.mxu0 0
        %3821 = vmatpush2.bf16.msra.mxu0 0
        %3822 = vmatprep.mubr.bf16.mxu0 0
        %3823 = vmatmul.mubr.bf16.gmra.mxu0 %v3788
        %v3824 = vpop.f32.mrf.mxu0
        %v3825 = vadd.f32 0.0, %v3824
        %v3826 = vpop.f32.mrf.mxu0
        %v3827 = vpop.f32.mrf.mxu0
        %v3828 = vpop.f32.mrf.mxu0
        %3829 = vdwg.mxu0
        %v3830 = vadd.f32 %v3767, %v3825
        %s3831 = scalar_lea.vmem %s3, 168
        %v3832 = vld [vmem:[%s3831] sm:$0xf]
        %v3833 = vld [vmem:[%s3831 + $0x4] sm:$0xf]
        %v3835 = vrot.slane %v3777, 1
        %v3838 = vunpack.c.l.b16 %v3832
        %v3839 = vunpack.c.l.b16 %v3833
        %v3840 = vpack.c.b16 %v3839, %v3838
        %v3843 = vsel %vm2637, %v3835, 0
        %3845 = vmatprep.subr.bf16.mxu0 0
        %3846 = vmatpush1.bf16.msra.mxu0 0
        %3847 = vmatprep.subr.bf16.mxu0 0
        %3848 = vmatpush1.bf16.msra.mxu0 0
        %3849 = vmatprep.subr.bf16.mxu0 0
        %3850 = vmatpush1.bf16.msra.mxu0 0
        %3851 = vmatprep.subr.bf16.mxu0 0
        %3852 = vmatpush1.bf16.msra.mxu0 0
        %3853 = vmatprep.subr.bf16.mxu0 0
        %3854 = vmatpush1.bf16.msra.mxu0 0
        %3855 = vmatprep.subr.bf16.mxu0 0
        %3856 = vmatpush1.bf16.msra.mxu0 0
        %3857 = vmatprep.subr.bf16.mxu0 0
        %3858 = vmatpush1.bf16.msra.mxu0 0
        %3859 = vmatprep.subr.bf16.mxu0 0
        %3860 = vmatpush1.bf16.msra.mxu0 %v3840
        %3861 = vmatprep.subr.bf16.mxu0 0
        %3862 = vmatpush2.bf16.msra.mxu0 0
        %3863 = vmatprep.subr.bf16.mxu0 0
        %3864 = vmatpush2.bf16.msra.mxu0 0
        %3865 = vmatprep.subr.bf16.mxu0 0
        %3866 = vmatpush2.bf16.msra.mxu0 0
        %3867 = vmatprep.subr.bf16.mxu0 0
        %3868 = vmatpush2.bf16.msra.mxu0 0
        %3869 = vmatprep.subr.bf16.mxu0 0
        %3870 = vmatpush2.bf16.msra.mxu0 0
        %3871 = vmatprep.subr.bf16.mxu0 0
        %3872 = vmatpush2.bf16.msra.mxu0 0
        %3873 = vmatprep.subr.bf16.mxu0 0
        %3874 = vmatpush2.bf16.msra.mxu0 0
        %3875 = vmatprep.subr.bf16.mxu0 0
        %3876 = vmatpush2.bf16.msra.mxu0 0
        %3877 = vmatprep.mubr.bf16.mxu0 0
        %3878 = vmatmul.mubr.bf16.gmra.mxu0 %v3843
        %v3879 = vpop.f32.mrf.mxu0
        %v3880 = vadd.f32 0.0, %v3879
        %v3881 = vpop.f32.mrf.mxu0
        %v3882 = vpop.f32.mrf.mxu0
        %v3883 = vpop.f32.mrf.mxu0
        %3884 = vdwg.mxu0
        %v3885 = vadd.f32 %v3830, %v3880
        %s3886 = scalar_lea.vmem %s3, 176
        %v3887 = vld [vmem:[%s3886] sm:$0xf]
        %v3888 = vld [vmem:[%s3886 + $0x4] sm:$0xf]
        %v3889 = vrot.slane %v3777, 2
        %v3892 = vunpack.c.l.b16 %v3887
        %v3893 = vunpack.c.l.b16 %v3888
        %v3894 = vpack.c.b16 %v3893, %v3892
        %v3897 = vsel %vm2637, %v3889, 0
        %3899 = vmatprep.subr.bf16.mxu0 0
        %3900 = vmatpush1.bf16.msra.mxu0 0
        %3901 = vmatprep.subr.bf16.mxu0 0
        %3902 = vmatpush1.bf16.msra.mxu0 0
        %3903 = vmatprep.subr.bf16.mxu0 0
        %3904 = vmatpush1.bf16.msra.mxu0 0
        %3905 = vmatprep.subr.bf16.mxu0 0
        %3906 = vmatpush1.bf16.msra.mxu0 0
        %3907 = vmatprep.subr.bf16.mxu0 0
        %3908 = vmatpush1.bf16.msra.mxu0 0
        %3909 = vmatprep.subr.bf16.mxu0 0
        %3910 = vmatpush1.bf16.msra.mxu0 0
        %3911 = vmatprep.subr.bf16.mxu0 0
        %3912 = vmatpush1.bf16.msra.mxu0 0
        %3913 = vmatprep.subr.bf16.mxu0 0
        %3914 = vmatpush1.bf16.msra.mxu0 %v3894
        %3915 = vmatprep.subr.bf16.mxu0 0
        %3916 = vmatpush2.bf16.msra.mxu0 0
        %3917 = vmatprep.subr.bf16.mxu0 0
        %3918 = vmatpush2.bf16.msra.mxu0 0
        %3919 = vmatprep.subr.bf16.mxu0 0
        %3920 = vmatpush2.bf16.msra.mxu0 0
        %3921 = vmatprep.subr.bf16.mxu0 0
        %3922 = vmatpush2.bf16.msra.mxu0 0
        %3923 = vmatprep.subr.bf16.mxu0 0
        %3924 = vmatpush2.bf16.msra.mxu0 0
        %3925 = vmatprep.subr.bf16.mxu0 0
        %3926 = vmatpush2.bf16.msra.mxu0 0
        %3927 = vmatprep.subr.bf16.mxu0 0
        %3928 = vmatpush2.bf16.msra.mxu0 0
        %3929 = vmatprep.subr.bf16.mxu0 0
        %3930 = vmatpush2.bf16.msra.mxu0 0
        %3931 = vmatprep.mubr.bf16.mxu0 0
        %3932 = vmatmul.mubr.bf16.gmra.mxu0 %v3897
        %v3933 = vpop.f32.mrf.mxu0
        %v3934 = vadd.f32 0.0, %v3933
        %v3935 = vpop.f32.mrf.mxu0
        %v3936 = vpop.f32.mrf.mxu0
        %v3937 = vpop.f32.mrf.mxu0
        %3938 = vdwg.mxu0
        %v3939 = vadd.f32 %v3885, %v3934
        %s3940 = scalar_lea.vmem %s3, 184
        %v3941 = vld [vmem:[%s3940] sm:$0xf]
        %v3942 = vld [vmem:[%s3940 + $0x4] sm:$0xf]
        %v3943 = vrot.slane %v3777, 3
        %v3946 = vunpack.c.l.b16 %v3941
        %v3947 = vunpack.c.l.b16 %v3942
        %v3948 = vpack.c.b16 %v3947, %v3946
        %v3951 = vsel %vm2637, %v3943, 0
        %3953 = vmatprep.subr.bf16.mxu0 0
        %3954 = vmatpush1.bf16.msra.mxu0 0
        %3955 = vmatprep.subr.bf16.mxu0 0
        %3956 = vmatpush1.bf16.msra.mxu0 0
        %3957 = vmatprep.subr.bf16.mxu0 0
        %3958 = vmatpush1.bf16.msra.mxu0 0
        %3959 = vmatprep.subr.bf16.mxu0 0
        %3960 = vmatpush1.bf16.msra.mxu0 0
        %3961 = vmatprep.subr.bf16.mxu0 0
        %3962 = vmatpush1.bf16.msra.mxu0 0
        %3963 = vmatprep.subr.bf16.mxu0 0
        %3964 = vmatpush1.bf16.msra.mxu0 0
        %3965 = vmatprep.subr.bf16.mxu0 0
        %3966 = vmatpush1.bf16.msra.mxu0 0
        %3967 = vmatprep.subr.bf16.mxu0 0
        %3968 = vmatpush1.bf16.msra.mxu0 %v3948
        %3969 = vmatprep.subr.bf16.mxu0 0
        %3970 = vmatpush2.bf16.msra.mxu0 0
        %3971 = vmatprep.subr.bf16.mxu0 0
        %3972 = vmatpush2.bf16.msra.mxu0 0
        %3973 = vmatprep.subr.bf16.mxu0 0
        %3974 = vmatpush2.bf16.msra.mxu0 0
        %3975 = vmatprep.subr.bf16.mxu0 0
        %3976 = vmatpush2.bf16.msra.mxu0 0
        %3977 = vmatprep.subr.bf16.mxu0 0
        %3978 = vmatpush2.bf16.msra.mxu0 0
        %3979 = vmatprep.subr.bf16.mxu0 0
        %3980 = vmatpush2.bf16.msra.mxu0 0
        %3981 = vmatprep.subr.bf16.mxu0 0
        %3982 = vmatpush2.bf16.msra.mxu0 0
        %3983 = vmatprep.subr.bf16.mxu0 0
        %3984 = vmatpush2.bf16.msra.mxu0 0
        %3985 = vmatprep.mubr.bf16.mxu0 0
        %3986 = vmatmul.mubr.bf16.gmra.mxu0 %v3951
        %v3987 = vpop.f32.mrf.mxu0
        %v3988 = vadd.f32 0.0, %v3987
        %v3989 = vpop.f32.mrf.mxu0
        %v3990 = vpop.f32.mrf.mxu0
        %v3991 = vpop.f32.mrf.mxu0
        %3992 = vdwg.mxu0
        %v3993 = vadd.f32 %v3939, %v3988
        %v3995 = vrot.slane %v2611, 1
        %v3997 = vmax.f32 %v2611, %v3995
        %v3999 = vrot.slane %v2613, 1
        %v4001 = vmax.f32 %v2613, %v3999
        %v4002 = vmax.f32 %v3997, %v4001
        %v4003 = vpack.c.bf16 %v4002, %v4002
        %s4004 = scalar_lea.vmem %s3, 192
        %v4005 = vld [vmem:[%s4004] sm:$0xf]
        %v4006 = vld [vmem:[%s4004 + $0x4] sm:$0xf]
        %v4009 = vunpack.c.l.b16 %v4005
        %v4010 = vunpack.c.l.b16 %v4006
        %v4011 = vpack.c.b16 %v4010, %v4009
        %v4014 = vsel %vm2637, %v4003, 0
        %4016 = vmatprep.subr.bf16.mxu0 0
        %4017 = vmatpush1.bf16.msra.mxu0 0
        %4018 = vmatprep.subr.bf16.mxu0 0
        %4019 = vmatpush1.bf16.msra.mxu0 0
        %4020 = vmatprep.subr.bf16.mxu0 0
        %4021 = vmatpush1.bf16.msra.mxu0 0
        %4022 = vmatprep.subr.bf16.mxu0 0
        %4023 = vmatpush1.bf16.msra.mxu0 0
        %4024 = vmatprep.subr.bf16.mxu0 0
        %4025 = vmatpush1.bf16.msra.mxu0 0
        %4026 = vmatprep.subr.bf16.mxu0 0
        %4027 = vmatpush1.bf16.msra.mxu0 0
        %4028 = vmatprep.subr.bf16.mxu0 0
        %4029 = vmatpush1.bf16.msra.mxu0 0
        %4030 = vmatprep.subr.bf16.mxu0 0
        %4031 = vmatpush1.bf16.msra.mxu0 %v4011
        %4032 = vmatprep.subr.bf16.mxu0 0
        %4033 = vmatpush2.bf16.msra.mxu0 0
        %4034 = vmatprep.subr.bf16.mxu0 0
        %4035 = vmatpush2.bf16.msra.mxu0 0
        %4036 = vmatprep.subr.bf16.mxu0 0
        %4037 = vmatpush2.bf16.msra.mxu0 0
        %4038 = vmatprep.subr.bf16.mxu0 0
        %4039 = vmatpush2.bf16.msra.mxu0 0
        %4040 = vmatprep.subr.bf16.mxu0 0
        %4041 = vmatpush2.bf16.msra.mxu0 0
        %4042 = vmatprep.subr.bf16.mxu0 0
        %4043 = vmatpush2.bf16.msra.mxu0 0
        %4044 = vmatprep.subr.bf16.mxu0 0
        %4045 = vmatpush2.bf16.msra.mxu0 0
        %4046 = vmatprep.subr.bf16.mxu0 0
        %4047 = vmatpush2.bf16.msra.mxu0 0
        %4048 = vmatprep.mubr.bf16.mxu0 0
        %4049 = vmatmul.mubr.bf16.gmra.mxu0 %v4014
        %v4050 = vpop.f32.mrf.mxu0
        %v4051 = vadd.f32 0.0, %v4050
        %v4052 = vpop.f32.mrf.mxu0
        %v4053 = vpop.f32.mrf.mxu0
        %v4054 = vpop.f32.mrf.mxu0
        %4055 = vdwg.mxu0
        %v4056 = vadd.f32 %v3993, %v4051
        %v4057 = vld [vmem:[%s4] sm:$0x1]
        %v4058 = vadd.f32 %v4056, %v4057
        %v4059 = vmax.f32 %v4058, 0.0
        %v4060 = vpack.c.bf16 %v4059, %v4059
        %v4061 = vld [vmem:[%s5] sm:$0xf]
        %v4062 = vld [vmem:[%s5 + $0x4] sm:$0xf]
        %v4063 = vld [vmem:[%s5 + $0x8] sm:$0xf]
        %v4064 = vld [vmem:[%s5 + $0xc] sm:$0xf]
        %v4065 = vld [vmem:[%s5 + $0x10] sm:$0xf]
        %v4066 = vld [vmem:[%s5 + $0x14] sm:$0xf]
        %v4067 = vld [vmem:[%s5 + $0x18] sm:$0xf]
        %v4068 = vld [vmem:[%s5 + $0x1c] sm:$0xf]
        %v4069 = vld [vmem:[%s5 + $0x20] sm:$0xf]
        %v4070 = vld [vmem:[%s5 + $0x24] sm:$0xf]
        %v4071 = vld [vmem:[%s5 + $0x28] sm:$0xf]
        %v4072 = vld [vmem:[%s5 + $0x2c] sm:$0xf]
        %v4073 = vld [vmem:[%s5 + $0x30] sm:$0xf]
        %v4074 = vld [vmem:[%s5 + $0x34] sm:$0xf]
        %v4075 = vld [vmem:[%s5 + $0x38] sm:$0xf]
        %v4076 = vld [vmem:[%s6] sm:$0x1]
        %v4092 = vunpack.c.l.b16 %v4061
        %v4093 = vunpack.c.l.b16 %v4062
        %v4094 = vunpack.c.l.b16 %v4063
        %v4095 = vunpack.c.l.b16 %v4064
        %v4096 = vunpack.c.l.b16 %v4065
        %v4097 = vunpack.c.l.b16 %v4066
        %v4098 = vunpack.c.l.b16 %v4067
        %v4099 = vunpack.c.l.b16 %v4068
        %v4100 = vunpack.c.l.b16 %v4069
        %v4101 = vunpack.c.l.b16 %v4070
        %v4102 = vunpack.c.l.b16 %v4071
        %v4103 = vunpack.c.l.b16 %v4072
        %v4104 = vunpack.c.l.b16 %v4073
        %v4105 = vunpack.c.l.b16 %v4074
        %v4106 = vunpack.c.l.b16 %v4075
        %v4107 = vpack.c.b16 %v4093, %v4092
        %v4108 = vpack.c.b16 %v4095, %v4094
        %v4109 = vpack.c.b16 %v4097, %v4096
        %v4110 = vpack.c.b16 %v4099, %v4098
        %v4111 = vpack.c.b16 %v4101, %v4100
        %v4112 = vpack.c.b16 %v4103, %v4102
        %v4113 = vpack.c.b16 %v4105, %v4104
        %v4114 = vpack.c.b16 %v4106, %v4106
        %vm4122 = vcmask 982016
        %v4124 = vsel %vm4122, %v4060, 0
        %vm4126 = vcmask 1043456
        %v4128 = vsel %vm4126, %v4114, 0
        %4130 = vmatprep.subr.bf16.mxu0 0
        %4131 = vmatpush1.bf16.msra.mxu0 %v4128
        %4132 = vmatprep.subr.bf16.mxu0 0
        %4133 = vmatpush1.bf16.msra.mxu0 %v4113
        %4134 = vmatprep.subr.bf16.mxu0 0
        %4135 = vmatpush1.bf16.msra.mxu0 %v4112
        %4136 = vmatprep.subr.bf16.mxu0 0
        %4137 = vmatpush1.bf16.msra.mxu0 %v4111
        %4138 = vmatprep.subr.bf16.mxu0 0
        %4139 = vmatpush1.bf16.msra.mxu0 %v4110
        %4140 = vmatprep.subr.bf16.mxu0 0
        %4141 = vmatpush1.bf16.msra.mxu0 %v4109
        %4142 = vmatprep.subr.bf16.mxu0 0
        %4143 = vmatpush1.bf16.msra.mxu0 %v4108
        %4144 = vmatprep.subr.bf16.mxu0 0
        %4145 = vmatpush1.bf16.msra.mxu0 %v4107
        %4146 = vmatprep.subr.bf16.mxu0 0
        %4147 = vmatpush2.bf16.msra.mxu0 0
        %4148 = vmatprep.subr.bf16.mxu0 0
        %4149 = vmatpush2.bf16.msra.mxu0 0
        %4150 = vmatprep.subr.bf16.mxu0 0
        %4151 = vmatpush2.bf16.msra.mxu0 0
        %4152 = vmatprep.subr.bf16.mxu0 0
        %4153 = vmatpush2.bf16.msra.mxu0 0
        %4154 = vmatprep.subr.bf16.mxu0 0
        %4155 = vmatpush2.bf16.msra.mxu0 0
        %4156 = vmatprep.subr.bf16.mxu0 0
        %4157 = vmatpush2.bf16.msra.mxu0 0
        %4158 = vmatprep.subr.bf16.mxu0 0
        %4159 = vmatpush2.bf16.msra.mxu0 0
        %4160 = vmatprep.subr.bf16.mxu0 0
        %4161 = vmatpush2.bf16.msra.mxu0 0
        %4162 = vmatprep.mubr.bf16.mxu0 0
        %4163 = vmatmul.mubr.bf16.gmra.mxu0 %v4124
        %v4164 = vpop.f32.mrf.mxu0
        %v4165 = vadd.f32 %v4076, %v4164
        %v4166 = vpop.f32.mrf.mxu0
        %v4167 = vpop.f32.mrf.mxu0
        %v4168 = vpop.f32.mrf.mxu0
        %4169 = vdwg.mxu0
        %v4170 = vmax.f32 %v4165, 0.0
        %vm4171 = vcmask 679936
        %4172 = vst.msk [vmem:[%s270] sm:$0x1] %vm4171, %v4170
        %s4173 = sand.u32 %s181, 1
        %s4174 = scalar_lea.sflag [#allocation3], %s4173
        %s4175 = sand.u32 %s181, 1
        %s4176 = scalar_lea.vmem [#allocation2], %s4175
        // Predicated region
        $region49: #{lenet_detect_net_forward.1} parent=47 // pred_check
          %p4177 = pneg %p191
        $region50: #{lenet_detect_net_forward.1} parent=47 // pred_check_branch
          %4179 = sbr.rel (%p4177) target = $region52
        $region51: #{lenet_detect_net_forward.1} parent=47 // pred_region
          %s4181 = ssub.s32 16, 16
          %4182 = vsyncadd %s4174, %s4181
          %s4183 = smul.addr %s21, 16
          %s4184 = scalar_lea.hbm %s7, %s4183
          %s4186 = sshll.u32 %s4176, 4
          %s4187 = int_to_ptr.vmem [resolvable:$true] %s4186
          %4189 = dma.vmem_to_hbm [thread:$0]  %s4187, 16, %s4184, %s4174
        $region52: #{lenet_detect_net_forward.1} parent=47 // pred_fallthru
          _
      $region48: #{lenet_detect_net_forward.1} parent=5 // pred_fallthru
        _
      %p4190 = scmp.le.s32.totalorder 2, %s16
      // Predicated region
      $region53: #{lenet_detect_net_forward.1} parent=5 // pred_check
        %p4191 = pneg %p4190
      $region54: #{lenet_detect_net_forward.1} parent=5 // pred_check_branch
        %4193 = sbr.rel (%p4191) target = $region56
      $region55: #{lenet_detect_net_forward.1} parent=5 // pred_region
        %s4194 = ssub.s32 %s16, 2
        // Predicated region
        $region57: #{lenet_detect_net_forward.1} parent=55 // pred_check
          %p4195 = pneg %p197
        $region58: #{lenet_detect_net_forward.1} parent=55 // pred_check_branch
          %4197 = sbr.rel (%p4195) target = $region60
        $region59: #{lenet_detect_net_forward.1} parent=55 // pred_region
          %s4198 = sand.u32 %s182, 1
          %s4199 = scalar_lea.sflag [#allocation3], %s4198
          %s4200 = sand.u32 %s182, 1
          %s4201 = scalar_lea.vmem [#allocation2], %s4200
          %4202 = dma.done %s4199, 16
        $region60: #{lenet_detect_net_forward.1} parent=55 // pred_fallthru
          _
      $region56: #{lenet_detect_net_forward.1} parent=5 // pred_fallthru
        _
    $region6: #{lenet_detect_net_forward.1} parent=1 // loop_footer
      %s20 = sadd.s32 1, %s16
    $region7: #{lenet_detect_net_forward.1} parent=1 // loop_footer_branch
      %15 = sbr.rel target = $region3
    $region8: #{lenet_detect_net_forward.1} parent=1 // loop_exit
      _
    %4203 = vsyncpa [#allocation3], 1
    %s4204 = scalar_lea.sflag [#allocation3], 1
    %4205 = vsyncpa %s4204, 1

</llo_original>
